<compile_context>
chip_gen: v7x
topology: tpu7x:2x2x1
jax: 0.10.0
libtpu: 0.0.40
codegen_flags: <defaults>
</compile_context>

<pallas_src>
import functools

import jax
import jax.numpy as jnp
import numpy as np
from jax import lax
from jax.experimental import pallas as pl
from jax.experimental.pallas import tpu as pltpu


# ---------------------------------------------------------------------------
# Generation-aware sizing helpers.
# ---------------------------------------------------------------------------
def _vmem_capacity_bytes():
    try:
        cap = getattr(pltpu.get_tpu_info(), "vmem_capacity_bytes", None)
        if cap:
            return int(cap)
    except Exception:
        pass
    return 64 << 20  # conservative (v7x-sized) fallback


def _vmem_budgets():
    cap = _vmem_capacity_bytes()
    # `budget` feeds the tile picker (which accounts for double-buffering
    # itself); `limit` is the explicit scoped-VMEM limit for Mosaic.  Capped at
    # ~40/48 MiB so a tiling derived on v5e/v6e (128 MiB VMEM) still fits v7x
    # (64 MiB), while staying far above v5e's 16 MiB scoped default.
    budget = min(cap // 2, 40 << 20)
    limit = int(min(cap * 3 // 4, 48 << 20))
    return budget, limit


def _pick_wb(W, max_wb=16):
    """Width chunk for the banded K-fold (bounds MAC overhead & weight size)."""
    for cand in range(min(W, max_wb), 0, -1):
        if W % cand == 0:
            return cand
    return 1


def _pick_td(D, H, W, cin, cout, WB, vmem_budget_bytes):
    """Largest depth tile: divides D, fits the VMEM budget, caps matmul M."""
    # TD*H <= 128 keeps the in-register accumulator / LHS below ~32 vregs.
    max_td = max(1, min(32, 128 // max(H, 1), D))
    plane_in = H * W * cin * 4
    plane_out = H * W * cout * 4
    wts = 9 * (WB + 2) * cin * WB * cout * 4
    scsh = 2 * W * cin * 4
    stats = 2 * W * cout * 4
    best = 1
    for cand in range(1, max_td + 1):
        if D % cand:
            continue
        scratch = (cand + 2) * (H + 2) * (W + 2) * cin * 4
        total = 2 * (cand * plane_in + 2 * plane_in + cand * plane_out
                     + scsh + wts + stats) + scratch
        if total <= vmem_budget_bytes:
            best = cand
    # NOTE: if D is prime / has no good divisor this degrades to TD=1 (a perf
    # cliff, not a correctness bug).  TODO(synk): add a depth-padding path.
    return best


# ---------------------------------------------------------------------------
# Width-banded weights: fold the (kw, Cin) taps into the matmul K dimension.
# ---------------------------------------------------------------------------
def _band_weights(w, WB):
    """w: (3,3,3,Cin,Cout) (kd,kh,kw,ci,co) -> (9, (WB+2)*Cin, WB*Cout).

    B[kd*3+kh, (wo+kw)*Cin + ci, wo*Cout + co] = w[kd, kh, kw, ci, co]
    so that (row-of-padded-width LHS) @ B performs the width convolution and
    produces a lane-dense (.., WB*Cout) result directly.
    """
    _, _, _, cin, cout = w.shape
    B = jnp.zeros((3, 3, (WB + 2) * cin, WB * cout), w.dtype)
    for wo in range(WB):
        for kw in range(3):
            B = B.at[:, :, (wo + kw) * cin:(wo + kw + 1) * cin,
                     wo * cout:(wo + 1) * cout].set(w[:, :, kw])
    return B.reshape(9, (WB + 2) * cin, WB * cout)


# ---------------------------------------------------------------------------
# Conv3d(k=3, pad=1, no bias) + fused per-(n, lane) sum / sum-of-squares, with
# an optional fused "previous-layer normalize+ReLU" prologue.
# Grid: (N, D // TD).  One grid step = TD output depth planes.
# ---------------------------------------------------------------------------
def _conv3d_stats_kernel(x_core_ref, x_lo_ref, x_hi_ref, sc_ref, sh_ref, w_ref,
                         y_ref, stats_ref, xpad_ref,
                         *, TD, H, W, WB, Cin, Cout, fuse_prologue):
    # Lane dim = flattened (w, c):
    #  x_core_ref: (1, TD, H, W*Cin)    TD input planes of this depth block
    #  x_lo_ref  : (1, 1, H, W*Cin)     plane db*TD-1 (index clamped)
    #  x_hi_ref  : (1, 1, H, W*Cin)     plane db*TD+TD (index clamped)
    #  sc/sh_ref : (1, 1, 1, W*Cin)     previous-layer norm scale/shift (W-tiled)
    #  w_ref     : (9, (WB+2)*Cin, WB*Cout) width-banded weights, (kd, kh)-major
    #  y_ref     : (1, TD, H, W*Cout)   raw conv output block (lane-dense)
    #  stats_ref : (1, 2, W*Cout)       [sum, sum_sq], accumulated across db
    #  xpad_ref  : VMEM (TD+2, H+2, (W+2)*Cin) zero-padded halo scratch
    db = pl.program_id(1)
    n_db = pl.num_programs(1)
    WCin = W * Cin

    def pre(v):
        # Fused previous-layer InstanceNorm + ReLU (layer-2 prologue).
        if fuse_prologue:
            return jnp.maximum(v * sc_ref[0, 0] + sh_ref[0, 0], 0.0)
        return v

    # Zero the spatial halo ring (and depth plane 0) once per sample; the ring
    # is never written afterwards, so it stays zero across depth blocks.
    @pl.when(db == 0)
    def _():
        xpad_ref[...] = jnp.zeros_like(xpad_ref)
        stats_ref[...] = jnp.zeros_like(stats_ref)

    # Last depth block: the high halo plane must be zero (stale otherwise).
    @pl.when(db == n_db - 1)
    def _():
        xpad_ref[TD + 1:TD + 2, :, :] = jnp.zeros(
            (1, H + 2, (W + 2) * Cin), dtype=xpad_ref.dtype)

    # Halo-assembled interior, with the fused activation applied on the fly.
    xpad_ref[1:TD + 1, 1:H + 1, Cin:Cin + WCin] = pre(x_core_ref[0])

    @pl.when(db > 0)
    def _():
        xpad_ref[0:1, 1:H + 1, Cin:Cin + WCin] = pre(x_lo_ref[0])

    @pl.when(db < n_db - 1)
    def _():
        xpad_ref[TD + 1:TD + 2, 1:H + 1, Cin:Cin + WCin] = pre(x_hi_ref[0])

    # Banded-width conv: per (kd, kh) one (TD*H, (WB+2)*Cin) x ((WB+2)*Cin,
    # WB*Cout) matmul, accumulated in vregs.  Windows are sliced straight from
    # the scratch ref; all reshapes only split/merge 8-aligned sublane dims
    # (H is a multiple of 8), so they are layout no-ops.
    KB = (WB + 2) * Cin
    NB = WB * Cout
    for c in range(W // WB):
        c0 = c * WB * Cin
        acc = None
        for kd in range(3):
            for kh in range(3):
                lhs = xpad_ref[kd:kd + TD, kh:kh + H, c0:c0 + KB]
                lhs = lhs.reshape(TD * H, KB)
                part = jnp.dot(lhs, w_ref[kd * 3 + kh],
                               preferred_element_type=jnp.float32)
                acc = part if acc is None else acc + part

        # Conv bias intentionally omitted: a per-channel bias is cancelled
        # exactly by the affine-free InstanceNorm that always follows.
        y_ref[0:1, :, :, c * NB:(c + 1) * NB] = (
            acc.reshape(1, TD, H, NB).astype(y_ref.dtype))

        # Fused InstanceNorm statistics; the tiny (W, Cout) -> Cout reduction
        # happens on the host.
        stats_ref[0:1, 0:1, c * NB:(c + 1) * NB] += (
            jnp.sum(acc, axis=0, keepdims=True).reshape(1, 1, NB))
        stats_ref[0:1, 1:2, c * NB:(c + 1) * NB] += (
            jnp.sum(acc * acc, axis=0, keepdims=True).reshape(1, 1, NB))


def _conv3d_fused_stats(x, sc, sh, w_band, *, cin, cout, td, WB,
                        fuse_prologue, vmem_limit):
    """x: (N, D, H, W*cin) f32; sc/sh: (N, 1, 1, W*cin); w_band: banded weights.

    Returns (conv, stats): conv (N, D, H, W*cout), 'SAME' zero padding, no
    bias; stats (N, 2, W*cout) = per-(n, w, c) [sum, sum_sq] over D*H.
    """
    N, D, H, WCin = x.shape
    W = WCin // cin
    assert D % td == 0
    n_db = D // td
    WCout = W * cout
    KB = (WB + 2) * cin

    kernel = functools.partial(
        _conv3d_stats_kernel, TD=td, H=H, W=W, WB=WB, Cin=cin, Cout=cout,
        fuse_prologue=fuse_prologue)

    core_map = lambda n, db: (n, db, 0, 0)
    lo_map = lambda n, db: (n, jnp.maximum(db * td - 1, 0), 0, 0)
    hi_map = lambda n, db: (n, jnp.minimum(db * td + td, D - 1), 0, 0)

    return pl.pallas_call(
        kernel,
        out_shape=(
            jax.ShapeDtypeStruct((N, D, H, WCout), jnp.float32),
            jax.ShapeDtypeStruct((N, 2, WCout), jnp.float32),
        ),
        grid_spec=pltpu.PrefetchScalarGridSpec(
            num_scalar_prefetch=0,
            grid=(N, n_db),
            in_specs=[
                pl.BlockSpec((1, td, H, WCin), core_map),
                pl.BlockSpec((1, 1, H, WCin), lo_map),
                pl.BlockSpec((1, 1, H, WCin), hi_map),
                pl.BlockSpec((1, 1, 1, WCin), lambda n, db: (n, 0, 0, 0)),
                pl.BlockSpec((1, 1, 1, WCin), lambda n, db: (n, 0, 0, 0)),
                pl.BlockSpec((9, KB, WB * cout), lambda n, db: (0, 0, 0)),
            ],
            out_specs=[
                pl.BlockSpec((1, td, H, WCout), lambda n, db: (n, db, 0, 0)),
                pl.BlockSpec((1, 2, WCout), lambda n, db: (n, 0, 0)),
            ],
            scratch_shapes=[
                pltpu.VMEM((td + 2, H + 2, (W + 2) * cin), jnp.float32),
            ],
        ),
        compiler_params=pltpu.CompilerParams(
            # Depth axis carries the fused-stats accumulator -> "arbitrary".
            # TODO(synk): when N == 1 add a second parallel split (over H) so
            # both v7x TensorCores stay busy.
            dimension_semantics=("parallel", "arbitrary"),
            vmem_limit_bytes=vmem_limit),
    )(x, x, x, sc, sh, w_band)


# ---------------------------------------------------------------------------
# Final lane-dense normalize + ReLU:  relu(y * scale + shift), elementwise.
# ---------------------------------------------------------------------------
def _scale_shift_relu_kernel(y_ref, sc_ref, sh_ref, o_ref):
    o_ref[...] = jnp.maximum(y_ref[...] * sc_ref[...] + sh_ref[...], 0.0)


def _scale_shift_relu(y, scale, shift, *, vmem_limit, target_block_bytes=8 << 20):
    """y: (N, D, H, W*C); scale/shift: (N, 1, 1, W*C) (broadcast in-kernel)."""
    N, D, H, WC = y.shape
    plane = H * WC * 4
    tde = 1
    for cand in range(1, D + 1):
        # 2 buffers each for input and output blocks.
        if D % cand == 0 and 4 * cand * plane <= target_block_bytes:
            tde = cand
    return pl.pallas_call(
        _scale_shift_relu_kernel,
        out_shape=jax.ShapeDtypeStruct((N, D, H, WC), jnp.float32),
        grid_spec=pltpu.PrefetchScalarGridSpec(
            num_scalar_prefetch=0,
            grid=(N, D // tde),
            in_specs=[
                pl.BlockSpec((1, tde, H, WC), lambda n, db: (n, db, 0, 0)),
                pl.BlockSpec((1, 1, 1, WC), lambda n, db: (n, 0, 0, 0)),
                pl.BlockSpec((1, 1, 1, WC), lambda n, db: (n, 0, 0, 0)),
            ],
            out_specs=pl.BlockSpec((1, tde, H, WC),
                                   lambda n, db: (n, db, 0, 0)),
        ),
        compiler_params=pltpu.CompilerParams(
            dimension_semantics=("parallel", "parallel"),
            vmem_limit_bytes=vmem_limit),
    )(y, scale, shift)


# ---------------------------------------------------------------------------
# InstanceNorm affine terms from the fused statistics (tiny host-side math).
# ---------------------------------------------------------------------------
def _norm_affine_from_stats(stats, W, Cout, cnt, eps):
    N = stats.shape[0]
    s = stats.reshape(N, 2, W, Cout).sum(axis=2)      # (N, 2, Cout)
    mean = s[:, 0, :] / cnt
    # E[x^2] - E[x]^2 is cancellation-prone; clamp at 0 (fine in f32 at these
    # volume sizes; switch to a shifted/two-pass form if tolerances tighten).
    var = jnp.maximum(s[:, 1, :] / cnt - mean * mean, 0.0)
    inv = lax.rsqrt(var + eps)                        # biased var, as PyTorch
    scale = inv
    shift = -mean * inv
    # W-tiled (not H*W-tiled) operands: W*Cout floats per sample -> negligible.
    scale_t = jnp.tile(scale, (1, W)).reshape(N, 1, 1, W * Cout)
    shift_t = jnp.tile(shift, (1, W)).reshape(N, 1, 1, W * Cout)
    return scale_t, shift_t


# ---------------------------------------------------------------------------
# Full DoubleConvBlock / InputConvBlock forward.
# ---------------------------------------------------------------------------
def init_params(key, cin, cout):
    k1, k2, k3, k4 = jax.random.split(key, 4)
    w1 = jax.random.normal(k1, (3, 3, 3, cin, cout), jnp.float32) / np.sqrt(cin * 27)
    b1 = jax.random.normal(k2, (cout,), jnp.float32) * 0.1
    w2 = jax.random.normal(k3, (3, 3, 3, cout, cout), jnp.float32) / np.sqrt(cout * 27)
    b2 = jax.random.normal(k4, (cout,), jnp.float32) * 0.1
    # b1/b2 kept for interface parity with nn.Conv3d but not applied: a
    # per-channel bias is cancelled exactly by the affine-free InstanceNorm.
    return dict(w1=w1, b1=b1, w2=w2, b2=b2)


def input_conv_block(x_ncdhw, params, eps=1e-5):
    """Pallas forward of InputConvBlock (= DoubleConvBlock). x: (N,Cin,D,H,W)."""
    N, Cin, D, H, W = x_ncdhw.shape
    Cout = params["w1"].shape[-1]
    # NDHWC, then flatten (W, C) into the lane dim -> (N, D, H, W*C).
    x = jnp.transpose(x_ncdhw, (0, 2, 3, 4, 1)).astype(jnp.float32)
    x = x.reshape(N, D, H, W * Cin)

    budget, limit = _vmem_budgets()
    WB = _pick_wb(W)
    w1b = _band_weights(params["w1"].astype(jnp.float32), WB)
    w2b = _band_weights(params["w2"].astype(jnp.float32), WB)
    cnt = float(D * H * W)

    # ---- layer 1: conv + fused InstanceNorm statistics (no prologue) ----
    td1 = _pick_td(D, H, W, Cin, Cout, WB, budget)
    ident_sc = jnp.ones((N, 1, 1, W * Cin), jnp.float32)
    ident_sh = jnp.zeros((N, 1, 1, W * Cin), jnp.float32)
    y1, stats1 = _conv3d_fused_stats(x, ident_sc, ident_sh, w1b,
                                     cin=Cin, cout=Cout, td=td1, WB=WB,
                                     fuse_prologue=False, vmem_limit=limit)
    sc1, sh1 = _norm_affine_from_stats(stats1, W, Cout, cnt, eps)

    # ---- layer 2: conv with layer-1 normalize+ReLU fused into its prologue --
    td2 = _pick_td(D, H, W, Cout, Cout, WB, budget)
    y2, stats2 = _conv3d_fused_stats(y1, sc1, sh1, w2b,
                                     cin=Cout, cout=Cout, td=td2, WB=WB,
                                     fuse_prologue=True, vmem_limit=limit)
    sc2, sh2 = _norm_affine_from_stats(stats2, W, Cout, cnt, eps)

    # ---- final normalize + ReLU (lane-dense elementwise pass) ----
    out = _scale_shift_relu(y2, sc2, sh2, vmem_limit=limit)
    out = out.reshape(N, D, H, W, Cout)
    return jnp.transpose(out, (0, 4, 1, 2, 3))                      # NCDHW


# ---------------------------------------------------------------------------
# Pure-JAX reference (mirrors PyTorch exactly, including the conv bias).
# ---------------------------------------------------------------------------
def _ref_forward(x_ncdhw, p, eps=1e-5):
    x = jnp.transpose(x_ncdhw, (0, 2, 3, 4, 1)).astype(jnp.float32)

    def conv(x, w, b):
        y = lax.conv_general_dilated(
            x, w, window_strides=(1, 1, 1), padding="SAME",
            dimension_numbers=("NDHWC", "DHWIO", "NDHWC"),
            precision=lax.Precision.HIGHEST)
        return y + b

    def inorm_relu(x):
        mean = jnp.mean(x, axis=(1, 2, 3), keepdims=True)
        var = jnp.mean((x - mean) ** 2, axis=(1, 2, 3), keepdims=True)
        return jnp.maximum((x - mean) * lax.rsqrt(var + eps), 0.0)

    x = inorm_relu(conv(x, p["w1"], p["b1"]))
    x = inorm_relu(conv(x, p["w2"], p["b2"]))
    return jnp.transpose(x, (0, 4, 1, 2, 3))


if __name__ == "__main__":
    # D=32 with TD<=16 exercises the depth-halo operands, the cross-depth-block
    # stats accumulation, and both fused prologue and final normalize paths.
    N, Cin, Cout, D, H, W = 2, 4, 8, 32, 8, 8
    key = jax.random.PRNGKey(0)
    kx, kp = jax.random.split(key)
    x = jax.random.normal(kx, (N, Cin, D, H, W), jnp.float32)       # NCDHW
    params = init_params(kp, Cin, Cout)

    out = jax.block_until_ready(input_conv_block(x, params))
    assert out.shape == (N, Cout, D, H, W)

    ref = jax.block_until_ready(_ref_forward(x, params))
    np.testing.assert_allclose(np.asarray(out), np.asarray(ref),
                               rtol=2e-3, atol=2e-3)

    print("KERNEL_OK")
</pallas_src>

<mosaic_0001>
module attributes {stable_mosaic.version = 11 : i64} {
  func.func @_conv3d_stats_kernel(%arg0: i32, %arg1: i32, %arg2: memref<1x16x8x32xf32, #tpu.memory_space<vmem>>, %arg3: memref<1x1x8x32xf32, #tpu.memory_space<vmem>>, %arg4: memref<1x1x8x32xf32, #tpu.memory_space<vmem>>, %arg5: memref<1x1x1x32xf32, #tpu.memory_space<vmem>>, %arg6: memref<1x1x1x32xf32, #tpu.memory_space<vmem>>, %arg7: memref<9x40x64xf32, #tpu.memory_space<vmem>>, %arg8: memref<1x16x8x64xf32, #tpu.memory_space<vmem>>, %arg9: memref<1x2x64xf32, #tpu.memory_space<vmem>>, %arg10: memref<18x10x40xf32, #tpu.memory_space<vmem>>) attributes {dimension_semantics = [#tpu.dimension_semantics<parallel>, #tpu.dimension_semantics<arbitrary>], iteration_bounds = array<i64: 2, 2>, scalar_prefetch = 0 : i64, scratch_operands = 1 : i64, tpu.core_type = #tpu.core_type<tc>, window_params = [{transform_indices = @transform_0, window_bounds = array<i64: 1, 16, 8, 32>}, {transform_indices = @transform_1, window_bounds = array<i64: 1, 1, 8, 32>}, {transform_indices = @transform_2, window_bounds = array<i64: 1, 1, 8, 32>}, {transform_indices = @transform_3, window_bounds = array<i64: 1, 1, 1, 32>}, {transform_indices = @transform_4, window_bounds = array<i64: 1, 1, 1, 32>}, {pipeline_mode = #tpu.pipeline_mode<synchronous>, transform_indices = @transform_5, window_bounds = array<i64: 9, 40, 64>}, {transform_indices = @transform_6, window_bounds = array<i64: 1, 16, 8, 64>}, {transform_indices = @transform_7, window_bounds = array<i64: 1, 2, 64>}]} {
    %c0_i32 = arith.constant 0 : i32
    %0 = arith.cmpi eq, %arg1, %c0_i32 : i32
    %1 = arith.extui %0 : i1 to i32
    %c0_i32_0 = arith.constant 0 : i32
    %2 = arith.cmpi ne, %1, %c0_i32_0 : i32
    scf.if %2 {
      %cst_84 = arith.constant 0.000000e+00 : f32
      %83 = vector.broadcast %cst_84 : f32 to vector<18x10x40xf32>
      %c0_85 = arith.constant 0 : index
      %c0_86 = arith.constant 0 : index
      %c0_87 = arith.constant 0 : index
      %84 = vector.load %arg10[%c0_85, %c0_86, %c0_87] : memref<18x10x40xf32, #tpu.memory_space<vmem>>, vector<18x10x40xf32>
      tpu.vector_store %arg10[%c0_85, %c0_86, %c0_87], %83 {strides = array<i32>} : memref<18x10x40xf32, #tpu.memory_space<vmem>>, vector<18x10x40xf32>,
      %cst_88 = arith.constant 0.000000e+00 : f32
      %85 = vector.broadcast %cst_88 : f32 to vector<1x2x64xf32>
      %c0_89 = arith.constant 0 : index
      %c0_90 = arith.constant 0 : index
      %c0_91 = arith.constant 0 : index
      %86 = vector.load %arg9[%c0_89, %c0_90, %c0_91] : memref<1x2x64xf32, #tpu.memory_space<vmem>>, vector<1x2x64xf32>
      tpu.vector_store %arg9[%c0_89, %c0_90, %c0_91], %85 {strides = array<i32>} : memref<1x2x64xf32, #tpu.memory_space<vmem>>, vector<1x2x64xf32>,
    } else {
    }
    %c1_i32 = arith.constant 1 : i32
    %3 = arith.cmpi eq, %arg1, %c1_i32 : i32
    %4 = arith.extui %3 : i1 to i32
    %c0_i32_1 = arith.constant 0 : i32
    %5 = arith.cmpi ne, %4, %c0_i32_1 : i32
    scf.if %5 {
      %cst_84 = arith.constant 0.000000e+00 : f32
      %83 = vector.broadcast %cst_84 : f32 to vector<1x10x40xf32>
      %c17 = arith.constant 17 : index
      %c0_85 = arith.constant 0 : index
      %c0_86 = arith.constant 0 : index
      %84 = vector.load %arg10[%c17, %c0_85, %c0_86] : memref<18x10x40xf32, #tpu.memory_space<vmem>>, vector<1x10x40xf32>
      tpu.vector_store %arg10[%c17, %c0_85, %c0_86], %83 {strides = array<i32>} : memref<18x10x40xf32, #tpu.memory_space<vmem>>, vector<1x10x40xf32>,
    } else {
    }
    %c0 = arith.constant 0 : index
    %c0_2 = arith.constant 0 : index
    %c0_3 = arith.constant 0 : index
    %c0_4 = arith.constant 0 : index
    %6 = vector.load %arg2[%c0, %c0_2, %c0_3, %c0_4] : memref<1x16x8x32xf32, #tpu.memory_space<vmem>>, vector<1x16x8x32xf32>
    %7 = vector.shape_cast %6 : vector<1x16x8x32xf32> to vector<16x8x32xf32>
    %c1 = arith.constant 1 : index
    %c1_5 = arith.constant 1 : index
    %c4 = arith.constant 4 : index
    %8 = vector.load %arg10[%c1, %c1_5, %c4] : memref<18x10x40xf32, #tpu.memory_space<vmem>>, vector<16x8x32xf32>
    tpu.vector_store %arg10[%c1, %c1_5, %c4], %7 {strides = array<i32>} : memref<18x10x40xf32, #tpu.memory_space<vmem>>, vector<16x8x32xf32>,
    %c0_i32_6 = arith.constant 0 : i32
    %9 = arith.cmpi sgt, %arg1, %c0_i32_6 : i32
    %10 = arith.extui %9 : i1 to i32
    %c0_i32_7 = arith.constant 0 : i32
    %11 = arith.cmpi ne, %10, %c0_i32_7 : i32
    scf.if %11 {
      %c0_84 = arith.constant 0 : index
      %c0_85 = arith.constant 0 : index
      %c0_86 = arith.constant 0 : index
      %c0_87 = arith.constant 0 : index
      %83 = vector.load %arg3[%c0_84, %c0_85, %c0_86, %c0_87] : memref<1x1x8x32xf32, #tpu.memory_space<vmem>>, vector<1x1x8x32xf32>
      %84 = vector.shape_cast %83 : vector<1x1x8x32xf32> to vector<1x8x32xf32>
      %c0_88 = arith.constant 0 : index
      %c1_89 = arith.constant 1 : index
      %c4_90 = arith.constant 4 : index
      %85 = vector.load %arg10[%c0_88, %c1_89, %c4_90] : memref<18x10x40xf32, #tpu.memory_space<vmem>>, vector<1x8x32xf32>
      tpu.vector_store %arg10[%c0_88, %c1_89, %c4_90], %84 {strides = array<i32>} : memref<18x10x40xf32, #tpu.memory_space<vmem>>, vector<1x8x32xf32>,
    } else {
    }
    %c1_i32_8 = arith.constant 1 : i32
    %12 = arith.cmpi slt, %arg1, %c1_i32_8 : i32
    %13 = arith.extui %12 : i1 to i32
    %c0_i32_9 = arith.constant 0 : i32
    %14 = arith.cmpi ne, %13, %c0_i32_9 : i32
    scf.if %14 {
      %c0_84 = arith.constant 0 : index
      %c0_85 = arith.constant 0 : index
      %c0_86 = arith.constant 0 : index
      %c0_87 = arith.constant 0 : index
      %83 = vector.load %arg4[%c0_84, %c0_85, %c0_86, %c0_87] : memref<1x1x8x32xf32, #tpu.memory_space<vmem>>, vector<1x1x8x32xf32>
      %84 = vector.shape_cast %83 : vector<1x1x8x32xf32> to vector<1x8x32xf32>
      %c17 = arith.constant 17 : index
      %c1_88 = arith.constant 1 : index
      %c4_89 = arith.constant 4 : index
      %85 = vector.load %arg10[%c17, %c1_88, %c4_89] : memref<18x10x40xf32, #tpu.memory_space<vmem>>, vector<1x8x32xf32>
      tpu.vector_store %arg10[%c17, %c1_88, %c4_89], %84 {strides = array<i32>} : memref<18x10x40xf32, #tpu.memory_space<vmem>>, vector<1x8x32xf32>,
    } else {
    }
    %c0_10 = arith.constant 0 : index
    %c0_11 = arith.constant 0 : index
    %c0_12 = arith.constant 0 : index
    %15 = vector.load %arg10[%c0_10, %c0_11, %c0_12] : memref<18x10x40xf32, #tpu.memory_space<vmem>>, vector<16x8x40xf32>
    %16 = vector.shape_cast %15 : vector<16x8x40xf32> to vector<128x40xf32>
    %c0_13 = arith.constant 0 : index
    %c0_14 = arith.constant 0 : index
    %c0_15 = arith.constant 0 : index
    %17 = vector.load %arg7[%c0_13, %c0_14, %c0_15] : memref<9x40x64xf32, #tpu.memory_space<vmem>>, vector<1x40x64xf32>
    %18 = vector.shape_cast %17 : vector<1x40x64xf32> to vector<40x64xf32>
    %cst = arith.constant dense<0.000000e+00> : vector<128x64xf32>
    %19 = tpu.matmul %16, %18, %cst {dimension_numbers = #tpu.dot_dimension_numbers<[1], [0], [0], [1], [0, 0, 1, 1], [], []>} : vector<128x40xf32>, vector<40x64xf32>, vector<128x64xf32> -> vector<128x64xf32>
    %c0_16 = arith.constant 0 : index
    %c1_17 = arith.constant 1 : index
    %c0_18 = arith.constant 0 : index
    %20 = vector.load %arg10[%c0_16, %c1_17, %c0_18] : memref<18x10x40xf32, #tpu.memory_space<vmem>>, vector<16x8x40xf32>
    %21 = vector.shape_cast %20 : vector<16x8x40xf32> to vector<128x40xf32>
    %c1_19 = arith.constant 1 : index
    %c0_20 = arith.constant 0 : index
    %c0_21 = arith.constant 0 : index
    %22 = vector.load %arg7[%c1_19, %c0_20, %c0_21] : memref<9x40x64xf32, #tpu.memory_space<vmem>>, vector<1x40x64xf32>
    %23 = vector.shape_cast %22 : vector<1x40x64xf32> to vector<40x64xf32>
    %cst_22 = arith.constant dense<0.000000e+00> : vector<128x64xf32>
    %24 = tpu.matmul %21, %23, %cst_22 {dimension_numbers = #tpu.dot_dimension_numbers<[1], [0], [0], [1], [0, 0, 1, 1], [], []>} : vector<128x40xf32>, vector<40x64xf32>, vector<128x64xf32> -> vector<128x64xf32>
    %25 = arith.addf %19, %24 : vector<128x64xf32>
    %c0_23 = arith.constant 0 : index
    %c2 = arith.constant 2 : index
    %c0_24 = arith.constant 0 : index
    %26 = vector.load %arg10[%c0_23, %c2, %c0_24] : memref<18x10x40xf32, #tpu.memory_space<vmem>>, vector<16x8x40xf32>
    %27 = vector.shape_cast %26 : vector<16x8x40xf32> to vector<128x40xf32>
    %c2_25 = arith.constant 2 : index
    %c0_26 = arith.constant 0 : index
    %c0_27 = arith.constant 0 : index
    %28 = vector.load %arg7[%c2_25, %c0_26, %c0_27] : memref<9x40x64xf32, #tpu.memory_space<vmem>>, vector<1x40x64xf32>
    %29 = vector.shape_cast %28 : vector<1x40x64xf32> to vector<40x64xf32>
    %cst_28 = arith.constant dense<0.000000e+00> : vector<128x64xf32>
    %30 = tpu.matmul %27, %29, %cst_28 {dimension_numbers = #tpu.dot_dimension_numbers<[1], [0], [0], [1], [0, 0, 1, 1], [], []>} : vector<128x40xf32>, vector<40x64xf32>, vector<128x64xf32> -> vector<128x64xf32>
    %31 = arith.addf %25, %30 : vector<128x64xf32>
    %c1_29 = arith.constant 1 : index
    %c0_30 = arith.constant 0 : index
    %c0_31 = arith.constant 0 : index
    %32 = vector.load %arg10[%c1_29, %c0_30, %c0_31] : memref<18x10x40xf32, #tpu.memory_space<vmem>>, vector<16x8x40xf32>
    %33 = vector.shape_cast %32 : vector<16x8x40xf32> to vector<128x40xf32>
    %c3 = arith.constant 3 : index
    %c0_32 = arith.constant 0 : index
    %c0_33 = arith.constant 0 : index
    %34 = vector.load %arg7[%c3, %c0_32, %c0_33] : memref<9x40x64xf32, #tpu.memory_space<vmem>>, vector<1x40x64xf32>
    %35 = vector.shape_cast %34 : vector<1x40x64xf32> to vector<40x64xf32>
    %cst_34 = arith.constant dense<0.000000e+00> : vector<128x64xf32>
    %36 = tpu.matmul %33, %35, %cst_34 {dimension_numbers = #tpu.dot_dimension_numbers<[1], [0], [0], [1], [0, 0, 1, 1], [], []>} : vector<128x40xf32>, vector<40x64xf32>, vector<128x64xf32> -> vector<128x64xf32>
    %37 = arith.addf %31, %36 : vector<128x64xf32>
    %c1_35 = arith.constant 1 : index
    %c1_36 = arith.constant 1 : index
    %c0_37 = arith.constant 0 : index
    %38 = vector.load %arg10[%c1_35, %c1_36, %c0_37] : memref<18x10x40xf32, #tpu.memory_space<vmem>>, vector<16x8x40xf32>
    %39 = vector.shape_cast %38 : vector<16x8x40xf32> to vector<128x40xf32>
    %c4_38 = arith.constant 4 : index
    %c0_39 = arith.constant 0 : index
    %c0_40 = arith.constant 0 : index
    %40 = vector.load %arg7[%c4_38, %c0_39, %c0_40] : memref<9x40x64xf32, #tpu.memory_space<vmem>>, vector<1x40x64xf32>
    %41 = vector.shape_cast %40 : vector<1x40x64xf32> to vector<40x64xf32>
    %cst_41 = arith.constant dense<0.000000e+00> : vector<128x64xf32>
    %42 = tpu.matmul %39, %41, %cst_41 {dimension_numbers = #tpu.dot_dimension_numbers<[1], [0], [0], [1], [0, 0, 1, 1], [], []>} : vector<128x40xf32>, vector<40x64xf32>, vector<128x64xf32> -> vector<128x64xf32>
    %43 = arith.addf %37, %42 : vector<128x64xf32>
    %c1_42 = arith.constant 1 : index
    %c2_43 = arith.constant 2 : index
    %c0_44 = arith.constant 0 : index
    %44 = vector.load %arg10[%c1_42, %c2_43, %c0_44] : memref<18x10x40xf32, #tpu.memory_space<vmem>>, vector<16x8x40xf32>
    %45 = vector.shape_cast %44 : vector<16x8x40xf32> to vector<128x40xf32>
    %c5 = arith.constant 5 : index
    %c0_45 = arith.constant 0 : index
    %c0_46 = arith.constant 0 : index
    %46 = vector.load %arg7[%c5, %c0_45, %c0_46] : memref<9x40x64xf32, #tpu.memory_space<vmem>>, vector<1x40x64xf32>
    %47 = vector.shape_cast %46 : vector<1x40x64xf32> to vector<40x64xf32>
    %cst_47 = arith.constant dense<0.000000e+00> : vector<128x64xf32>
    %48 = tpu.matmul %45, %47, %cst_47 {dimension_numbers = #tpu.dot_dimension_numbers<[1], [0], [0], [1], [0, 0, 1, 1], [], []>} : vector<128x40xf32>, vector<40x64xf32>, vector<128x64xf32> -> vector<128x64xf32>
    %49 = arith.addf %43, %48 : vector<128x64xf32>
    %c2_48 = arith.constant 2 : index
    %c0_49 = arith.constant 0 : index
    %c0_50 = arith.constant 0 : index
    %50 = vector.load %arg10[%c2_48, %c0_49, %c0_50] : memref<18x10x40xf32, #tpu.memory_space<vmem>>, vector<16x8x40xf32>
    %51 = vector.shape_cast %50 : vector<16x8x40xf32> to vector<128x40xf32>
    %c6 = arith.constant 6 : index
    %c0_51 = arith.constant 0 : index
    %c0_52 = arith.constant 0 : index
    %52 = vector.load %arg7[%c6, %c0_51, %c0_52] : memref<9x40x64xf32, #tpu.memory_space<vmem>>, vector<1x40x64xf32>
    %53 = vector.shape_cast %52 : vector<1x40x64xf32> to vector<40x64xf32>
    %cst_53 = arith.constant dense<0.000000e+00> : vector<128x64xf32>
    %54 = tpu.matmul %51, %53, %cst_53 {dimension_numbers = #tpu.dot_dimension_numbers<[1], [0], [0], [1], [0, 0, 1, 1], [], []>} : vector<128x40xf32>, vector<40x64xf32>, vector<128x64xf32> -> vector<128x64xf32>
    %55 = arith.addf %49, %54 : vector<128x64xf32>
    %c2_54 = arith.constant 2 : index
    %c1_55 = arith.constant 1 : index
    %c0_56 = arith.constant 0 : index
    %56 = vector.load %arg10[%c2_54, %c1_55, %c0_56] : memref<18x10x40xf32, #tpu.memory_space<vmem>>, vector<16x8x40xf32>
    %57 = vector.shape_cast %56 : vector<16x8x40xf32> to vector<128x40xf32>
    %c7 = arith.constant 7 : index
    %c0_57 = arith.constant 0 : index
    %c0_58 = arith.constant 0 : index
    %58 = vector.load %arg7[%c7, %c0_57, %c0_58] : memref<9x40x64xf32, #tpu.memory_space<vmem>>, vector<1x40x64xf32>
    %59 = vector.shape_cast %58 : vector<1x40x64xf32> to vector<40x64xf32>
    %cst_59 = arith.constant dense<0.000000e+00> : vector<128x64xf32>
    %60 = tpu.matmul %57, %59, %cst_59 {dimension_numbers = #tpu.dot_dimension_numbers<[1], [0], [0], [1], [0, 0, 1, 1], [], []>} : vector<128x40xf32>, vector<40x64xf32>, vector<128x64xf32> -> vector<128x64xf32>
    %61 = arith.addf %55, %60 : vector<128x64xf32>
    %c2_60 = arith.constant 2 : index
    %c2_61 = arith.constant 2 : index
    %c0_62 = arith.constant 0 : index
    %62 = vector.load %arg10[%c2_60, %c2_61, %c0_62] : memref<18x10x40xf32, #tpu.memory_space<vmem>>, vector<16x8x40xf32>
    %63 = vector.shape_cast %62 : vector<16x8x40xf32> to vector<128x40xf32>
    %c8 = arith.constant 8 : index
    %c0_63 = arith.constant 0 : index
    %c0_64 = arith.constant 0 : index
    %64 = vector.load %arg7[%c8, %c0_63, %c0_64] : memref<9x40x64xf32, #tpu.memory_space<vmem>>, vector<1x40x64xf32>
    %65 = vector.shape_cast %64 : vector<1x40x64xf32> to vector<40x64xf32>
    %cst_65 = arith.constant dense<0.000000e+00> : vector<128x64xf32>
    %66 = tpu.matmul %63, %65, %cst_65 {dimension_numbers = #tpu.dot_dimension_numbers<[1], [0], [0], [1], [0, 0, 1, 1], [], []>} : vector<128x40xf32>, vector<40x64xf32>, vector<128x64xf32> -> vector<128x64xf32>
    %67 = arith.addf %61, %66 : vector<128x64xf32>
    %68 = vector.shape_cast %67 : vector<128x64xf32> to vector<1x16x8x64xf32>
    %c0_66 = arith.constant 0 : index
    %c0_67 = arith.constant 0 : index
    %c0_68 = arith.constant 0 : index
    %c0_69 = arith.constant 0 : index
    %69 = vector.load %arg8[%c0_66, %c0_67, %c0_68, %c0_69] : memref<1x16x8x64xf32, #tpu.memory_space<vmem>>, vector<1x16x8x64xf32>
    tpu.vector_store %arg8[%c0_66, %c0_67, %c0_68, %c0_69], %68 {strides = array<i32>} : memref<1x16x8x64xf32, #tpu.memory_space<vmem>>, vector<1x16x8x64xf32>,
    %c0_70 = arith.constant 0 : index
    %c0_71 = arith.constant 0 : index
    %c0_72 = arith.constant 0 : index
    %70 = vector.load %arg9[%c0_70, %c0_71, %c0_72] : memref<1x2x64xf32, #tpu.memory_space<vmem>>, vector<1x1x64xf32>
    %cst_73 = arith.constant dense<0.000000e+00> : vector<64xf32>
    %71 = vector.multi_reduction <add>, %67, %cst_73 [0] : vector<128x64xf32> to vector<64xf32>
    %72 = vector.shape_cast %71 : vector<64xf32> to vector<1x64xf32>
    %73 = vector.shape_cast %72 : vector<1x64xf32> to vector<1x1x64xf32>
    %74 = arith.addf %70, %73 : vector<1x1x64xf32>
    %c0_74 = arith.constant 0 : index
    %c0_75 = arith.constant 0 : index
    %c0_76 = arith.constant 0 : index
    %75 = vector.load %arg9[%c0_74, %c0_75, %c0_76] : memref<1x2x64xf32, #tpu.memory_space<vmem>>, vector<1x1x64xf32>
    tpu.vector_store %arg9[%c0_74, %c0_75, %c0_76], %74 {strides = array<i32>} : memref<1x2x64xf32, #tpu.memory_space<vmem>>, vector<1x1x64xf32>,
    %c0_77 = arith.constant 0 : index
    %c1_78 = arith.constant 1 : index
    %c0_79 = arith.constant 0 : index
    %76 = vector.load %arg9[%c0_77, %c1_78, %c0_79] : memref<1x2x64xf32, #tpu.memory_space<vmem>>, vector<1x1x64xf32>
    %77 = arith.mulf %67, %67 : vector<128x64xf32>
    %cst_80 = arith.constant dense<0.000000e+00> : vector<64xf32>
    %78 = vector.multi_reduction <add>, %77, %cst_80 [0] : vector<128x64xf32> to vector<64xf32>
    %79 = vector.shape_cast %78 : vector<64xf32> to vector<1x64xf32>
    %80 = vector.shape_cast %79 : vector<1x64xf32> to vector<1x1x64xf32>
    %81 = arith.addf %76, %80 : vector<1x1x64xf32>
    %c0_81 = arith.constant 0 : index
    %c1_82 = arith.constant 1 : index
    %c0_83 = arith.constant 0 : index
    %82 = vector.load %arg9[%c0_81, %c1_82, %c0_83] : memref<1x2x64xf32, #tpu.memory_space<vmem>>, vector<1x1x64xf32>
    tpu.vector_store %arg9[%c0_81, %c1_82, %c0_83], %81 {strides = array<i32>} : memref<1x2x64xf32, #tpu.memory_space<vmem>>, vector<1x1x64xf32>,
    return
  }
  func.func @transform_0(%arg0: i32, %arg1: i32) -> (i32, i32, i32, i32) {
    %c0_i32 = arith.constant 0 : i32
    %c0_i32_0 = arith.constant 0 : i32
    %c0_i32_1 = arith.constant 0 : i32
    return %arg0, %arg1, %c0_i32, %c0_i32_0 : i32, i32, i32, i32
  }
  func.func @transform_1(%arg0: i32, %arg1: i32) -> (i32, i32, i32, i32) {
    %c16_i32 = arith.constant 16 : i32
    %0 = arith.muli %arg1, %c16_i32 : i32
    %c1_i32 = arith.constant 1 : i32
    %1 = arith.subi %0, %c1_i32 : i32
    %c0_i32 = arith.constant 0 : i32
    %2 = arith.maxsi %1, %c0_i32 : i32
    %c0_i32_0 = arith.constant 0 : i32
    %c0_i32_1 = arith.constant 0 : i32
    %c0_i32_2 = arith.constant 0 : i32
    return %arg0, %2, %c0_i32_0, %c0_i32_1 : i32, i32, i32, i32
  }
  func.func @transform_2(%arg0: i32, %arg1: i32) -> (i32, i32, i32, i32) {
    %c16_i32 = arith.constant 16 : i32
    %0 = arith.muli %arg1, %c16_i32 : i32
    %c16_i32_0 = arith.constant 16 : i32
    %1 = arith.addi %0, %c16_i32_0 : i32
    %c31_i32 = arith.constant 31 : i32
    %2 = arith.minsi %1, %c31_i32 : i32
    %c0_i32 = arith.constant 0 : i32
    %c0_i32_1 = arith.constant 0 : i32
    %c0_i32_2 = arith.constant 0 : i32
    return %arg0, %2, %c0_i32, %c0_i32_1 : i32, i32, i32, i32
  }
  func.func @transform_3(%arg0: i32, %arg1: i32) -> (i32, i32, i32, i32) {
    %c0_i32 = arith.constant 0 : i32
    %c0_i32_0 = arith.constant 0 : i32
    %c0_i32_1 = arith.constant 0 : i32
    %c0_i32_2 = arith.constant 0 : i32
    return %arg0, %c0_i32, %c0_i32_0, %c0_i32_1 : i32, i32, i32, i32
  }
  func.func @transform_4(%arg0: i32, %arg1: i32) -> (i32, i32, i32, i32) {
    %c0_i32 = arith.constant 0 : i32
    %c0_i32_0 = arith.constant 0 : i32
    %c0_i32_1 = arith.constant 0 : i32
    %c0_i32_2 = arith.constant 0 : i32
    return %arg0, %c0_i32, %c0_i32_0, %c0_i32_1 : i32, i32, i32, i32
  }
  func.func @transform_5(%arg0: i32, %arg1: i32) -> (i32, i32, i32) {
    %c0_i32 = arith.constant 0 : i32
    %c0_i32_0 = arith.constant 0 : i32
    %c0_i32_1 = arith.constant 0 : i32
    %c0_i32_2 = arith.constant 0 : i32
    return %c0_i32, %c0_i32_0, %c0_i32_1 : i32, i32, i32
  }
  func.func @transform_6(%arg0: i32, %arg1: i32) -> (i32, i32, i32, i32) {
    %c0_i32 = arith.constant 0 : i32
    %c0_i32_0 = arith.constant 0 : i32
    %c0_i32_1 = arith.constant 0 : i32
    return %arg0, %arg1, %c0_i32, %c0_i32_0 : i32, i32, i32, i32
  }
  func.func @transform_7(%arg0: i32, %arg1: i32) -> (i32, i32, i32) {
    %c0_i32 = arith.constant 0 : i32
    %c0_i32_0 = arith.constant 0 : i32
    %c0_i32_1 = arith.constant 0 : i32
    return %arg0, %c0_i32, %c0_i32_0 : i32, i32, i32
  }
}

</mosaic_0001>

<llo_original>
// kernel: tpu_custom_call.1
$region0: #{tpu_custom_call.1}
  #allocation0 [shape = 'u32[]', space=smem, size = 0x4, offset = 0x4, fixed_abs, tag = 'smem constant byte address 0x4 - core index']
  #allocation1 [shape = 'u32[144,128]{1,0:T(1,128)}', space=vmem, size = 0x12000, scoped, tag = 'internal scratch']
  #allocation2 [shape = 'f32[18,10,40]{2,1,0:T(8,128)}', space=vmem, size = 0x24000, scoped, tag = 'scratch operand']
  %s0 = inlined_call_operand.hbm [shape: f32[2,32,8,32], index: 0, kind: input, shape index: {}]
  %s1 = inlined_call_operand.hbm [shape: f32[2,32,8,32], index: 1, kind: input, shape index: {}]
  %s2 = inlined_call_operand.hbm [shape: f32[2,32,8,32], index: 2, kind: input, shape index: {}]
  %s3 = inlined_call_operand.vmem [shape: f32[2,1,1,32], index: 3, kind: input, shape index: {}]
  %s4 = inlined_call_operand.vmem [shape: f32[2,1,1,32], index: 4, kind: input, shape index: {}]
  %s5 = inlined_call_operand.hbm [shape: f32[9,40,64], index: 5, kind: input, shape index: {}]
  %s6 = inlined_call_operand.hbm [shape: f32[2,32,8,64], index: 6, kind: output, shape index: {0}]
  %s7 = inlined_call_operand.hbm [shape: f32[2,2,64], index: 7, kind: output, shape index: {1}]
  %8 = xla_tuple %s6, %s7
  %s9 = sld [smem:[#allocation0]]
  $region97: #{tpu_custom_call.1} parent=0
    _
  %s11 = ssub.s32 1, %s9
  %s12 = scalar_select 0, %s11, %s9
  $region1: #{tpu_custom_call.1} parent=0
    #allocation3 [shape = 'u8[131072]{0}', space=vmem, size = 0x20000, scoped, tag = 'input window, operand 0']
    #allocation4 [shape = 's32[2]{0}', space=sflag, size = 0x8, scoped, tag = 'scoped memory for tpu_custom_call.1']
    #allocation5 [shape = 's32[2]{0}', space=sflag, size = 0x8, scoped, tag = 'scoped memory for tpu_custom_call.1']
    #allocation6 [shape = 'u8[8192]{0}', space=vmem, size = 0x2000, scoped, tag = 'input window, operand 1']
    #allocation7 [shape = 's32[2]{0}', space=sflag, size = 0x8, scoped, tag = 'scoped memory for tpu_custom_call.1']
    #allocation8 [shape = 'u8[8192]{0}', space=vmem, size = 0x2000, scoped, tag = 'input window, operand 2']
    #allocation9 [shape = 'u8[184320]{0}', space=vmem, size = 0x2d000, scoped, tag = 'input window, operand 5, single buffered']
    #allocation10 [shape = 's32[1]{0}', space=sflag, size = 0x4, scoped, tag = 'scoped memory for tpu_custom_call.1']
    #allocation11 [shape = 'u8[131072]{0}', space=vmem, size = 0x20000, scoped, tag = 'output window, operand 0']
    #allocation12 [shape = 'u8[2048]{0}', space=vmem, size = 0x800, scoped, tag = 'output window, operand 1']
    #allocation13 [shape = 's32[2]{0}', space=sflag, size = 0x8, scoped, tag = 'scoped memory for tpu_custom_call.1']
    %13 = vsyncpa [#allocation4], 0
    %s14 = scalar_lea.sflag [#allocation4], 1
    %15 = vsyncpa %s14, 0
    %16 = vsyncpa [#allocation7], 0
    %s17 = scalar_lea.sflag [#allocation7], 1
    %18 = vsyncpa %s17, 0
    %19 = vsyncpa [#allocation10], 0
    %20 = vsyncpa [#allocation5], 0
    %s21 = scalar_lea.sflag [#allocation5], 1
    %22 = vsyncpa %s21, 0
    %23 = vsyncpa [#allocation13], 0
    %s24 = scalar_lea.sflag [#allocation13], 1
    %25 = vsyncpa %s24, 0
    loop: start=0, step=1, limit=6
    $region2: #{tpu_custom_call.1} parent=1 // loop_pre_header
      _
    $region3: #{tpu_custom_call.1} parent=1 // loop_header
      %s27 = sphi 0, %s31
      %p28 = scmp.ge.s32.totalorder %s27, 6
      %s34 = sphi 0, %s46
      %s35 = sphi 0, %s42
      %s36 = sphi 0, %s34
      %s37 = sphi 0, %s35
      %s38 = sphi 0, %s36
      %s39 = sphi 0, %s37
      %s51 = sphi 0, %s53
      %s54 = sphi 0, %s51
      %s55 = sphi 0, %s54
      %s71 = sphi 0, %s55
      %s87 = sphi 0, %s89
      %s90 = sphi 0, %s87
      %s91 = sphi 0, %s90
      %s107 = sphi 0, %s91
      %s123 = sphi 0, %s125
      %s126 = sphi 0, %s123
      %s127 = sphi 0, %s126
      %s143 = sphi 0, %s127
      %s149 = sphi 0, %s151
      %s152 = sphi 0, %s149
      %s153 = sphi 0, %s152
      %s169 = sphi 0, %s153
      %s175 = sphi 0, %s177
      %s178 = sphi 0, %s175
      %s179 = sphi 0, %s178
      %s195 = sphi 0, %s179
      %s199 = sphi 0, %s199
      %s201 = sphi 0, %s199
      %s202 = sphi 0, %s201
      %s216 = sphi 0, %s202
      %s224 = sphi 0, %s226
      %s227 = sphi 0, %s224
      %s228 = sphi 0, %s227
      %s244 = sphi 0, %s228
      %s250 = sphi 0, %s252
      %s253 = sphi 0, %s250
      %s254 = sphi 0, %s253
      %s270 = sphi 0, %s254
    $region4: #{tpu_custom_call.1} parent=1 // loop_header_branch
      %30 = sbr.rel (%p28) target = $region8
    $region5: #{tpu_custom_call.1} parent=1 // loop_body
      %s32 = ssub.s32 %s27, 1
      %s33 = ssub.s32 %s27, 2
      %s40 = sadd.s32 1, %s35
      %p41 = scmp.ge.s32.totalorder %s40, 2
      %s42 = scalar_select %p41, 0, %s40
      %s43 = sadd.s32 1, %s34
      %s44 = scalar_select %p41, %s43, %s34
      %p45 = scmp.ge.s32.totalorder %s44, 2
      %s46 = scalar_select %p45, 0, %s44
      %s47 = ssub.s32 %s34, %s46
      %s48 = ssub.s32 %s35, %s42
      %s49 = sor.u32 %s47, %s48
      %p50 = scmp.eq.s32.totalorder %s49, 0
      %s52 = sadd.s32 %s51, 1
      %s53 = scalar_select %p50, %s51, %s52
      %p56 = pneg %p50
      %p57 = scmp.eq.s32.totalorder %s27, 3
      %p58 = por %p56, %p57
      %p59 = scmp.ne.s32.totalorder %s51, %s54
      %p60 = scmp.eq.s32.totalorder %s27, 0
      %p61 = por %p59, %p60
      %p62 = scmp.ne.s32.totalorder %s51, %s54
      %p63 = scmp.eq.s32.totalorder %s32, 3
      %p64 = por %p62, %p63
      %p65 = scmp.ne.s32.totalorder %s54, %s55
      %p66 = scmp.eq.s32.totalorder %s32, 0
      %p67 = por %p65, %p66
      %p68 = scmp.ne.s32.totalorder %s54, %s55
      %p69 = scmp.eq.s32.totalorder %s33, 3
      %p70 = por %p68, %p69
      %p72 = scmp.ne.s32.totalorder %s55, %s71
      %p73 = scmp.eq.s32.totalorder %s33, 0
      %p74 = por %p72, %p73
      %s75 = smul.u32 %s35, 16
      %s76 = ssub.s32 %s75, 1
      %p77 = scmp.gt.s32.totalorder %s76, 0
      %s78 = scalar_select %p77, %s76, 0
      %s79 = smul.u32 %s42, 16
      %s80 = ssub.s32 %s79, 1
      %p81 = scmp.gt.s32.totalorder %s80, 0
      %s82 = scalar_select %p81, %s80, 0
      %s83 = ssub.s32 %s34, %s46
      %s84 = ssub.s32 %s78, %s82
      %s85 = sor.u32 %s83, %s84
      %p86 = scmp.eq.s32.totalorder %s85, 0
      %s88 = sadd.s32 %s87, 1
      %s89 = scalar_select %p86, %s87, %s88
      %p92 = pneg %p86
      %p93 = scmp.eq.s32.totalorder %s27, 3
      %p94 = por %p92, %p93
      %p95 = scmp.ne.s32.totalorder %s87, %s90
      %p96 = scmp.eq.s32.totalorder %s27, 0
      %p97 = por %p95, %p96
      %p98 = scmp.ne.s32.totalorder %s87, %s90
      %p99 = scmp.eq.s32.totalorder %s32, 3
      %p100 = por %p98, %p99
      %p101 = scmp.ne.s32.totalorder %s90, %s91
      %p102 = scmp.eq.s32.totalorder %s32, 0
      %p103 = por %p101, %p102
      %p104 = scmp.ne.s32.totalorder %s90, %s91
      %p105 = scmp.eq.s32.totalorder %s33, 3
      %p106 = por %p104, %p105
      %p108 = scmp.ne.s32.totalorder %s91, %s107
      %p109 = scmp.eq.s32.totalorder %s33, 0
      %p110 = por %p108, %p109
      %s111 = smul.u32 %s35, 16
      %s112 = sadd.s32 %s111, 16
      %p113 = scmp.lt.s32.totalorder %s112, 31
      %s114 = scalar_select %p113, %s112, 31
      %s115 = smul.u32 %s42, 16
      %s116 = sadd.s32 %s115, 16
      %p117 = scmp.lt.s32.totalorder %s116, 31
      %s118 = scalar_select %p117, %s116, 31
      %s119 = ssub.s32 %s34, %s46
      %s120 = ssub.s32 %s114, %s118
      %s121 = sor.u32 %s119, %s120
      %p122 = scmp.eq.s32.totalorder %s121, 0
      %s124 = sadd.s32 %s123, 1
      %s125 = scalar_select %p122, %s123, %s124
      %p128 = pneg %p122
      %p129 = scmp.eq.s32.totalorder %s27, 3
      %p130 = por %p128, %p129
      %p131 = scmp.ne.s32.totalorder %s123, %s126
      %p132 = scmp.eq.s32.totalorder %s27, 0
      %p133 = por %p131, %p132
      %p134 = scmp.ne.s32.totalorder %s123, %s126
      %p135 = scmp.eq.s32.totalorder %s32, 3
      %p136 = por %p134, %p135
      %p137 = scmp.ne.s32.totalorder %s126, %s127
      %p138 = scmp.eq.s32.totalorder %s32, 0
      %p139 = por %p137, %p138
      %p140 = scmp.ne.s32.totalorder %s126, %s127
      %p141 = scmp.eq.s32.totalorder %s33, 3
      %p142 = por %p140, %p141
      %p144 = scmp.ne.s32.totalorder %s127, %s143
      %p145 = scmp.eq.s32.totalorder %s33, 0
      %p146 = por %p144, %p145
      %s147 = ssub.s32 %s34, %s46
      %p148 = scmp.eq.s32.totalorder %s147, 0
      %s150 = sadd.s32 %s149, 1
      %s151 = scalar_select %p148, %s149, %s150
      %p154 = pneg %p148
      %p155 = scmp.eq.s32.totalorder %s27, 3
      %p156 = por %p154, %p155
      %p157 = scmp.ne.s32.totalorder %s149, %s152
      %p158 = scmp.eq.s32.totalorder %s27, 0
      %p159 = por %p157, %p158
      %p160 = scmp.ne.s32.totalorder %s149, %s152
      %p161 = scmp.eq.s32.totalorder %s32, 3
      %p162 = por %p160, %p161
      %p163 = scmp.ne.s32.totalorder %s152, %s153
      %p164 = scmp.eq.s32.totalorder %s32, 0
      %p165 = por %p163, %p164
      %p166 = scmp.ne.s32.totalorder %s152, %s153
      %p167 = scmp.eq.s32.totalorder %s33, 3
      %p168 = por %p166, %p167
      %p170 = scmp.ne.s32.totalorder %s153, %s169
      %p171 = scmp.eq.s32.totalorder %s33, 0
      %p172 = por %p170, %p171
      %s173 = ssub.s32 %s34, %s46
      %p174 = scmp.eq.s32.totalorder %s173, 0
      %s176 = sadd.s32 %s175, 1
      %s177 = scalar_select %p174, %s175, %s176
      %p180 = pneg %p174
      %p181 = scmp.eq.s32.totalorder %s27, 3
      %p182 = por %p180, %p181
      %p183 = scmp.ne.s32.totalorder %s175, %s178
      %p184 = scmp.eq.s32.totalorder %s27, 0
      %p185 = por %p183, %p184
      %p186 = scmp.ne.s32.totalorder %s175, %s178
      %p187 = scmp.eq.s32.totalorder %s32, 3
      %p188 = por %p186, %p187
      %p189 = scmp.ne.s32.totalorder %s178, %s179
      %p190 = scmp.eq.s32.totalorder %s32, 0
      %p191 = por %p189, %p190
      %p192 = scmp.ne.s32.totalorder %s178, %s179
      %p193 = scmp.eq.s32.totalorder %s33, 3
      %p194 = por %p192, %p193
      %p196 = scmp.ne.s32.totalorder %s179, %s195
      %p197 = scmp.eq.s32.totalorder %s33, 0
      %p198 = por %p196, %p197
      %s200 = sadd.s32 %s199, 1
      %p203 = scmp.eq.s32.totalorder %s27, 3
      %p204 = scmp.ne.s32.totalorder %s199, %s201
      %p205 = scmp.eq.s32.totalorder %s27, 0
      %p206 = por %p204, %p205
      %p207 = scmp.ne.s32.totalorder %s199, %s201
      %p208 = scmp.eq.s32.totalorder %s32, 3
      %p209 = por %p207, %p208
      %p210 = scmp.ne.s32.totalorder %s201, %s202
      %p211 = scmp.eq.s32.totalorder %s32, 0
      %p212 = por %p210, %p211
      %p213 = scmp.ne.s32.totalorder %s201, %s202
      %p214 = scmp.eq.s32.totalorder %s33, 3
      %p215 = por %p213, %p214
      %p217 = scmp.ne.s32.totalorder %s202, %s216
      %p218 = scmp.eq.s32.totalorder %s33, 0
      %p219 = por %p217, %p218
      %s220 = ssub.s32 %s34, %s46
      %s221 = ssub.s32 %s35, %s42
      %s222 = sor.u32 %s220, %s221
      %p223 = scmp.eq.s32.totalorder %s222, 0
      %s225 = sadd.s32 %s224, 1
      %s226 = scalar_select %p223, %s224, %s225
      %p229 = pneg %p223
      %p230 = scmp.eq.s32.totalorder %s27, 3
      %p231 = por %p229, %p230
      %p232 = scmp.ne.s32.totalorder %s224, %s227
      %p233 = scmp.eq.s32.totalorder %s27, 0
      %p234 = por %p232, %p233
      %p235 = scmp.ne.s32.totalorder %s224, %s227
      %p236 = scmp.eq.s32.totalorder %s32, 3
      %p237 = por %p235, %p236
      %p238 = scmp.ne.s32.totalorder %s227, %s228
      %p239 = scmp.eq.s32.totalorder %s32, 0
      %p240 = por %p238, %p239
      %p241 = scmp.ne.s32.totalorder %s227, %s228
      %p242 = scmp.eq.s32.totalorder %s33, 3
      %p243 = por %p241, %p242
      %p245 = scmp.ne.s32.totalorder %s228, %s244
      %p246 = scmp.eq.s32.totalorder %s33, 0
      %p247 = por %p245, %p246
      %s248 = ssub.s32 %s34, %s46
      %p249 = scmp.eq.s32.totalorder %s248, 0
      %s251 = sadd.s32 %s250, 1
      %s252 = scalar_select %p249, %s250, %s251
      %p255 = pneg %p249
      %p256 = scmp.eq.s32.totalorder %s27, 3
      %p257 = por %p255, %p256
      %p258 = scmp.ne.s32.totalorder %s250, %s253
      %p259 = scmp.eq.s32.totalorder %s27, 0
      %p260 = por %p258, %p259
      %p261 = scmp.ne.s32.totalorder %s250, %s253
      %p262 = scmp.eq.s32.totalorder %s32, 3
      %p263 = por %p261, %p262
      %p264 = scmp.ne.s32.totalorder %s253, %s254
      %p265 = scmp.eq.s32.totalorder %s32, 0
      %p266 = por %p264, %p265
      %p267 = scmp.ne.s32.totalorder %s253, %s254
      %p268 = scmp.eq.s32.totalorder %s33, 3
      %p269 = por %p267, %p268
      %p271 = scmp.ne.s32.totalorder %s254, %s270
      %p272 = scmp.eq.s32.totalorder %s33, 0
      %p273 = por %p271, %p272
      %p274 = scmp.le.s32.totalorder 1, %s27
      %p275 = scmp.lt.s32.totalorder %s27, 5
      %p276 = pnand %p274, %p275
      %p277 = pneg %p276
      // Predicated region
      $region9: #{tpu_custom_call.1} parent=5 // pred_check
        _
      $region10: #{tpu_custom_call.1} parent=5 // pred_check_branch
        %279 = sbr.rel (%p276) target = $region12
      $region11: #{tpu_custom_call.1} parent=5 // pred_region
        %s280 = ssub.s32 %s27, 1
        // Predicated region
        $region13: #{tpu_custom_call.1} parent=11 // pred_check
          %p281 = pneg %p212
        $region14: #{tpu_custom_call.1} parent=11 // pred_check_branch
          %283 = sbr.rel (%p281) target = $region16
        $region15: #{tpu_custom_call.1} parent=11 // pred_region
          %s285 = ssub.s32 5760, 5760
          %286 = vsyncadd [#allocation10], %s285
          %s287 = sshll.u32 [#allocation9], 4
          %s288 = int_to_ptr.vmem [resolvable:$true] %s287
          %293 = dma.hbm_to_vmem [thread:$0]  %s5, 5760, %s288, [#allocation10], 128, 128, 8
        $region16: #{tpu_custom_call.1} parent=11 // pred_fallthru
          _
      $region12: #{tpu_custom_call.1} parent=5 // pred_fallthru
        _
      %p294 = scmp.lt.s32.totalorder %s27, 4
      // Predicated region
      $region17: #{tpu_custom_call.1} parent=5 // pred_check
        %p295 = pneg %p294
      $region18: #{tpu_custom_call.1} parent=5 // pred_check_branch
        %297 = sbr.rel (%p295) target = $region20
      $region19: #{tpu_custom_call.1} parent=5 // pred_region
        // Predicated region
        $region21: #{tpu_custom_call.1} parent=19 // pred_check
          %p298 = pneg %p61
        $region22: #{tpu_custom_call.1} parent=19 // pred_check_branch
          %300 = sbr.rel (%p298) target = $region24
        $region23: #{tpu_custom_call.1} parent=19 // pred_region
          %s301 = sand.u32 %s51, 1
          %s302 = scalar_lea.sflag [#allocation4], %s301
          %s303 = sand.u32 %s51, 1
          %s304 = smul.addr %s303, 128
          %s305 = scalar_lea.vmem [#allocation3], %s304
          %s306 = smul.u32 16, %s35
          %s308 = ssub.s32 2048, 2048
          %309 = vsyncadd %s302, %s308
          %s310 = smul.addr %s34, 32
          %s311 = sadd.s32 %s306, %s310
          %s312 = smul.addr %s311, 128
          %s313 = scalar_lea.hbm %s0, %s312
          %s314 = sshll.u32 %s305, 4
          %s315 = int_to_ptr.vmem [resolvable:$true] %s314
          %320 = dma.hbm_to_vmem [thread:$0]  %s313, 2048, %s315, %s302, 128, 128, 8
        $region24: #{tpu_custom_call.1} parent=19 // pred_fallthru
          _
        // Predicated region
        $region25: #{tpu_custom_call.1} parent=19 // pred_check
          %p321 = pneg %p97
        $region26: #{tpu_custom_call.1} parent=19 // pred_check_branch
          %323 = sbr.rel (%p321) target = $region28
        $region27: #{tpu_custom_call.1} parent=19 // pred_region
          %s324 = sand.u32 %s27, 1
          %s325 = scalar_lea.sflag [#allocation7], %s324
          %s326 = sand.u32 %s87, 1
          %s327 = smul.addr %s326, 8
          %s328 = scalar_lea.vmem [#allocation6], %s327
          %s329 = smul.u32 %s35, 16
          %s330 = ssub.s32 %s329, 1
          %p331 = scmp.gt.s32.totalorder %s330, 0
          %s332 = scalar_select %p331, %s330, 0
          %s334 = ssub.s32 128, 128
          %335 = vsyncadd %s325, %s334
          %s336 = smul.addr %s34, 32
          %s337 = sadd.s32 %s332, %s336
          %s338 = smul.addr %s337, 128
          %s339 = scalar_lea.hbm %s1, %s338
          %s341 = sshll.u32 %s328, 4
          %s342 = int_to_ptr.vmem [resolvable:$true] %s341
          %344 = dma.hbm_to_vmem [thread:$0]  %s339, 128, %s342, %s325
        $region28: #{tpu_custom_call.1} parent=19 // pred_fallthru
          _
        // Predicated region
        $region29: #{tpu_custom_call.1} parent=19 // pred_check
          %p345 = pneg %p133
        $region30: #{tpu_custom_call.1} parent=19 // pred_check_branch
          %347 = sbr.rel (%p345) target = $region32
        $region31: #{tpu_custom_call.1} parent=19 // pred_region
          %s348 = sand.u32 %s27, 1
          %s349 = scalar_lea.sflag [#allocation7], %s348
          %s350 = sand.u32 %s123, 1
          %s351 = smul.addr %s350, 8
          %s352 = scalar_lea.vmem [#allocation8], %s351
          %s353 = smul.u32 %s35, 16
          %s354 = sadd.s32 %s353, 16
          %p355 = scmp.lt.s32.totalorder %s354, 31
          %s356 = scalar_select %p355, %s354, 31
          %s358 = ssub.s32 128, 128
          %359 = vsyncadd %s349, %s358
          %s360 = smul.addr %s34, 32
          %s361 = sadd.s32 %s356, %s360
          %s362 = smul.addr %s361, 128
          %s363 = scalar_lea.hbm %s2, %s362
          %s365 = sshll.u32 %s352, 4
          %s366 = int_to_ptr.vmem [resolvable:$true] %s365
          %368 = dma.hbm_to_vmem [thread:$0]  %s363, 128, %s366, %s349
        $region32: #{tpu_custom_call.1} parent=19 // pred_fallthru
          _
        // Predicated region
        $region33: #{tpu_custom_call.1} parent=19 // pred_check
          %p369 = pneg %p159
        $region34: #{tpu_custom_call.1} parent=19 // pred_check_branch
          %371 = sbr.rel (%p369) target = $region36
        $region35: #{tpu_custom_call.1} parent=19 // pred_region
          %p372 = scmp.lt.s32.totalorder %s34, 1
          %s373 = scalar_select %p372, %s34, 1
          %s374 = scalar_lea.vmem %s3, %s373
        $region36: #{tpu_custom_call.1} parent=19 // pred_fallthru
          _
        // Predicated region
        $region37: #{tpu_custom_call.1} parent=19 // pred_check
          %p375 = pneg %p185
        $region38: #{tpu_custom_call.1} parent=19 // pred_check_branch
          %377 = sbr.rel (%p375) target = $region40
        $region39: #{tpu_custom_call.1} parent=19 // pred_region
          %p378 = scmp.lt.s32.totalorder %s34, 1
          %s379 = scalar_select %p378, %s34, 1
          %s380 = scalar_lea.vmem %s4, %s379
        $region40: #{tpu_custom_call.1} parent=19 // pred_fallthru
          _
      $region20: #{tpu_custom_call.1} parent=5 // pred_fallthru
        _
      %p381 = scmp.le.s32.totalorder 1, %s27
      %p382 = scmp.lt.s32.totalorder %s27, 5
      %p383 = pnand %p381, %p382
      %p384 = pneg %p383
      // Predicated region
      $region41: #{tpu_custom_call.1} parent=5 // pred_check
        _
      $region42: #{tpu_custom_call.1} parent=5 // pred_check_branch
        %386 = sbr.rel (%p383) target = $region44
      $region43: #{tpu_custom_call.1} parent=5 // pred_region
        %s387 = ssub.s32 %s27, 1
        %s388 = sand.u32 %s54, 1
        %s389 = scalar_lea.sflag [#allocation4], %s388
        %s390 = sand.u32 %s54, 1
        %s391 = smul.addr %s390, 128
        %s392 = scalar_lea.vmem [#allocation3], %s391
        // Predicated region
        $region45: #{tpu_custom_call.1} parent=43 // pred_check
          %p393 = pneg %p67
        $region46: #{tpu_custom_call.1} parent=43 // pred_check_branch
          %395 = sbr.rel (%p393) target = $region48
        $region47: #{tpu_custom_call.1} parent=43 // pred_region
          %396 = dma.done %s389, 2048
        $region48: #{tpu_custom_call.1} parent=43 // pred_fallthru
          _
        %s397 = sand.u32 %s32, 1
        %s398 = scalar_lea.sflag [#allocation7], %s397
        %s399 = sand.u32 %s90, 1
        %s400 = smul.addr %s399, 8
        %s401 = scalar_lea.vmem [#allocation6], %s400
        // Predicated region
        $region49: #{tpu_custom_call.1} parent=43 // pred_check
          %p402 = pneg %p103
        $region50: #{tpu_custom_call.1} parent=43 // pred_check_branch
          %404 = sbr.rel (%p402) target = $region52
        $region51: #{tpu_custom_call.1} parent=43 // pred_region
          %405 = dma.done %s398, 128
        $region52: #{tpu_custom_call.1} parent=43 // pred_fallthru
          _
        %s406 = sand.u32 %s32, 1
        %s407 = scalar_lea.sflag [#allocation7], %s406
        %s408 = sand.u32 %s126, 1
        %s409 = smul.addr %s408, 8
        %s410 = scalar_lea.vmem [#allocation8], %s409
        // Predicated region
        $region53: #{tpu_custom_call.1} parent=43 // pred_check
          %p411 = pneg %p139
        $region54: #{tpu_custom_call.1} parent=43 // pred_check_branch
          %413 = sbr.rel (%p411) target = $region56
        $region55: #{tpu_custom_call.1} parent=43 // pred_region
          %414 = dma.done %s407, 128
        $region56: #{tpu_custom_call.1} parent=43 // pred_fallthru
          _
        // Predicated region
        $region57: #{tpu_custom_call.1} parent=43 // pred_check
          %p415 = pneg %p212
        $region58: #{tpu_custom_call.1} parent=43 // pred_check_branch
          %417 = sbr.rel (%p415) target = $region60
        $region59: #{tpu_custom_call.1} parent=43 // pred_region
          %418 = dma.done [#allocation10], 5760
        $region60: #{tpu_custom_call.1} parent=43 // pred_fallthru
          _
        %s419 = sand.u32 %s54, 1
        %s420 = scalar_lea.sflag [#allocation4], %s419
        %s421 = sand.u32 %s54, 1
        %s422 = smul.addr %s421, 128
        %s423 = scalar_lea.vmem [#allocation3], %s422
        %p424 = pneg %p67
        %p425 = pneg %p64
        %s426 = sand.u32 %s32, 1
        %s427 = scalar_lea.sflag [#allocation7], %s426
        %s428 = sand.u32 %s90, 1
        %s429 = smul.addr %s428, 8
        %s430 = scalar_lea.vmem [#allocation6], %s429
        %p431 = pneg %p103
        %p432 = pneg %p100
        %s433 = sand.u32 %s32, 1
        %s434 = scalar_lea.sflag [#allocation7], %s433
        %s435 = sand.u32 %s126, 1
        %s436 = smul.addr %s435, 8
        %s437 = scalar_lea.vmem [#allocation8], %s436
        %p438 = pneg %p139
        %p439 = pneg %p136
        %p440 = scmp.lt.s32.totalorder %s36, 1
        %s441 = scalar_select %p440, %s36, 1
        %s442 = scalar_lea.vmem %s3, %s441
        %p443 = pneg %p165
        %p444 = pneg %p162
        %p445 = scmp.lt.s32.totalorder %s36, 1
        %s446 = scalar_select %p445, %s36, 1
        %s447 = scalar_lea.vmem %s4, %s446
        %p448 = pneg %p191
        %p449 = pneg %p188
        %p450 = pneg %p212
        %p451 = pneg %p209
        %p452 = pneg %p240
        %p453 = pneg %p237
        %s454 = sand.u32 %s227, 1
        %s455 = scalar_lea.sflag [#allocation5], %s454
        %s456 = sand.u32 %s227, 1
        %s457 = smul.addr %s456, 128
        %s458 = scalar_lea.vmem [#allocation11], %s457
        %p459 = pneg %p266
        %p460 = pneg %p263
        %s461 = sand.u32 %s253, 1
        %s462 = scalar_lea.sflag [#allocation13], %s461
        %s463 = sand.u32 %s253, 1
        %s464 = smul.addr %s463, 2
        %s465 = scalar_lea.vmem [#allocation12], %s464
        %s466 = smul.u32 16, %s37
        %s467 = smul.u32 %s37, 16
        %s468 = ssub.s32 %s467, 1
        %p469 = scmp.gt.s32.totalorder %s468, 0
        %s470 = scalar_select %p469, %s468, 0
        %s471 = smul.u32 %s37, 16
        %s472 = sadd.s32 %s471, 16
        %p473 = scmp.lt.s32.totalorder %s472, 31
        %s474 = scalar_select %p473, %s472, 31
        %p475 = scmp.lt.s32.totalorder %s36, 1
        %s476 = scalar_select %p475, %s36, 1
        %s477 = scalar_lea.vmem %s3, %s476
        %p478 = scmp.lt.s32.totalorder %s36, 1
        %s479 = scalar_select %p478, %s36, 1
        %s480 = scalar_lea.vmem %s4, %s479
        %s481 = smul.u32 16, %s37
        %p482 = scmp.eq.s32.totalorder %s37, 0
        // Predicated region
        $region61: #{tpu_custom_call.1} parent=43 // pred_check
          %p483 = pneg %p482
        $region62: #{tpu_custom_call.1} parent=43 // pred_check_branch
          %485 = sbr.rel (%p483) target = $region64
        $region63: #{tpu_custom_call.1} parent=43 // pred_region
          %vm486 = vcmask 326656
          %487 = vst.msk [vmem:[#allocation2] sm:$0xff] %vm486, 0.0
          %vm488 = vcmask 320512
          %489 = vst.msk [vmem:[#allocation2 + $0x8] sm:$0x3] %vm488, 0.0
          %490 = vst.msk [vmem:[#allocation2 + $0x10] sm:$0xff] %vm486, 0.0
          %491 = vst.msk [vmem:[#allocation2 + $0x18] sm:$0x3] %vm488, 0.0
          %492 = vst.msk [vmem:[#allocation2 + $0x20] sm:$0xff] %vm486, 0.0
          %493 = vst.msk [vmem:[#allocation2 + $0x28] sm:$0x3] %vm488, 0.0
          %494 = vst.msk [vmem:[#allocation2 + $0x30] sm:$0xff] %vm486, 0.0
          %495 = vst.msk [vmem:[#allocation2 + $0x38] sm:$0x3] %vm488, 0.0
          %496 = vst.msk [vmem:[#allocation2 + $0x40] sm:$0xff] %vm486, 0.0
          %497 = vst.msk [vmem:[#allocation2 + $0x48] sm:$0x3] %vm488, 0.0
          %498 = vst.msk [vmem:[#allocation2 + $0x50] sm:$0xff] %vm486, 0.0
          %499 = vst.msk [vmem:[#allocation2 + $0x58] sm:$0x3] %vm488, 0.0
          %500 = vst.msk [vmem:[#allocation2 + $0x60] sm:$0xff] %vm486, 0.0
          %501 = vst.msk [vmem:[#allocation2 + $0x68] sm:$0x3] %vm488, 0.0
          %502 = vst.msk [vmem:[#allocation2 + $0x70] sm:$0xff] %vm486, 0.0
          %503 = vst.msk [vmem:[#allocation2 + $0x78] sm:$0x3] %vm488, 0.0
          %504 = vst.msk [vmem:[#allocation2 + $0x80] sm:$0xff] %vm486, 0.0
          %505 = vst.msk [vmem:[#allocation2 + $0x88] sm:$0x3] %vm488, 0.0
          %506 = vst.msk [vmem:[#allocation2 + $0x90] sm:$0xff] %vm486, 0.0
          %507 = vst.msk [vmem:[#allocation2 + $0x98] sm:$0x3] %vm488, 0.0
          %508 = vst.msk [vmem:[#allocation2 + $0xa0] sm:$0xff] %vm486, 0.0
          %509 = vst.msk [vmem:[#allocation2 + $0xa8] sm:$0x3] %vm488, 0.0
          %510 = vst.msk [vmem:[#allocation2 + $0xb0] sm:$0xff] %vm486, 0.0
          %511 = vst.msk [vmem:[#allocation2 + $0xb8] sm:$0x3] %vm488, 0.0
          %512 = vst.msk [vmem:[#allocation2 + $0xc0] sm:$0xff] %vm486, 0.0
          %513 = vst.msk [vmem:[#allocation2 + $0xc8] sm:$0x3] %vm488, 0.0
          %514 = vst.msk [vmem:[#allocation2 + $0xd0] sm:$0xff] %vm486, 0.0
          %515 = vst.msk [vmem:[#allocation2 + $0xd8] sm:$0x3] %vm488, 0.0
          %516 = vst.msk [vmem:[#allocation2 + $0xe0] sm:$0xff] %vm486, 0.0
          %517 = vst.msk [vmem:[#allocation2 + $0xe8] sm:$0x3] %vm488, 0.0
          %518 = vst.msk [vmem:[#allocation2 + $0xf0] sm:$0xff] %vm486, 0.0
          %519 = vst.msk [vmem:[#allocation2 + $0xf8] sm:$0x3] %vm488, 0.0
          %520 = vst.msk [vmem:[#allocation2 + $0x100] sm:$0xff] %vm486, 0.0
          %521 = vst.msk [vmem:[#allocation2 + $0x108] sm:$0x3] %vm488, 0.0
          %522 = vst.msk [vmem:[#allocation2 + $0x110] sm:$0xff] %vm486, 0.0
          %523 = vst.msk [vmem:[#allocation2 + $0x118] sm:$0x3] %vm488, 0.0
          %vm524 = vcmask 517120
          %525 = vst.msk [vmem:[%s465] sm:$0x3] %vm524, 0.0
        $region64: #{tpu_custom_call.1} parent=43 // pred_fallthru
          _
        %p526 = scmp.eq.s32.totalorder %s37, 1
        // Predicated region
        $region65: #{tpu_custom_call.1} parent=43 // pred_check
          %p527 = pneg %p526
        $region66: #{tpu_custom_call.1} parent=43 // pred_check_branch
          %529 = sbr.rel (%p527) target = $region68
        $region67: #{tpu_custom_call.1} parent=43 // pred_region
          %s530 = scalar_lea.vmem [#allocation2], 272
          %vm531 = vcmask 326656
          %532 = vst.msk [vmem:[%s530] sm:$0xff] %vm531, 0.0
          %vm533 = vcmask 320512
          %534 = vst.msk [vmem:[%s530 + $0x8] sm:$0x3] %vm533, 0.0
        $region68: #{tpu_custom_call.1} parent=43 // pred_fallthru
          _
        %v535 = vld [vmem:[%s392] sm:$0xff]
        %v536 = vld [vmem:[%s392 + $0x8] sm:$0xff]
        %v537 = vld [vmem:[%s392 + $0x10] sm:$0xff]
        %v538 = vld [vmem:[%s392 + $0x18] sm:$0xff]
        %v539 = vld [vmem:[%s392 + $0x20] sm:$0xff]
        %v540 = vld [vmem:[%s392 + $0x28] sm:$0xff]
        %v541 = vld [vmem:[%s392 + $0x30] sm:$0xff]
        %v542 = vld [vmem:[%s392 + $0x38] sm:$0xff]
        %v543 = vld [vmem:[%s392 + $0x40] sm:$0xff]
        %v544 = vld [vmem:[%s392 + $0x48] sm:$0xff]
        %v545 = vld [vmem:[%s392 + $0x50] sm:$0xff]
        %v546 = vld [vmem:[%s392 + $0x58] sm:$0xff]
        %v547 = vld [vmem:[%s392 + $0x60] sm:$0xff]
        %v548 = vld [vmem:[%s392 + $0x68] sm:$0xff]
        %v549 = vld [vmem:[%s392 + $0x70] sm:$0xff]
        %v550 = vld [vmem:[%s392 + $0x78] sm:$0xff]
        %567 = vrot.lane.b32.xlu0 %v535, 4
        %v568 = vpop.permute.xlu0 %567
        %569 = vrot.lane.b32.xlu0 %v536, 4
        %v570 = vpop.permute.xlu0 %569
        %571 = vrot.lane.b32.xlu0 %v537, 4
        %v572 = vpop.permute.xlu0 %571
        %573 = vrot.lane.b32.xlu0 %v538, 4
        %v574 = vpop.permute.xlu0 %573
        %575 = vrot.lane.b32.xlu0 %v539, 4
        %v576 = vpop.permute.xlu0 %575
        %577 = vrot.lane.b32.xlu0 %v540, 4
        %v578 = vpop.permute.xlu0 %577
        %579 = vrot.lane.b32.xlu0 %v541, 4
        %v580 = vpop.permute.xlu0 %579
        %581 = vrot.lane.b32.xlu0 %v542, 4
        %v582 = vpop.permute.xlu0 %581
        %583 = vrot.lane.b32.xlu0 %v543, 4
        %v584 = vpop.permute.xlu0 %583
        %585 = vrot.lane.b32.xlu0 %v544, 4
        %v586 = vpop.permute.xlu0 %585
        %587 = vrot.lane.b32.xlu0 %v545, 4
        %v588 = vpop.permute.xlu0 %587
        %589 = vrot.lane.b32.xlu0 %v546, 4
        %v590 = vpop.permute.xlu0 %589
        %591 = vrot.lane.b32.xlu0 %v547, 4
        %v592 = vpop.permute.xlu0 %591
        %593 = vrot.lane.b32.xlu0 %v548, 4
        %v594 = vpop.permute.xlu0 %593
        %595 = vrot.lane.b32.xlu0 %v549, 4
        %v596 = vpop.permute.xlu0 %595
        %597 = vrot.lane.b32.xlu0 %v550, 4
        %v598 = vpop.permute.xlu0 %597
        %s615 = scalar_lea.vmem [#allocation2], 16
        %vm616 = vcmask 293920
        %617 = vst.msk [vmem:[%s615 + $0x1] sm:$0xff] %vm616, %v568
        %618 = vst.msk [vmem:[%s615 + $0x11] sm:$0xff] %vm616, %v570
        %619 = vst.msk [vmem:[%s615 + $0x21] sm:$0xff] %vm616, %v572
        %620 = vst.msk [vmem:[%s615 + $0x31] sm:$0xff] %vm616, %v574
        %621 = vst.msk [vmem:[%s615 + $0x41] sm:$0xff] %vm616, %v576
        %622 = vst.msk [vmem:[%s615 + $0x51] sm:$0xff] %vm616, %v578
        %623 = vst.msk [vmem:[%s615 + $0x61] sm:$0xff] %vm616, %v580
        %624 = vst.msk [vmem:[%s615 + $0x71] sm:$0xff] %vm616, %v582
        %625 = vst.msk [vmem:[%s615 + $0x81] sm:$0xff] %vm616, %v584
        %626 = vst.msk [vmem:[%s615 + $0x91] sm:$0xff] %vm616, %v586
        %627 = vst.msk [vmem:[%s615 + $0xa1] sm:$0xff] %vm616, %v588
        %628 = vst.msk [vmem:[%s615 + $0xb1] sm:$0xff] %vm616, %v590
        %629 = vst.msk [vmem:[%s615 + $0xc1] sm:$0xff] %vm616, %v592
        %630 = vst.msk [vmem:[%s615 + $0xd1] sm:$0xff] %vm616, %v594
        %631 = vst.msk [vmem:[%s615 + $0xe1] sm:$0xff] %vm616, %v596
        %632 = vst.msk [vmem:[%s615 + $0xf1] sm:$0xff] %vm616, %v598
        %p633 = scmp.gt.s32.totalorder %s37, 0
        // Predicated region
        $region69: #{tpu_custom_call.1} parent=43 // pred_check
          %p634 = pneg %p633
        $region70: #{tpu_custom_call.1} parent=43 // pred_check_branch
          %636 = sbr.rel (%p634) target = $region72
        $region71: #{tpu_custom_call.1} parent=43 // pred_region
          %v637 = vld [vmem:[%s401] sm:$0xff]
          %639 = vrot.lane.b32.xlu0 %v637, 4
          %v640 = vpop.permute.xlu0 %639
          %642 = vst.msk [vmem:[#allocation2 + $0x1] sm:$0xff] %vm616, %v640
        $region72: #{tpu_custom_call.1} parent=43 // pred_fallthru
          _
        %p643 = scmp.lt.s32.totalorder %s37, 1
        // Predicated region
        $region73: #{tpu_custom_call.1} parent=43 // pred_check
          %p644 = pneg %p643
        $region74: #{tpu_custom_call.1} parent=43 // pred_check_branch
          %646 = sbr.rel (%p644) target = $region76
        $region75: #{tpu_custom_call.1} parent=43 // pred_region
          %v647 = vld [vmem:[%s410] sm:$0xff]
          %649 = vrot.lane.b32.xlu0 %v647, 4
          %v650 = vpop.permute.xlu0 %649
          %s652 = scalar_lea.vmem [#allocation2], 272
          %653 = vst.msk [vmem:[%s652 + $0x1] sm:$0xff] %vm616, %v650
        $region76: #{tpu_custom_call.1} parent=43 // pred_fallthru
          _
        %v654 = vld [vmem:[#allocation2] sm:$0xff]
        %v655 = vld [vmem:[#allocation2 + $0x10] sm:$0xff]
        %v656 = vld [vmem:[#allocation2 + $0x20] sm:$0xff]
        %v657 = vld [vmem:[#allocation2 + $0x30] sm:$0xff]
        %v658 = vld [vmem:[#allocation2 + $0x40] sm:$0xff]
        %v659 = vld [vmem:[#allocation2 + $0x50] sm:$0xff]
        %v660 = vld [vmem:[#allocation2 + $0x60] sm:$0xff]
        %v661 = vld [vmem:[#allocation2 + $0x70] sm:$0xff]
        %v662 = vld [vmem:[#allocation2 + $0x80] sm:$0xff]
        %v663 = vld [vmem:[#allocation2 + $0x90] sm:$0xff]
        %v664 = vld [vmem:[#allocation2 + $0xa0] sm:$0xff]
        %v665 = vld [vmem:[#allocation2 + $0xb0] sm:$0xff]
        %v666 = vld [vmem:[#allocation2 + $0xc0] sm:$0xff]
        %v667 = vld [vmem:[#allocation2 + $0xd0] sm:$0xff]
        %v668 = vld [vmem:[#allocation2 + $0xe0] sm:$0xff]
        %v669 = vld [vmem:[#allocation2 + $0xf0] sm:$0xff]
        %v670 = vld [vmem:[#allocation9] sm:$0xff]
        %v671 = vld [vmem:[#allocation9 + $0x8] sm:$0xff]
        %v672 = vld [vmem:[#allocation9 + $0x10] sm:$0xff]
        %v673 = vld [vmem:[#allocation9 + $0x18] sm:$0xff]
        %v674 = vld [vmem:[#allocation9 + $0x20] sm:$0xff]
        %v675 = vld [vmem:[#allocation2 + $0x1] sm:$0xff]
        %v676 = vld [vmem:[#allocation2 + $0x11] sm:$0xff]
        %v677 = vld [vmem:[#allocation2 + $0x21] sm:$0xff]
        %v678 = vld [vmem:[#allocation2 + $0x31] sm:$0xff]
        %v679 = vld [vmem:[#allocation2 + $0x41] sm:$0xff]
        %v680 = vld [vmem:[#allocation2 + $0x51] sm:$0xff]
        %v681 = vld [vmem:[#allocation2 + $0x61] sm:$0xff]
        %v682 = vld [vmem:[#allocation2 + $0x71] sm:$0xff]
        %v683 = vld [vmem:[#allocation2 + $0x81] sm:$0xff]
        %v684 = vld [vmem:[#allocation2 + $0x91] sm:$0xff]
        %v685 = vld [vmem:[#allocation2 + $0xa1] sm:$0xff]
        %v686 = vld [vmem:[#allocation2 + $0xb1] sm:$0xff]
        %v687 = vld [vmem:[#allocation2 + $0xc1] sm:$0xff]
        %v688 = vld [vmem:[#allocation2 + $0xd1] sm:$0xff]
        %v689 = vld [vmem:[#allocation2 + $0xe1] sm:$0xff]
        %v690 = vld [vmem:[#allocation2 + $0xf1] sm:$0xff]
        %s691 = scalar_lea.vmem [#allocation9], 40
        %v692 = vld [vmem:[%s691] sm:$0xff]
        %v693 = vld [vmem:[%s691 + $0x8] sm:$0xff]
        %v694 = vld [vmem:[%s691 + $0x10] sm:$0xff]
        %v695 = vld [vmem:[%s691 + $0x18] sm:$0xff]
        %v696 = vld [vmem:[%s691 + $0x20] sm:$0xff]
        %vm697 = vcmask 326656
        %v699 = vsel %vm697, %v675, 0
        %v702 = vsel %vm697, %v676, 0
        %v705 = vsel %vm697, %v677, 0
        %v708 = vsel %vm697, %v678, 0
        %v711 = vsel %vm697, %v679, 0
        %v714 = vsel %vm697, %v680, 0
        %v717 = vsel %vm697, %v681, 0
        %v720 = vsel %vm697, %v682, 0
        %v723 = vsel %vm697, %v683, 0
        %v726 = vsel %vm697, %v684, 0
        %v729 = vsel %vm697, %v685, 0
        %v732 = vsel %vm697, %v686, 0
        %v735 = vsel %vm697, %v687, 0
        %v738 = vsel %vm697, %v688, 0
        %v741 = vsel %vm697, %v689, 0
        %v744 = vsel %vm697, %v690, 0
        %746 = vmatprep.subr.mxu0 0.0
        %747 = vmatpush1.msra.mxu0 %v692
        %748 = vmatprep.subr.mxu0 0.0
        %749 = vmatpush1.msra.mxu0 %v693
        %750 = vmatprep.subr.mxu0 0.0
        %751 = vmatpush1.msra.mxu0 %v694
        %752 = vmatprep.subr.mxu0 0.0
        %753 = vmatpush1.msra.mxu0 %v695
        %754 = vmatprep.subr.mxu0 0.0
        %755 = vmatpush1.msra.mxu0 %v696
        %756 = vmatprep.subr.mxu0 0.0
        %757 = vmatpush1.msra.mxu0 0.0
        %758 = vmatprep.subr.mxu0 0.0
        %759 = vmatpush1.msra.mxu0 0.0
        %760 = vmatprep.subr.mxu0 0.0
        %761 = vmatpush1.msra.mxu0 0.0
        %762 = vmatprep.subr.mxu0 0.0
        %763 = vmatpush1.msra.mxu0 0.0
        %764 = vmatprep.subr.mxu0 0.0
        %765 = vmatpush1.msra.mxu0 0.0
        %766 = vmatprep.subr.mxu0 0.0
        %767 = vmatpush1.msra.mxu0 0.0
        %768 = vmatprep.subr.mxu0 0.0
        %769 = vmatpush1.msra.mxu0 0.0
        %770 = vmatprep.subr.mxu0 0.0
        %771 = vmatpush1.msra.mxu0 0.0
        %772 = vmatprep.subr.mxu0 0.0
        %773 = vmatpush1.msra.mxu0 0.0
        %774 = vmatprep.subr.mxu0 0.0
        %775 = vmatpush1.msra.mxu0 0.0
        %776 = vmatprep.subr.mxu0 0.0
        %777 = vmatpush1.msra.mxu0 0.0
        %778 = vmatprep.subr.mxu0 0.0
        %779 = vmatpush1.msra.mxu0 0.0
        %780 = vmatprep.subr.mxu0 0.0
        %781 = vmatpush1.msra.mxu0 0.0
        %782 = vmatprep.subr.mxu0 0.0
        %783 = vmatpush1.msra.mxu0 0.0
        %784 = vmatprep.subr.mxu0 0.0
        %785 = vmatpush1.msra.mxu0 0.0
        %786 = vmatprep.subr.mxu0 0.0
        %787 = vmatpush1.msra.mxu0 0.0
        %788 = vmatprep.subr.mxu0 0.0
        %789 = vmatpush1.msra.mxu0 0.0
        %790 = vmatprep.subr.mxu0 0.0
        %791 = vmatpush1.msra.mxu0 0.0
        %792 = vmatprep.subr.mxu0 0.0
        %793 = vmatpush1.msra.mxu0 0.0
        %794 = vmatprep.subr.mxu0 0.0
        %795 = vmatpush1.msra.mxu0 0.0
        %796 = vmatprep.subr.mxu0 0.0
        %797 = vmatpush1.msra.mxu0 0.0
        %798 = vmatprep.subr.mxu0 0.0
        %799 = vmatpush1.msra.mxu0 0.0
        %800 = vmatprep.subr.mxu0 0.0
        %801 = vmatpush1.msra.mxu0 0.0
        %802 = vmatprep.subr.mxu0 0.0
        %803 = vmatpush1.msra.mxu0 0.0
        %804 = vmatprep.subr.mxu0 0.0
        %805 = vmatpush1.msra.mxu0 0.0
        %806 = vmatprep.subr.mxu0 0.0
        %807 = vmatpush1.msra.mxu0 0.0
        %808 = vmatprep.subr.mxu0 0.0
        %809 = vmatpush1.msra.mxu0 0.0
        %810 = vmatprep.mubr.f32.mxu0 0.0
        %811 = vmatmul.mubr.f32.gmra.mrb[0].mxu0 %v699
        %v812 = vpop.f32.mrb[0].mxu0
        %v813 = vadd.f32 0.0, %v812
        %v814 = vpop.f32.mrb[0].mxu0
        %815 = vmatprep.mubr.f32.mxu0 0.0
        %816 = vmatmul.mubr.f32.gmra.mrb[0].mxu0 %v702
        %v817 = vpop.f32.mrb[0].mxu0
        %v818 = vadd.f32 0.0, %v817
        %v819 = vpop.f32.mrb[0].mxu0
        %820 = vmatprep.mubr.f32.mxu0 0.0
        %821 = vmatmul.mubr.f32.gmra.mrb[0].mxu0 %v705
        %v822 = vpop.f32.mrb[0].mxu0
        %v823 = vadd.f32 0.0, %v822
        %v824 = vpop.f32.mrb[0].mxu0
        %825 = vmatprep.mubr.f32.mxu0 0.0
        %826 = vmatmul.mubr.f32.gmra.mrb[0].mxu0 %v708
        %v827 = vpop.f32.mrb[0].mxu0
        %v828 = vadd.f32 0.0, %v827
        %v829 = vpop.f32.mrb[0].mxu0
        %830 = vmatprep.mubr.f32.mxu0 0.0
        %831 = vmatmul.mubr.f32.gmra.mrb[0].mxu0 %v711
        %v832 = vpop.f32.mrb[0].mxu0
        %v833 = vadd.f32 0.0, %v832
        %v834 = vpop.f32.mrb[0].mxu0
        %835 = vmatprep.mubr.f32.mxu0 0.0
        %836 = vmatmul.mubr.f32.gmra.mrb[0].mxu0 %v714
        %v837 = vpop.f32.mrb[0].mxu0
        %v838 = vadd.f32 0.0, %v837
        %v839 = vpop.f32.mrb[0].mxu0
        %840 = vmatprep.mubr.f32.mxu0 0.0
        %841 = vmatmul.mubr.f32.gmra.mrb[0].mxu0 %v717
        %v842 = vpop.f32.mrb[0].mxu0
        %v843 = vadd.f32 0.0, %v842
        %v844 = vpop.f32.mrb[0].mxu0
        %845 = vmatprep.mubr.f32.mxu0 0.0
        %846 = vmatmul.mubr.f32.gmra.mrb[0].mxu0 %v720
        %v847 = vpop.f32.mrb[0].mxu0
        %v848 = vadd.f32 0.0, %v847
        %v849 = vpop.f32.mrb[0].mxu0
        %850 = vmatprep.mubr.f32.mxu0 0.0
        %851 = vmatmul.mubr.f32.gmra.mrb[0].mxu0 %v723
        %v852 = vpop.f32.mrb[0].mxu0
        %v853 = vadd.f32 0.0, %v852
        %v854 = vpop.f32.mrb[0].mxu0
        %855 = vmatprep.mubr.f32.mxu0 0.0
        %856 = vmatmul.mubr.f32.gmra.mrb[0].mxu0 %v726
        %v857 = vpop.f32.mrb[0].mxu0
        %v858 = vadd.f32 0.0, %v857
        %v859 = vpop.f32.mrb[0].mxu0
        %860 = vmatprep.mubr.f32.mxu0 0.0
        %861 = vmatmul.mubr.f32.gmra.mrb[0].mxu0 %v729
        %v862 = vpop.f32.mrb[0].mxu0
        %v863 = vadd.f32 0.0, %v862
        %v864 = vpop.f32.mrb[0].mxu0
        %865 = vmatprep.mubr.f32.mxu0 0.0
        %866 = vmatmul.mubr.f32.gmra.mrb[0].mxu0 %v732
        %v867 = vpop.f32.mrb[0].mxu0
        %v868 = vadd.f32 0.0, %v867
        %v869 = vpop.f32.mrb[0].mxu0
        %870 = vmatprep.mubr.f32.mxu0 0.0
        %871 = vmatmul.mubr.f32.gmra.mrb[0].mxu0 %v735
        %v872 = vpop.f32.mrb[0].mxu0
        %v873 = vadd.f32 0.0, %v872
        %v874 = vpop.f32.mrb[0].mxu0
        %875 = vmatprep.mubr.f32.mxu0 0.0
        %876 = vmatmul.mubr.f32.gmra.mrb[0].mxu0 %v738
        %v877 = vpop.f32.mrb[0].mxu0
        %v878 = vadd.f32 0.0, %v877
        %v879 = vpop.f32.mrb[0].mxu0
        %880 = vmatprep.mubr.f32.mxu0 0.0
        %881 = vmatmul.mubr.f32.gmra.mrb[0].mxu0 %v741
        %v882 = vpop.f32.mrb[0].mxu0
        %v883 = vadd.f32 0.0, %v882
        %v884 = vpop.f32.mrb[0].mxu0
        %885 = vmatprep.mubr.f32.mxu0 0.0
        %886 = vmatmul.mubr.f32.gmra.mrb[0].mxu0 %v744
        %v887 = vpop.f32.mrb[0].mxu0
        %v888 = vadd.f32 0.0, %v887
        %v889 = vpop.f32.mrb[0].mxu0
        %890 = vdwg.mxu0
        %v892 = vsel %vm697, %v654, 0
        %v895 = vsel %vm697, %v655, 0
        %v898 = vsel %vm697, %v656, 0
        %v901 = vsel %vm697, %v657, 0
        %v904 = vsel %vm697, %v658, 0
        %v907 = vsel %vm697, %v659, 0
        %v910 = vsel %vm697, %v660, 0
        %v913 = vsel %vm697, %v661, 0
        %v916 = vsel %vm697, %v662, 0
        %v919 = vsel %vm697, %v663, 0
        %v922 = vsel %vm697, %v664, 0
        %v925 = vsel %vm697, %v665, 0
        %v928 = vsel %vm697, %v666, 0
        %v931 = vsel %vm697, %v667, 0
        %v934 = vsel %vm697, %v668, 0
        %v937 = vsel %vm697, %v669, 0
        %939 = vmatprep.subr.mxu0 0.0
        %940 = vmatpush1.msra.mxu0 %v670
        %941 = vmatprep.subr.mxu0 0.0
        %942 = vmatpush1.msra.mxu0 %v671
        %943 = vmatprep.subr.mxu0 0.0
        %944 = vmatpush1.msra.mxu0 %v672
        %945 = vmatprep.subr.mxu0 0.0
        %946 = vmatpush1.msra.mxu0 %v673
        %947 = vmatprep.subr.mxu0 0.0
        %948 = vmatpush1.msra.mxu0 %v674
        %949 = vmatprep.subr.mxu0 0.0
        %950 = vmatpush1.msra.mxu0 0.0
        %951 = vmatprep.subr.mxu0 0.0
        %952 = vmatpush1.msra.mxu0 0.0
        %953 = vmatprep.subr.mxu0 0.0
        %954 = vmatpush1.msra.mxu0 0.0
        %955 = vmatprep.subr.mxu0 0.0
        %956 = vmatpush1.msra.mxu0 0.0
        %957 = vmatprep.subr.mxu0 0.0
        %958 = vmatpush1.msra.mxu0 0.0
        %959 = vmatprep.subr.mxu0 0.0
        %960 = vmatpush1.msra.mxu0 0.0
        %961 = vmatprep.subr.mxu0 0.0
        %962 = vmatpush1.msra.mxu0 0.0
        %963 = vmatprep.subr.mxu0 0.0
        %964 = vmatpush1.msra.mxu0 0.0
        %965 = vmatprep.subr.mxu0 0.0
        %966 = vmatpush1.msra.mxu0 0.0
        %967 = vmatprep.subr.mxu0 0.0
        %968 = vmatpush1.msra.mxu0 0.0
        %969 = vmatprep.subr.mxu0 0.0
        %970 = vmatpush1.msra.mxu0 0.0
        %971 = vmatprep.subr.mxu0 0.0
        %972 = vmatpush1.msra.mxu0 0.0
        %973 = vmatprep.subr.mxu0 0.0
        %974 = vmatpush1.msra.mxu0 0.0
        %975 = vmatprep.subr.mxu0 0.0
        %976 = vmatpush1.msra.mxu0 0.0
        %977 = vmatprep.subr.mxu0 0.0
        %978 = vmatpush1.msra.mxu0 0.0
        %979 = vmatprep.subr.mxu0 0.0
        %980 = vmatpush1.msra.mxu0 0.0
        %981 = vmatprep.subr.mxu0 0.0
        %982 = vmatpush1.msra.mxu0 0.0
        %983 = vmatprep.subr.mxu0 0.0
        %984 = vmatpush1.msra.mxu0 0.0
        %985 = vmatprep.subr.mxu0 0.0
        %986 = vmatpush1.msra.mxu0 0.0
        %987 = vmatprep.subr.mxu0 0.0
        %988 = vmatpush1.msra.mxu0 0.0
        %989 = vmatprep.subr.mxu0 0.0
        %990 = vmatpush1.msra.mxu0 0.0
        %991 = vmatprep.subr.mxu0 0.0
        %992 = vmatpush1.msra.mxu0 0.0
        %993 = vmatprep.subr.mxu0 0.0
        %994 = vmatpush1.msra.mxu0 0.0
        %995 = vmatprep.subr.mxu0 0.0
        %996 = vmatpush1.msra.mxu0 0.0
        %997 = vmatprep.subr.mxu0 0.0
        %998 = vmatpush1.msra.mxu0 0.0
        %999 = vmatprep.subr.mxu0 0.0
        %1000 = vmatpush1.msra.mxu0 0.0
        %1001 = vmatprep.subr.mxu0 0.0
        %1002 = vmatpush1.msra.mxu0 0.0
        %1003 = vmatprep.mubr.f32.mxu0 0.0
        %1004 = vmatmul.mubr.f32.gmra.mrb[0].mxu0 %v892
        %v1005 = vpop.f32.mrb[0].mxu0
        %v1006 = vadd.f32 %v813, %v1005
        %v1007 = vpop.f32.mrb[0].mxu0
        %1008 = vmatprep.mubr.f32.mxu0 0.0
        %1009 = vmatmul.mubr.f32.gmra.mrb[0].mxu0 %v895
        %v1010 = vpop.f32.mrb[0].mxu0
        %v1011 = vadd.f32 %v818, %v1010
        %v1012 = vpop.f32.mrb[0].mxu0
        %1013 = vmatprep.mubr.f32.mxu0 0.0
        %1014 = vmatmul.mubr.f32.gmra.mrb[0].mxu0 %v898
        %v1015 = vpop.f32.mrb[0].mxu0
        %v1016 = vadd.f32 %v823, %v1015
        %v1017 = vpop.f32.mrb[0].mxu0
        %1018 = vmatprep.mubr.f32.mxu0 0.0
        %1019 = vmatmul.mubr.f32.gmra.mrb[0].mxu0 %v901
        %v1020 = vpop.f32.mrb[0].mxu0
        %v1021 = vadd.f32 %v828, %v1020
        %v1022 = vpop.f32.mrb[0].mxu0
        %1023 = vmatprep.mubr.f32.mxu0 0.0
        %1024 = vmatmul.mubr.f32.gmra.mrb[0].mxu0 %v904
        %v1025 = vpop.f32.mrb[0].mxu0
        %v1026 = vadd.f32 %v833, %v1025
        %v1027 = vpop.f32.mrb[0].mxu0
        %1028 = vmatprep.mubr.f32.mxu0 0.0
        %1029 = vmatmul.mubr.f32.gmra.mrb[0].mxu0 %v907
        %v1030 = vpop.f32.mrb[0].mxu0
        %v1031 = vadd.f32 %v838, %v1030
        %v1032 = vpop.f32.mrb[0].mxu0
        %1033 = vmatprep.mubr.f32.mxu0 0.0
        %1034 = vmatmul.mubr.f32.gmra.mrb[0].mxu0 %v910
        %v1035 = vpop.f32.mrb[0].mxu0
        %v1036 = vadd.f32 %v843, %v1035
        %v1037 = vpop.f32.mrb[0].mxu0
        %1038 = vmatprep.mubr.f32.mxu0 0.0
        %1039 = vmatmul.mubr.f32.gmra.mrb[0].mxu0 %v913
        %v1040 = vpop.f32.mrb[0].mxu0
        %v1041 = vadd.f32 %v848, %v1040
        %v1042 = vpop.f32.mrb[0].mxu0
        %1043 = vmatprep.mubr.f32.mxu0 0.0
        %1044 = vmatmul.mubr.f32.gmra.mrb[0].mxu0 %v916
        %v1045 = vpop.f32.mrb[0].mxu0
        %v1046 = vadd.f32 %v853, %v1045
        %v1047 = vpop.f32.mrb[0].mxu0
        %1048 = vmatprep.mubr.f32.mxu0 0.0
        %1049 = vmatmul.mubr.f32.gmra.mrb[0].mxu0 %v919
        %v1050 = vpop.f32.mrb[0].mxu0
        %v1051 = vadd.f32 %v858, %v1050
        %v1052 = vpop.f32.mrb[0].mxu0
        %1053 = vmatprep.mubr.f32.mxu0 0.0
        %1054 = vmatmul.mubr.f32.gmra.mrb[0].mxu0 %v922
        %v1055 = vpop.f32.mrb[0].mxu0
        %v1056 = vadd.f32 %v863, %v1055
        %v1057 = vpop.f32.mrb[0].mxu0
        %1058 = vmatprep.mubr.f32.mxu0 0.0
        %1059 = vmatmul.mubr.f32.gmra.mrb[0].mxu0 %v925
        %v1060 = vpop.f32.mrb[0].mxu0
        %v1061 = vadd.f32 %v868, %v1060
        %v1062 = vpop.f32.mrb[0].mxu0
        %1063 = vmatprep.mubr.f32.mxu0 0.0
        %1064 = vmatmul.mubr.f32.gmra.mrb[0].mxu0 %v928
        %v1065 = vpop.f32.mrb[0].mxu0
        %v1066 = vadd.f32 %v873, %v1065
        %v1067 = vpop.f32.mrb[0].mxu0
        %1068 = vmatprep.mubr.f32.mxu0 0.0
        %1069 = vmatmul.mubr.f32.gmra.mrb[0].mxu0 %v931
        %v1070 = vpop.f32.mrb[0].mxu0
        %v1071 = vadd.f32 %v878, %v1070
        %v1072 = vpop.f32.mrb[0].mxu0
        %1073 = vmatprep.mubr.f32.mxu0 0.0
        %1074 = vmatmul.mubr.f32.gmra.mrb[0].mxu0 %v934
        %v1075 = vpop.f32.mrb[0].mxu0
        %v1076 = vadd.f32 %v883, %v1075
        %v1077 = vpop.f32.mrb[0].mxu0
        %1078 = vmatprep.mubr.f32.mxu0 0.0
        %1079 = vmatmul.mubr.f32.gmra.mrb[0].mxu0 %v937
        %v1080 = vpop.f32.mrb[0].mxu0
        %v1081 = vadd.f32 %v888, %v1080
        %v1082 = vpop.f32.mrb[0].mxu0
        %1083 = vdwg.mxu0
        %v1084 = vld [vmem:[#allocation2 + $0x2] sm:$0xff]
        %v1085 = vld [vmem:[#allocation2 + $0x12] sm:$0xff]
        %v1086 = vld [vmem:[#allocation2 + $0x22] sm:$0xff]
        %v1087 = vld [vmem:[#allocation2 + $0x32] sm:$0xff]
        %v1088 = vld [vmem:[#allocation2 + $0x42] sm:$0xff]
        %v1089 = vld [vmem:[#allocation2 + $0x52] sm:$0xff]
        %v1090 = vld [vmem:[#allocation2 + $0x62] sm:$0xff]
        %v1091 = vld [vmem:[#allocation2 + $0x72] sm:$0xff]
        %v1092 = vld [vmem:[#allocation2 + $0x82] sm:$0xff]
        %v1093 = vld [vmem:[#allocation2 + $0x92] sm:$0xff]
        %v1094 = vld [vmem:[#allocation2 + $0xa2] sm:$0xff]
        %v1095 = vld [vmem:[#allocation2 + $0xb2] sm:$0xff]
        %v1096 = vld [vmem:[#allocation2 + $0xc2] sm:$0xff]
        %v1097 = vld [vmem:[#allocation2 + $0xd2] sm:$0xff]
        %v1098 = vld [vmem:[#allocation2 + $0xe2] sm:$0xff]
        %v1099 = vld [vmem:[#allocation2 + $0xf2] sm:$0xff]
        %s1100 = scalar_lea.vmem [#allocation9], 80
        %v1101 = vld [vmem:[%s1100] sm:$0xff]
        %v1102 = vld [vmem:[%s1100 + $0x8] sm:$0xff]
        %v1103 = vld [vmem:[%s1100 + $0x10] sm:$0xff]
        %v1104 = vld [vmem:[%s1100 + $0x18] sm:$0xff]
        %v1105 = vld [vmem:[%s1100 + $0x20] sm:$0xff]
        %v1107 = vsel %vm697, %v1084, 0
        %v1110 = vsel %vm697, %v1085, 0
        %v1113 = vsel %vm697, %v1086, 0
        %v1116 = vsel %vm697, %v1087, 0
        %v1119 = vsel %vm697, %v1088, 0
        %v1122 = vsel %vm697, %v1089, 0
        %v1125 = vsel %vm697, %v1090, 0
        %v1128 = vsel %vm697, %v1091, 0
        %v1131 = vsel %vm697, %v1092, 0
        %v1134 = vsel %vm697, %v1093, 0
        %v1137 = vsel %vm697, %v1094, 0
        %v1140 = vsel %vm697, %v1095, 0
        %v1143 = vsel %vm697, %v1096, 0
        %v1146 = vsel %vm697, %v1097, 0
        %v1149 = vsel %vm697, %v1098, 0
        %v1152 = vsel %vm697, %v1099, 0
        %1154 = vmatprep.subr.mxu0 0.0
        %1155 = vmatpush1.msra.mxu0 %v1101
        %1156 = vmatprep.subr.mxu0 0.0
        %1157 = vmatpush1.msra.mxu0 %v1102
        %1158 = vmatprep.subr.mxu0 0.0
        %1159 = vmatpush1.msra.mxu0 %v1103
        %1160 = vmatprep.subr.mxu0 0.0
        %1161 = vmatpush1.msra.mxu0 %v1104
        %1162 = vmatprep.subr.mxu0 0.0
        %1163 = vmatpush1.msra.mxu0 %v1105
        %1164 = vmatprep.subr.mxu0 0.0
        %1165 = vmatpush1.msra.mxu0 0.0
        %1166 = vmatprep.subr.mxu0 0.0
        %1167 = vmatpush1.msra.mxu0 0.0
        %1168 = vmatprep.subr.mxu0 0.0
        %1169 = vmatpush1.msra.mxu0 0.0
        %1170 = vmatprep.subr.mxu0 0.0
        %1171 = vmatpush1.msra.mxu0 0.0
        %1172 = vmatprep.subr.mxu0 0.0
        %1173 = vmatpush1.msra.mxu0 0.0
        %1174 = vmatprep.subr.mxu0 0.0
        %1175 = vmatpush1.msra.mxu0 0.0
        %1176 = vmatprep.subr.mxu0 0.0
        %1177 = vmatpush1.msra.mxu0 0.0
        %1178 = vmatprep.subr.mxu0 0.0
        %1179 = vmatpush1.msra.mxu0 0.0
        %1180 = vmatprep.subr.mxu0 0.0
        %1181 = vmatpush1.msra.mxu0 0.0
        %1182 = vmatprep.subr.mxu0 0.0
        %1183 = vmatpush1.msra.mxu0 0.0
        %1184 = vmatprep.subr.mxu0 0.0
        %1185 = vmatpush1.msra.mxu0 0.0
        %1186 = vmatprep.subr.mxu0 0.0
        %1187 = vmatpush1.msra.mxu0 0.0
        %1188 = vmatprep.subr.mxu0 0.0
        %1189 = vmatpush1.msra.mxu0 0.0
        %1190 = vmatprep.subr.mxu0 0.0
        %1191 = vmatpush1.msra.mxu0 0.0
        %1192 = vmatprep.subr.mxu0 0.0
        %1193 = vmatpush1.msra.mxu0 0.0
        %1194 = vmatprep.subr.mxu0 0.0
        %1195 = vmatpush1.msra.mxu0 0.0
        %1196 = vmatprep.subr.mxu0 0.0
        %1197 = vmatpush1.msra.mxu0 0.0
        %1198 = vmatprep.subr.mxu0 0.0
        %1199 = vmatpush1.msra.mxu0 0.0
        %1200 = vmatprep.subr.mxu0 0.0
        %1201 = vmatpush1.msra.mxu0 0.0
        %1202 = vmatprep.subr.mxu0 0.0
        %1203 = vmatpush1.msra.mxu0 0.0
        %1204 = vmatprep.subr.mxu0 0.0
        %1205 = vmatpush1.msra.mxu0 0.0
        %1206 = vmatprep.subr.mxu0 0.0
        %1207 = vmatpush1.msra.mxu0 0.0
        %1208 = vmatprep.subr.mxu0 0.0
        %1209 = vmatpush1.msra.mxu0 0.0
        %1210 = vmatprep.subr.mxu0 0.0
        %1211 = vmatpush1.msra.mxu0 0.0
        %1212 = vmatprep.subr.mxu0 0.0
        %1213 = vmatpush1.msra.mxu0 0.0
        %1214 = vmatprep.subr.mxu0 0.0
        %1215 = vmatpush1.msra.mxu0 0.0
        %1216 = vmatprep.subr.mxu0 0.0
        %1217 = vmatpush1.msra.mxu0 0.0
        %1218 = vmatprep.mubr.f32.mxu0 0.0
        %1219 = vmatmul.mubr.f32.gmra.mrb[0].mxu0 %v1107
        %v1220 = vpop.f32.mrb[0].mxu0
        %v1221 = vadd.f32 0.0, %v1220
        %v1222 = vpop.f32.mrb[0].mxu0
        %1223 = vmatprep.mubr.f32.mxu0 0.0
        %1224 = vmatmul.mubr.f32.gmra.mrb[0].mxu0 %v1110
        %v1225 = vpop.f32.mrb[0].mxu0
        %v1226 = vadd.f32 0.0, %v1225
        %v1227 = vpop.f32.mrb[0].mxu0
        %1228 = vmatprep.mubr.f32.mxu0 0.0
        %1229 = vmatmul.mubr.f32.gmra.mrb[0].mxu0 %v1113
        %v1230 = vpop.f32.mrb[0].mxu0
        %v1231 = vadd.f32 0.0, %v1230
        %v1232 = vpop.f32.mrb[0].mxu0
        %1233 = vmatprep.mubr.f32.mxu0 0.0
        %1234 = vmatmul.mubr.f32.gmra.mrb[0].mxu0 %v1116
        %v1235 = vpop.f32.mrb[0].mxu0
        %v1236 = vadd.f32 0.0, %v1235
        %v1237 = vpop.f32.mrb[0].mxu0
        %1238 = vmatprep.mubr.f32.mxu0 0.0
        %1239 = vmatmul.mubr.f32.gmra.mrb[0].mxu0 %v1119
        %v1240 = vpop.f32.mrb[0].mxu0
        %v1241 = vadd.f32 0.0, %v1240
        %v1242 = vpop.f32.mrb[0].mxu0
        %1243 = vmatprep.mubr.f32.mxu0 0.0
        %1244 = vmatmul.mubr.f32.gmra.mrb[0].mxu0 %v1122
        %v1245 = vpop.f32.mrb[0].mxu0
        %v1246 = vadd.f32 0.0, %v1245
        %v1247 = vpop.f32.mrb[0].mxu0
        %1248 = vmatprep.mubr.f32.mxu0 0.0
        %1249 = vmatmul.mubr.f32.gmra.mrb[0].mxu0 %v1125
        %v1250 = vpop.f32.mrb[0].mxu0
        %v1251 = vadd.f32 0.0, %v1250
        %v1252 = vpop.f32.mrb[0].mxu0
        %1253 = vmatprep.mubr.f32.mxu0 0.0
        %1254 = vmatmul.mubr.f32.gmra.mrb[0].mxu0 %v1128
        %v1255 = vpop.f32.mrb[0].mxu0
        %v1256 = vadd.f32 0.0, %v1255
        %v1257 = vpop.f32.mrb[0].mxu0
        %1258 = vmatprep.mubr.f32.mxu0 0.0
        %1259 = vmatmul.mubr.f32.gmra.mrb[0].mxu0 %v1131
        %v1260 = vpop.f32.mrb[0].mxu0
        %v1261 = vadd.f32 0.0, %v1260
        %v1262 = vpop.f32.mrb[0].mxu0
        %1263 = vmatprep.mubr.f32.mxu0 0.0
        %1264 = vmatmul.mubr.f32.gmra.mrb[0].mxu0 %v1134
        %v1265 = vpop.f32.mrb[0].mxu0
        %v1266 = vadd.f32 0.0, %v1265
        %v1267 = vpop.f32.mrb[0].mxu0
        %1268 = vmatprep.mubr.f32.mxu0 0.0
        %1269 = vmatmul.mubr.f32.gmra.mrb[0].mxu0 %v1137
        %v1270 = vpop.f32.mrb[0].mxu0
        %v1271 = vadd.f32 0.0, %v1270
        %v1272 = vpop.f32.mrb[0].mxu0
        %1273 = vmatprep.mubr.f32.mxu0 0.0
        %1274 = vmatmul.mubr.f32.gmra.mrb[0].mxu0 %v1140
        %v1275 = vpop.f32.mrb[0].mxu0
        %v1276 = vadd.f32 0.0, %v1275
        %v1277 = vpop.f32.mrb[0].mxu0
        %1278 = vmatprep.mubr.f32.mxu0 0.0
        %1279 = vmatmul.mubr.f32.gmra.mrb[0].mxu0 %v1143
        %v1280 = vpop.f32.mrb[0].mxu0
        %v1281 = vadd.f32 0.0, %v1280
        %v1282 = vpop.f32.mrb[0].mxu0
        %1283 = vmatprep.mubr.f32.mxu0 0.0
        %1284 = vmatmul.mubr.f32.gmra.mrb[0].mxu0 %v1146
        %v1285 = vpop.f32.mrb[0].mxu0
        %v1286 = vadd.f32 0.0, %v1285
        %v1287 = vpop.f32.mrb[0].mxu0
        %1288 = vmatprep.mubr.f32.mxu0 0.0
        %1289 = vmatmul.mubr.f32.gmra.mrb[0].mxu0 %v1149
        %v1290 = vpop.f32.mrb[0].mxu0
        %v1291 = vadd.f32 0.0, %v1290
        %v1292 = vpop.f32.mrb[0].mxu0
        %1293 = vmatprep.mubr.f32.mxu0 0.0
        %1294 = vmatmul.mubr.f32.gmra.mrb[0].mxu0 %v1152
        %v1295 = vpop.f32.mrb[0].mxu0
        %v1296 = vadd.f32 0.0, %v1295
        %v1297 = vpop.f32.mrb[0].mxu0
        %1298 = vdwg.mxu0
        %v1299 = vadd.f32 %v1006, %v1221
        %v1300 = vadd.f32 %v1011, %v1226
        %v1301 = vadd.f32 %v1016, %v1231
        %v1302 = vadd.f32 %v1021, %v1236
        %v1303 = vadd.f32 %v1026, %v1241
        %v1304 = vadd.f32 %v1031, %v1246
        %v1305 = vadd.f32 %v1036, %v1251
        %v1306 = vadd.f32 %v1041, %v1256
        %v1307 = vadd.f32 %v1046, %v1261
        %v1308 = vadd.f32 %v1051, %v1266
        %v1309 = vadd.f32 %v1056, %v1271
        %v1310 = vadd.f32 %v1061, %v1276
        %v1311 = vadd.f32 %v1066, %v1281
        %v1312 = vadd.f32 %v1071, %v1286
        %v1313 = vadd.f32 %v1076, %v1291
        %v1314 = vadd.f32 %v1081, %v1296
        %v1315 = vld [vmem:[%s615] sm:$0xff]
        %v1316 = vld [vmem:[%s615 + $0x10] sm:$0xff]
        %v1317 = vld [vmem:[%s615 + $0x20] sm:$0xff]
        %v1318 = vld [vmem:[%s615 + $0x30] sm:$0xff]
        %v1319 = vld [vmem:[%s615 + $0x40] sm:$0xff]
        %v1320 = vld [vmem:[%s615 + $0x50] sm:$0xff]
        %v1321 = vld [vmem:[%s615 + $0x60] sm:$0xff]
        %v1322 = vld [vmem:[%s615 + $0x70] sm:$0xff]
        %v1323 = vld [vmem:[%s615 + $0x80] sm:$0xff]
        %v1324 = vld [vmem:[%s615 + $0x90] sm:$0xff]
        %v1325 = vld [vmem:[%s615 + $0xa0] sm:$0xff]
        %v1326 = vld [vmem:[%s615 + $0xb0] sm:$0xff]
        %v1327 = vld [vmem:[%s615 + $0xc0] sm:$0xff]
        %v1328 = vld [vmem:[%s615 + $0xd0] sm:$0xff]
        %v1329 = vld [vmem:[%s615 + $0xe0] sm:$0xff]
        %v1330 = vld [vmem:[%s615 + $0xf0] sm:$0xff]
        %s1331 = scalar_lea.vmem [#allocation9], 120
        %v1332 = vld [vmem:[%s1331] sm:$0xff]
        %v1333 = vld [vmem:[%s1331 + $0x8] sm:$0xff]
        %v1334 = vld [vmem:[%s1331 + $0x10] sm:$0xff]
        %v1335 = vld [vmem:[%s1331 + $0x18] sm:$0xff]
        %v1336 = vld [vmem:[%s1331 + $0x20] sm:$0xff]
        %v1338 = vsel %vm697, %v1315, 0
        %v1341 = vsel %vm697, %v1316, 0
        %v1344 = vsel %vm697, %v1317, 0
        %v1347 = vsel %vm697, %v1318, 0
        %v1350 = vsel %vm697, %v1319, 0
        %v1353 = vsel %vm697, %v1320, 0
        %v1356 = vsel %vm697, %v1321, 0
        %v1359 = vsel %vm697, %v1322, 0
        %v1362 = vsel %vm697, %v1323, 0
        %v1365 = vsel %vm697, %v1324, 0
        %v1368 = vsel %vm697, %v1325, 0
        %v1371 = vsel %vm697, %v1326, 0
        %v1374 = vsel %vm697, %v1327, 0
        %v1377 = vsel %vm697, %v1328, 0
        %v1380 = vsel %vm697, %v1329, 0
        %v1383 = vsel %vm697, %v1330, 0
        %1385 = vmatprep.subr.mxu0 0.0
        %1386 = vmatpush1.msra.mxu0 %v1332
        %1387 = vmatprep.subr.mxu0 0.0
        %1388 = vmatpush1.msra.mxu0 %v1333
        %1389 = vmatprep.subr.mxu0 0.0
        %1390 = vmatpush1.msra.mxu0 %v1334
        %1391 = vmatprep.subr.mxu0 0.0
        %1392 = vmatpush1.msra.mxu0 %v1335
        %1393 = vmatprep.subr.mxu0 0.0
        %1394 = vmatpush1.msra.mxu0 %v1336
        %1395 = vmatprep.subr.mxu0 0.0
        %1396 = vmatpush1.msra.mxu0 0.0
        %1397 = vmatprep.subr.mxu0 0.0
        %1398 = vmatpush1.msra.mxu0 0.0
        %1399 = vmatprep.subr.mxu0 0.0
        %1400 = vmatpush1.msra.mxu0 0.0
        %1401 = vmatprep.subr.mxu0 0.0
        %1402 = vmatpush1.msra.mxu0 0.0
        %1403 = vmatprep.subr.mxu0 0.0
        %1404 = vmatpush1.msra.mxu0 0.0
        %1405 = vmatprep.subr.mxu0 0.0
        %1406 = vmatpush1.msra.mxu0 0.0
        %1407 = vmatprep.subr.mxu0 0.0
        %1408 = vmatpush1.msra.mxu0 0.0
        %1409 = vmatprep.subr.mxu0 0.0
        %1410 = vmatpush1.msra.mxu0 0.0
        %1411 = vmatprep.subr.mxu0 0.0
        %1412 = vmatpush1.msra.mxu0 0.0
        %1413 = vmatprep.subr.mxu0 0.0
        %1414 = vmatpush1.msra.mxu0 0.0
        %1415 = vmatprep.subr.mxu0 0.0
        %1416 = vmatpush1.msra.mxu0 0.0
        %1417 = vmatprep.subr.mxu0 0.0
        %1418 = vmatpush1.msra.mxu0 0.0
        %1419 = vmatprep.subr.mxu0 0.0
        %1420 = vmatpush1.msra.mxu0 0.0
        %1421 = vmatprep.subr.mxu0 0.0
        %1422 = vmatpush1.msra.mxu0 0.0
        %1423 = vmatprep.subr.mxu0 0.0
        %1424 = vmatpush1.msra.mxu0 0.0
        %1425 = vmatprep.subr.mxu0 0.0
        %1426 = vmatpush1.msra.mxu0 0.0
        %1427 = vmatprep.subr.mxu0 0.0
        %1428 = vmatpush1.msra.mxu0 0.0
        %1429 = vmatprep.subr.mxu0 0.0
        %1430 = vmatpush1.msra.mxu0 0.0
        %1431 = vmatprep.subr.mxu0 0.0
        %1432 = vmatpush1.msra.mxu0 0.0
        %1433 = vmatprep.subr.mxu0 0.0
        %1434 = vmatpush1.msra.mxu0 0.0
        %1435 = vmatprep.subr.mxu0 0.0
        %1436 = vmatpush1.msra.mxu0 0.0
        %1437 = vmatprep.subr.mxu0 0.0
        %1438 = vmatpush1.msra.mxu0 0.0
        %1439 = vmatprep.subr.mxu0 0.0
        %1440 = vmatpush1.msra.mxu0 0.0
        %1441 = vmatprep.subr.mxu0 0.0
        %1442 = vmatpush1.msra.mxu0 0.0
        %1443 = vmatprep.subr.mxu0 0.0
        %1444 = vmatpush1.msra.mxu0 0.0
        %1445 = vmatprep.subr.mxu0 0.0
        %1446 = vmatpush1.msra.mxu0 0.0
        %1447 = vmatprep.subr.mxu0 0.0
        %1448 = vmatpush1.msra.mxu0 0.0
        %1449 = vmatprep.mubr.f32.mxu0 0.0
        %1450 = vmatmul.mubr.f32.gmra.mrb[0].mxu0 %v1338
        %v1451 = vpop.f32.mrb[0].mxu0
        %v1452 = vadd.f32 0.0, %v1451
        %v1453 = vpop.f32.mrb[0].mxu0
        %1454 = vmatprep.mubr.f32.mxu0 0.0
        %1455 = vmatmul.mubr.f32.gmra.mrb[0].mxu0 %v1341
        %v1456 = vpop.f32.mrb[0].mxu0
        %v1457 = vadd.f32 0.0, %v1456
        %v1458 = vpop.f32.mrb[0].mxu0
        %1459 = vmatprep.mubr.f32.mxu0 0.0
        %1460 = vmatmul.mubr.f32.gmra.mrb[0].mxu0 %v1344
        %v1461 = vpop.f32.mrb[0].mxu0
        %v1462 = vadd.f32 0.0, %v1461
        %v1463 = vpop.f32.mrb[0].mxu0
        %1464 = vmatprep.mubr.f32.mxu0 0.0
        %1465 = vmatmul.mubr.f32.gmra.mrb[0].mxu0 %v1347
        %v1466 = vpop.f32.mrb[0].mxu0
        %v1467 = vadd.f32 0.0, %v1466
        %v1468 = vpop.f32.mrb[0].mxu0
        %1469 = vmatprep.mubr.f32.mxu0 0.0
        %1470 = vmatmul.mubr.f32.gmra.mrb[0].mxu0 %v1350
        %v1471 = vpop.f32.mrb[0].mxu0
        %v1472 = vadd.f32 0.0, %v1471
        %v1473 = vpop.f32.mrb[0].mxu0
        %1474 = vmatprep.mubr.f32.mxu0 0.0
        %1475 = vmatmul.mubr.f32.gmra.mrb[0].mxu0 %v1353
        %v1476 = vpop.f32.mrb[0].mxu0
        %v1477 = vadd.f32 0.0, %v1476
        %v1478 = vpop.f32.mrb[0].mxu0
        %1479 = vmatprep.mubr.f32.mxu0 0.0
        %1480 = vmatmul.mubr.f32.gmra.mrb[0].mxu0 %v1356
        %v1481 = vpop.f32.mrb[0].mxu0
        %v1482 = vadd.f32 0.0, %v1481
        %v1483 = vpop.f32.mrb[0].mxu0
        %1484 = vmatprep.mubr.f32.mxu0 0.0
        %1485 = vmatmul.mubr.f32.gmra.mrb[0].mxu0 %v1359
        %v1486 = vpop.f32.mrb[0].mxu0
        %v1487 = vadd.f32 0.0, %v1486
        %v1488 = vpop.f32.mrb[0].mxu0
        %1489 = vmatprep.mubr.f32.mxu0 0.0
        %1490 = vmatmul.mubr.f32.gmra.mrb[0].mxu0 %v1362
        %v1491 = vpop.f32.mrb[0].mxu0
        %v1492 = vadd.f32 0.0, %v1491
        %v1493 = vpop.f32.mrb[0].mxu0
        %1494 = vmatprep.mubr.f32.mxu0 0.0
        %1495 = vmatmul.mubr.f32.gmra.mrb[0].mxu0 %v1365
        %v1496 = vpop.f32.mrb[0].mxu0
        %v1497 = vadd.f32 0.0, %v1496
        %v1498 = vpop.f32.mrb[0].mxu0
        %1499 = vmatprep.mubr.f32.mxu0 0.0
        %1500 = vmatmul.mubr.f32.gmra.mrb[0].mxu0 %v1368
        %v1501 = vpop.f32.mrb[0].mxu0
        %v1502 = vadd.f32 0.0, %v1501
        %v1503 = vpop.f32.mrb[0].mxu0
        %1504 = vmatprep.mubr.f32.mxu0 0.0
        %1505 = vmatmul.mubr.f32.gmra.mrb[0].mxu0 %v1371
        %v1506 = vpop.f32.mrb[0].mxu0
        %v1507 = vadd.f32 0.0, %v1506
        %v1508 = vpop.f32.mrb[0].mxu0
        %1509 = vmatprep.mubr.f32.mxu0 0.0
        %1510 = vmatmul.mubr.f32.gmra.mrb[0].mxu0 %v1374
        %v1511 = vpop.f32.mrb[0].mxu0
        %v1512 = vadd.f32 0.0, %v1511
        %v1513 = vpop.f32.mrb[0].mxu0
        %1514 = vmatprep.mubr.f32.mxu0 0.0
        %1515 = vmatmul.mubr.f32.gmra.mrb[0].mxu0 %v1377
        %v1516 = vpop.f32.mrb[0].mxu0
        %v1517 = vadd.f32 0.0, %v1516
        %v1518 = vpop.f32.mrb[0].mxu0
        %1519 = vmatprep.mubr.f32.mxu0 0.0
        %1520 = vmatmul.mubr.f32.gmra.mrb[0].mxu0 %v1380
        %v1521 = vpop.f32.mrb[0].mxu0
        %v1522 = vadd.f32 0.0, %v1521
        %v1523 = vpop.f32.mrb[0].mxu0
        %1524 = vmatprep.mubr.f32.mxu0 0.0
        %1525 = vmatmul.mubr.f32.gmra.mrb[0].mxu0 %v1383
        %v1526 = vpop.f32.mrb[0].mxu0
        %v1527 = vadd.f32 0.0, %v1526
        %v1528 = vpop.f32.mrb[0].mxu0
        %1529 = vdwg.mxu0
        %v1530 = vadd.f32 %v1299, %v1452
        %v1531 = vadd.f32 %v1300, %v1457
        %v1532 = vadd.f32 %v1301, %v1462
        %v1533 = vadd.f32 %v1302, %v1467
        %v1534 = vadd.f32 %v1303, %v1472
        %v1535 = vadd.f32 %v1304, %v1477
        %v1536 = vadd.f32 %v1305, %v1482
        %v1537 = vadd.f32 %v1306, %v1487
        %v1538 = vadd.f32 %v1307, %v1492
        %v1539 = vadd.f32 %v1308, %v1497
        %v1540 = vadd.f32 %v1309, %v1502
        %v1541 = vadd.f32 %v1310, %v1507
        %v1542 = vadd.f32 %v1311, %v1512
        %v1543 = vadd.f32 %v1312, %v1517
        %v1544 = vadd.f32 %v1313, %v1522
        %v1545 = vadd.f32 %v1314, %v1527
        %v1546 = vld [vmem:[%s615 + $0x1] sm:$0xff]
        %v1547 = vld [vmem:[%s615 + $0x11] sm:$0xff]
        %v1548 = vld [vmem:[%s615 + $0x21] sm:$0xff]
        %v1549 = vld [vmem:[%s615 + $0x31] sm:$0xff]
        %v1550 = vld [vmem:[%s615 + $0x41] sm:$0xff]
        %v1551 = vld [vmem:[%s615 + $0x51] sm:$0xff]
        %v1552 = vld [vmem:[%s615 + $0x61] sm:$0xff]
        %v1553 = vld [vmem:[%s615 + $0x71] sm:$0xff]
        %v1554 = vld [vmem:[%s615 + $0x81] sm:$0xff]
        %v1555 = vld [vmem:[%s615 + $0x91] sm:$0xff]
        %v1556 = vld [vmem:[%s615 + $0xa1] sm:$0xff]
        %v1557 = vld [vmem:[%s615 + $0xb1] sm:$0xff]
        %v1558 = vld [vmem:[%s615 + $0xc1] sm:$0xff]
        %v1559 = vld [vmem:[%s615 + $0xd1] sm:$0xff]
        %v1560 = vld [vmem:[%s615 + $0xe1] sm:$0xff]
        %v1561 = vld [vmem:[%s615 + $0xf1] sm:$0xff]
        %s1562 = scalar_lea.vmem [#allocation9], 160
        %v1563 = vld [vmem:[%s1562] sm:$0xff]
        %v1564 = vld [vmem:[%s1562 + $0x8] sm:$0xff]
        %v1565 = vld [vmem:[%s1562 + $0x10] sm:$0xff]
        %v1566 = vld [vmem:[%s1562 + $0x18] sm:$0xff]
        %v1567 = vld [vmem:[%s1562 + $0x20] sm:$0xff]
        %v1569 = vsel %vm697, %v1546, 0
        %v1572 = vsel %vm697, %v1547, 0
        %v1575 = vsel %vm697, %v1548, 0
        %v1578 = vsel %vm697, %v1549, 0
        %v1581 = vsel %vm697, %v1550, 0
        %v1584 = vsel %vm697, %v1551, 0
        %v1587 = vsel %vm697, %v1552, 0
        %v1590 = vsel %vm697, %v1553, 0
        %v1593 = vsel %vm697, %v1554, 0
        %v1596 = vsel %vm697, %v1555, 0
        %v1599 = vsel %vm697, %v1556, 0
        %v1602 = vsel %vm697, %v1557, 0
        %v1605 = vsel %vm697, %v1558, 0
        %v1608 = vsel %vm697, %v1559, 0
        %v1611 = vsel %vm697, %v1560, 0
        %v1614 = vsel %vm697, %v1561, 0
        %1616 = vmatprep.subr.mxu0 0.0
        %1617 = vmatpush1.msra.mxu0 %v1563
        %1618 = vmatprep.subr.mxu0 0.0
        %1619 = vmatpush1.msra.mxu0 %v1564
        %1620 = vmatprep.subr.mxu0 0.0
        %1621 = vmatpush1.msra.mxu0 %v1565
        %1622 = vmatprep.subr.mxu0 0.0
        %1623 = vmatpush1.msra.mxu0 %v1566
        %1624 = vmatprep.subr.mxu0 0.0
        %1625 = vmatpush1.msra.mxu0 %v1567
        %1626 = vmatprep.subr.mxu0 0.0
        %1627 = vmatpush1.msra.mxu0 0.0
        %1628 = vmatprep.subr.mxu0 0.0
        %1629 = vmatpush1.msra.mxu0 0.0
        %1630 = vmatprep.subr.mxu0 0.0
        %1631 = vmatpush1.msra.mxu0 0.0
        %1632 = vmatprep.subr.mxu0 0.0
        %1633 = vmatpush1.msra.mxu0 0.0
        %1634 = vmatprep.subr.mxu0 0.0
        %1635 = vmatpush1.msra.mxu0 0.0
        %1636 = vmatprep.subr.mxu0 0.0
        %1637 = vmatpush1.msra.mxu0 0.0
        %1638 = vmatprep.subr.mxu0 0.0
        %1639 = vmatpush1.msra.mxu0 0.0
        %1640 = vmatprep.subr.mxu0 0.0
        %1641 = vmatpush1.msra.mxu0 0.0
        %1642 = vmatprep.subr.mxu0 0.0
        %1643 = vmatpush1.msra.mxu0 0.0
        %1644 = vmatprep.subr.mxu0 0.0
        %1645 = vmatpush1.msra.mxu0 0.0
        %1646 = vmatprep.subr.mxu0 0.0
        %1647 = vmatpush1.msra.mxu0 0.0
        %1648 = vmatprep.subr.mxu0 0.0
        %1649 = vmatpush1.msra.mxu0 0.0
        %1650 = vmatprep.subr.mxu0 0.0
        %1651 = vmatpush1.msra.mxu0 0.0
        %1652 = vmatprep.subr.mxu0 0.0
        %1653 = vmatpush1.msra.mxu0 0.0
        %1654 = vmatprep.subr.mxu0 0.0
        %1655 = vmatpush1.msra.mxu0 0.0
        %1656 = vmatprep.subr.mxu0 0.0
        %1657 = vmatpush1.msra.mxu0 0.0
        %1658 = vmatprep.subr.mxu0 0.0
        %1659 = vmatpush1.msra.mxu0 0.0
        %1660 = vmatprep.subr.mxu0 0.0
        %1661 = vmatpush1.msra.mxu0 0.0
        %1662 = vmatprep.subr.mxu0 0.0
        %1663 = vmatpush1.msra.mxu0 0.0
        %1664 = vmatprep.subr.mxu0 0.0
        %1665 = vmatpush1.msra.mxu0 0.0
        %1666 = vmatprep.subr.mxu0 0.0
        %1667 = vmatpush1.msra.mxu0 0.0
        %1668 = vmatprep.subr.mxu0 0.0
        %1669 = vmatpush1.msra.mxu0 0.0
        %1670 = vmatprep.subr.mxu0 0.0
        %1671 = vmatpush1.msra.mxu0 0.0
        %1672 = vmatprep.subr.mxu0 0.0
        %1673 = vmatpush1.msra.mxu0 0.0
        %1674 = vmatprep.subr.mxu0 0.0
        %1675 = vmatpush1.msra.mxu0 0.0
        %1676 = vmatprep.subr.mxu0 0.0
        %1677 = vmatpush1.msra.mxu0 0.0
        %1678 = vmatprep.subr.mxu0 0.0
        %1679 = vmatpush1.msra.mxu0 0.0
        %1680 = vmatprep.mubr.f32.mxu0 0.0
        %1681 = vmatmul.mubr.f32.gmra.mrb[0].mxu0 %v1569
        %v1682 = vpop.f32.mrb[0].mxu0
        %v1683 = vadd.f32 0.0, %v1682
        %v1684 = vpop.f32.mrb[0].mxu0
        %1685 = vmatprep.mubr.f32.mxu0 0.0
        %1686 = vmatmul.mubr.f32.gmra.mrb[0].mxu0 %v1572
        %v1687 = vpop.f32.mrb[0].mxu0
        %v1688 = vadd.f32 0.0, %v1687
        %v1689 = vpop.f32.mrb[0].mxu0
        %1690 = vmatprep.mubr.f32.mxu0 0.0
        %1691 = vmatmul.mubr.f32.gmra.mrb[0].mxu0 %v1575
        %v1692 = vpop.f32.mrb[0].mxu0
        %v1693 = vadd.f32 0.0, %v1692
        %v1694 = vpop.f32.mrb[0].mxu0
        %1695 = vmatprep.mubr.f32.mxu0 0.0
        %1696 = vmatmul.mubr.f32.gmra.mrb[0].mxu0 %v1578
        %v1697 = vpop.f32.mrb[0].mxu0
        %v1698 = vadd.f32 0.0, %v1697
        %v1699 = vpop.f32.mrb[0].mxu0
        %1700 = vmatprep.mubr.f32.mxu0 0.0
        %1701 = vmatmul.mubr.f32.gmra.mrb[0].mxu0 %v1581
        %v1702 = vpop.f32.mrb[0].mxu0
        %v1703 = vadd.f32 0.0, %v1702
        %v1704 = vpop.f32.mrb[0].mxu0
        %1705 = vmatprep.mubr.f32.mxu0 0.0
        %1706 = vmatmul.mubr.f32.gmra.mrb[0].mxu0 %v1584
        %v1707 = vpop.f32.mrb[0].mxu0
        %v1708 = vadd.f32 0.0, %v1707
        %v1709 = vpop.f32.mrb[0].mxu0
        %1710 = vmatprep.mubr.f32.mxu0 0.0
        %1711 = vmatmul.mubr.f32.gmra.mrb[0].mxu0 %v1587
        %v1712 = vpop.f32.mrb[0].mxu0
        %v1713 = vadd.f32 0.0, %v1712
        %v1714 = vpop.f32.mrb[0].mxu0
        %1715 = vmatprep.mubr.f32.mxu0 0.0
        %1716 = vmatmul.mubr.f32.gmra.mrb[0].mxu0 %v1590
        %v1717 = vpop.f32.mrb[0].mxu0
        %v1718 = vadd.f32 0.0, %v1717
        %v1719 = vpop.f32.mrb[0].mxu0
        %1720 = vmatprep.mubr.f32.mxu0 0.0
        %1721 = vmatmul.mubr.f32.gmra.mrb[0].mxu0 %v1593
        %v1722 = vpop.f32.mrb[0].mxu0
        %v1723 = vadd.f32 0.0, %v1722
        %v1724 = vpop.f32.mrb[0].mxu0
        %1725 = vmatprep.mubr.f32.mxu0 0.0
        %1726 = vmatmul.mubr.f32.gmra.mrb[0].mxu0 %v1596
        %v1727 = vpop.f32.mrb[0].mxu0
        %v1728 = vadd.f32 0.0, %v1727
        %v1729 = vpop.f32.mrb[0].mxu0
        %1730 = vmatprep.mubr.f32.mxu0 0.0
        %1731 = vmatmul.mubr.f32.gmra.mrb[0].mxu0 %v1599
        %v1732 = vpop.f32.mrb[0].mxu0
        %v1733 = vadd.f32 0.0, %v1732
        %v1734 = vpop.f32.mrb[0].mxu0
        %1735 = vmatprep.mubr.f32.mxu0 0.0
        %1736 = vmatmul.mubr.f32.gmra.mrb[0].mxu0 %v1602
        %v1737 = vpop.f32.mrb[0].mxu0
        %v1738 = vadd.f32 0.0, %v1737
        %v1739 = vpop.f32.mrb[0].mxu0
        %1740 = vmatprep.mubr.f32.mxu0 0.0
        %1741 = vmatmul.mubr.f32.gmra.mrb[0].mxu0 %v1605
        %v1742 = vpop.f32.mrb[0].mxu0
        %v1743 = vadd.f32 0.0, %v1742
        %v1744 = vpop.f32.mrb[0].mxu0
        %1745 = vmatprep.mubr.f32.mxu0 0.0
        %1746 = vmatmul.mubr.f32.gmra.mrb[0].mxu0 %v1608
        %v1747 = vpop.f32.mrb[0].mxu0
        %v1748 = vadd.f32 0.0, %v1747
        %v1749 = vpop.f32.mrb[0].mxu0
        %1750 = vmatprep.mubr.f32.mxu0 0.0
        %1751 = vmatmul.mubr.f32.gmra.mrb[0].mxu0 %v1611
        %v1752 = vpop.f32.mrb[0].mxu0
        %v1753 = vadd.f32 0.0, %v1752
        %v1754 = vpop.f32.mrb[0].mxu0
        %1755 = vmatprep.mubr.f32.mxu0 0.0
        %1756 = vmatmul.mubr.f32.gmra.mrb[0].mxu0 %v1614
        %v1757 = vpop.f32.mrb[0].mxu0
        %v1758 = vadd.f32 0.0, %v1757
        %v1759 = vpop.f32.mrb[0].mxu0
        %1760 = vdwg.mxu0
        %v1761 = vadd.f32 %v1530, %v1683
        %v1762 = vadd.f32 %v1531, %v1688
        %v1763 = vadd.f32 %v1532, %v1693
        %v1764 = vadd.f32 %v1533, %v1698
        %v1765 = vadd.f32 %v1534, %v1703
        %v1766 = vadd.f32 %v1535, %v1708
        %v1767 = vadd.f32 %v1536, %v1713
        %v1768 = vadd.f32 %v1537, %v1718
        %v1769 = vadd.f32 %v1538, %v1723
        %v1770 = vadd.f32 %v1539, %v1728
        %v1771 = vadd.f32 %v1540, %v1733
        %v1772 = vadd.f32 %v1541, %v1738
        %v1773 = vadd.f32 %v1542, %v1743
        %v1774 = vadd.f32 %v1543, %v1748
        %v1775 = vadd.f32 %v1544, %v1753
        %v1776 = vadd.f32 %v1545, %v1758
        %v1777 = vld [vmem:[%s615 + $0x2] sm:$0xff]
        %v1778 = vld [vmem:[%s615 + $0x12] sm:$0xff]
        %v1779 = vld [vmem:[%s615 + $0x22] sm:$0xff]
        %v1780 = vld [vmem:[%s615 + $0x32] sm:$0xff]
        %v1781 = vld [vmem:[%s615 + $0x42] sm:$0xff]
        %v1782 = vld [vmem:[%s615 + $0x52] sm:$0xff]
        %v1783 = vld [vmem:[%s615 + $0x62] sm:$0xff]
        %v1784 = vld [vmem:[%s615 + $0x72] sm:$0xff]
        %v1785 = vld [vmem:[%s615 + $0x82] sm:$0xff]
        %v1786 = vld [vmem:[%s615 + $0x92] sm:$0xff]
        %v1787 = vld [vmem:[%s615 + $0xa2] sm:$0xff]
        %v1788 = vld [vmem:[%s615 + $0xb2] sm:$0xff]
        %v1789 = vld [vmem:[%s615 + $0xc2] sm:$0xff]
        %v1790 = vld [vmem:[%s615 + $0xd2] sm:$0xff]
        %v1791 = vld [vmem:[%s615 + $0xe2] sm:$0xff]
        %v1792 = vld [vmem:[%s615 + $0xf2] sm:$0xff]
        %s1793 = scalar_lea.vmem [#allocation9], 200
        %v1794 = vld [vmem:[%s1793] sm:$0xff]
        %v1795 = vld [vmem:[%s1793 + $0x8] sm:$0xff]
        %v1796 = vld [vmem:[%s1793 + $0x10] sm:$0xff]
        %v1797 = vld [vmem:[%s1793 + $0x18] sm:$0xff]
        %v1798 = vld [vmem:[%s1793 + $0x20] sm:$0xff]
        %v1800 = vsel %vm697, %v1777, 0
        %v1803 = vsel %vm697, %v1778, 0
        %v1806 = vsel %vm697, %v1779, 0
        %v1809 = vsel %vm697, %v1780, 0
        %v1812 = vsel %vm697, %v1781, 0
        %v1815 = vsel %vm697, %v1782, 0
        %v1818 = vsel %vm697, %v1783, 0
        %v1821 = vsel %vm697, %v1784, 0
        %v1824 = vsel %vm697, %v1785, 0
        %v1827 = vsel %vm697, %v1786, 0
        %v1830 = vsel %vm697, %v1787, 0
        %v1833 = vsel %vm697, %v1788, 0
        %v1836 = vsel %vm697, %v1789, 0
        %v1839 = vsel %vm697, %v1790, 0
        %v1842 = vsel %vm697, %v1791, 0
        %v1845 = vsel %vm697, %v1792, 0
        %1847 = vmatprep.subr.mxu0 0.0
        %1848 = vmatpush1.msra.mxu0 %v1794
        %1849 = vmatprep.subr.mxu0 0.0
        %1850 = vmatpush1.msra.mxu0 %v1795
        %1851 = vmatprep.subr.mxu0 0.0
        %1852 = vmatpush1.msra.mxu0 %v1796
        %1853 = vmatprep.subr.mxu0 0.0
        %1854 = vmatpush1.msra.mxu0 %v1797
        %1855 = vmatprep.subr.mxu0 0.0
        %1856 = vmatpush1.msra.mxu0 %v1798
        %1857 = vmatprep.subr.mxu0 0.0
        %1858 = vmatpush1.msra.mxu0 0.0
        %1859 = vmatprep.subr.mxu0 0.0
        %1860 = vmatpush1.msra.mxu0 0.0
        %1861 = vmatprep.subr.mxu0 0.0
        %1862 = vmatpush1.msra.mxu0 0.0
        %1863 = vmatprep.subr.mxu0 0.0
        %1864 = vmatpush1.msra.mxu0 0.0
        %1865 = vmatprep.subr.mxu0 0.0
        %1866 = vmatpush1.msra.mxu0 0.0
        %1867 = vmatprep.subr.mxu0 0.0
        %1868 = vmatpush1.msra.mxu0 0.0
        %1869 = vmatprep.subr.mxu0 0.0
        %1870 = vmatpush1.msra.mxu0 0.0
        %1871 = vmatprep.subr.mxu0 0.0
        %1872 = vmatpush1.msra.mxu0 0.0
        %1873 = vmatprep.subr.mxu0 0.0
        %1874 = vmatpush1.msra.mxu0 0.0
        %1875 = vmatprep.subr.mxu0 0.0
        %1876 = vmatpush1.msra.mxu0 0.0
        %1877 = vmatprep.subr.mxu0 0.0
        %1878 = vmatpush1.msra.mxu0 0.0
        %1879 = vmatprep.subr.mxu0 0.0
        %1880 = vmatpush1.msra.mxu0 0.0
        %1881 = vmatprep.subr.mxu0 0.0
        %1882 = vmatpush1.msra.mxu0 0.0
        %1883 = vmatprep.subr.mxu0 0.0
        %1884 = vmatpush1.msra.mxu0 0.0
        %1885 = vmatprep.subr.mxu0 0.0
        %1886 = vmatpush1.msra.mxu0 0.0
        %1887 = vmatprep.subr.mxu0 0.0
        %1888 = vmatpush1.msra.mxu0 0.0
        %1889 = vmatprep.subr.mxu0 0.0
        %1890 = vmatpush1.msra.mxu0 0.0
        %1891 = vmatprep.subr.mxu0 0.0
        %1892 = vmatpush1.msra.mxu0 0.0
        %1893 = vmatprep.subr.mxu0 0.0
        %1894 = vmatpush1.msra.mxu0 0.0
        %1895 = vmatprep.subr.mxu0 0.0
        %1896 = vmatpush1.msra.mxu0 0.0
        %1897 = vmatprep.subr.mxu0 0.0
        %1898 = vmatpush1.msra.mxu0 0.0
        %1899 = vmatprep.subr.mxu0 0.0
        %1900 = vmatpush1.msra.mxu0 0.0
        %1901 = vmatprep.subr.mxu0 0.0
        %1902 = vmatpush1.msra.mxu0 0.0
        %1903 = vmatprep.subr.mxu0 0.0
        %1904 = vmatpush1.msra.mxu0 0.0
        %1905 = vmatprep.subr.mxu0 0.0
        %1906 = vmatpush1.msra.mxu0 0.0
        %1907 = vmatprep.subr.mxu0 0.0
        %1908 = vmatpush1.msra.mxu0 0.0
        %1909 = vmatprep.subr.mxu0 0.0
        %1910 = vmatpush1.msra.mxu0 0.0
        %1911 = vmatprep.mubr.f32.mxu0 0.0
        %1912 = vmatmul.mubr.f32.gmra.mrb[0].mxu0 %v1800
        %v1913 = vpop.f32.mrb[0].mxu0
        %v1914 = vadd.f32 0.0, %v1913
        %v1915 = vpop.f32.mrb[0].mxu0
        %1916 = vmatprep.mubr.f32.mxu0 0.0
        %1917 = vmatmul.mubr.f32.gmra.mrb[0].mxu0 %v1803
        %v1918 = vpop.f32.mrb[0].mxu0
        %v1919 = vadd.f32 0.0, %v1918
        %v1920 = vpop.f32.mrb[0].mxu0
        %1921 = vmatprep.mubr.f32.mxu0 0.0
        %1922 = vmatmul.mubr.f32.gmra.mrb[0].mxu0 %v1806
        %v1923 = vpop.f32.mrb[0].mxu0
        %v1924 = vadd.f32 0.0, %v1923
        %v1925 = vpop.f32.mrb[0].mxu0
        %1926 = vmatprep.mubr.f32.mxu0 0.0
        %1927 = vmatmul.mubr.f32.gmra.mrb[0].mxu0 %v1809
        %v1928 = vpop.f32.mrb[0].mxu0
        %v1929 = vadd.f32 0.0, %v1928
        %v1930 = vpop.f32.mrb[0].mxu0
        %1931 = vmatprep.mubr.f32.mxu0 0.0
        %1932 = vmatmul.mubr.f32.gmra.mrb[0].mxu0 %v1812
        %v1933 = vpop.f32.mrb[0].mxu0
        %v1934 = vadd.f32 0.0, %v1933
        %v1935 = vpop.f32.mrb[0].mxu0
        %1936 = vmatprep.mubr.f32.mxu0 0.0
        %1937 = vmatmul.mubr.f32.gmra.mrb[0].mxu0 %v1815
        %v1938 = vpop.f32.mrb[0].mxu0
        %v1939 = vadd.f32 0.0, %v1938
        %v1940 = vpop.f32.mrb[0].mxu0
        %1941 = vmatprep.mubr.f32.mxu0 0.0
        %1942 = vmatmul.mubr.f32.gmra.mrb[0].mxu0 %v1818
        %v1943 = vpop.f32.mrb[0].mxu0
        %v1944 = vadd.f32 0.0, %v1943
        %v1945 = vpop.f32.mrb[0].mxu0
        %1946 = vmatprep.mubr.f32.mxu0 0.0
        %1947 = vmatmul.mubr.f32.gmra.mrb[0].mxu0 %v1821
        %v1948 = vpop.f32.mrb[0].mxu0
        %v1949 = vadd.f32 0.0, %v1948
        %v1950 = vpop.f32.mrb[0].mxu0
        %1951 = vmatprep.mubr.f32.mxu0 0.0
        %1952 = vmatmul.mubr.f32.gmra.mrb[0].mxu0 %v1824
        %v1953 = vpop.f32.mrb[0].mxu0
        %v1954 = vadd.f32 0.0, %v1953
        %v1955 = vpop.f32.mrb[0].mxu0
        %1956 = vmatprep.mubr.f32.mxu0 0.0
        %1957 = vmatmul.mubr.f32.gmra.mrb[0].mxu0 %v1827
        %v1958 = vpop.f32.mrb[0].mxu0
        %v1959 = vadd.f32 0.0, %v1958
        %v1960 = vpop.f32.mrb[0].mxu0
        %1961 = vmatprep.mubr.f32.mxu0 0.0
        %1962 = vmatmul.mubr.f32.gmra.mrb[0].mxu0 %v1830
        %v1963 = vpop.f32.mrb[0].mxu0
        %v1964 = vadd.f32 0.0, %v1963
        %v1965 = vpop.f32.mrb[0].mxu0
        %1966 = vmatprep.mubr.f32.mxu0 0.0
        %1967 = vmatmul.mubr.f32.gmra.mrb[0].mxu0 %v1833
        %v1968 = vpop.f32.mrb[0].mxu0
        %v1969 = vadd.f32 0.0, %v1968
        %v1970 = vpop.f32.mrb[0].mxu0
        %1971 = vmatprep.mubr.f32.mxu0 0.0
        %1972 = vmatmul.mubr.f32.gmra.mrb[0].mxu0 %v1836
        %v1973 = vpop.f32.mrb[0].mxu0
        %v1974 = vadd.f32 0.0, %v1973
        %v1975 = vpop.f32.mrb[0].mxu0
        %1976 = vmatprep.mubr.f32.mxu0 0.0
        %1977 = vmatmul.mubr.f32.gmra.mrb[0].mxu0 %v1839
        %v1978 = vpop.f32.mrb[0].mxu0
        %v1979 = vadd.f32 0.0, %v1978
        %v1980 = vpop.f32.mrb[0].mxu0
        %1981 = vmatprep.mubr.f32.mxu0 0.0
        %1982 = vmatmul.mubr.f32.gmra.mrb[0].mxu0 %v1842
        %v1983 = vpop.f32.mrb[0].mxu0
        %v1984 = vadd.f32 0.0, %v1983
        %v1985 = vpop.f32.mrb[0].mxu0
        %1986 = vmatprep.mubr.f32.mxu0 0.0
        %1987 = vmatmul.mubr.f32.gmra.mrb[0].mxu0 %v1845
        %v1988 = vpop.f32.mrb[0].mxu0
        %v1989 = vadd.f32 0.0, %v1988
        %v1990 = vpop.f32.mrb[0].mxu0
        %1991 = vdwg.mxu0
        %v1992 = vadd.f32 %v1761, %v1914
        %v1993 = vadd.f32 %v1762, %v1919
        %v1994 = vadd.f32 %v1763, %v1924
        %v1995 = vadd.f32 %v1764, %v1929
        %v1996 = vadd.f32 %v1765, %v1934
        %v1997 = vadd.f32 %v1766, %v1939
        %v1998 = vadd.f32 %v1767, %v1944
        %v1999 = vadd.f32 %v1768, %v1949
        %v2000 = vadd.f32 %v1769, %v1954
        %v2001 = vadd.f32 %v1770, %v1959
        %v2002 = vadd.f32 %v1771, %v1964
        %v2003 = vadd.f32 %v1772, %v1969
        %v2004 = vadd.f32 %v1773, %v1974
        %v2005 = vadd.f32 %v1774, %v1979
        %v2006 = vadd.f32 %v1775, %v1984
        %v2007 = vadd.f32 %v1776, %v1989
        %s2008 = scalar_lea.vmem [#allocation2], 32
        %v2009 = vld [vmem:[%s2008] sm:$0xff]
        %v2010 = vld [vmem:[%s2008 + $0x10] sm:$0xff]
        %v2011 = vld [vmem:[%s2008 + $0x20] sm:$0xff]
        %v2012 = vld [vmem:[%s2008 + $0x30] sm:$0xff]
        %v2013 = vld [vmem:[%s2008 + $0x40] sm:$0xff]
        %v2014 = vld [vmem:[%s2008 + $0x50] sm:$0xff]
        %v2015 = vld [vmem:[%s2008 + $0x60] sm:$0xff]
        %v2016 = vld [vmem:[%s2008 + $0x70] sm:$0xff]
        %v2017 = vld [vmem:[%s2008 + $0x80] sm:$0xff]
        %v2018 = vld [vmem:[%s2008 + $0x90] sm:$0xff]
        %v2019 = vld [vmem:[%s2008 + $0xa0] sm:$0xff]
        %v2020 = vld [vmem:[%s2008 + $0xb0] sm:$0xff]
        %v2021 = vld [vmem:[%s2008 + $0xc0] sm:$0xff]
        %v2022 = vld [vmem:[%s2008 + $0xd0] sm:$0xff]
        %v2023 = vld [vmem:[%s2008 + $0xe0] sm:$0xff]
        %v2024 = vld [vmem:[%s2008 + $0xf0] sm:$0xff]
        %s2025 = scalar_lea.vmem [#allocation9], 240
        %v2026 = vld [vmem:[%s2025] sm:$0xff]
        %v2027 = vld [vmem:[%s2025 + $0x8] sm:$0xff]
        %v2028 = vld [vmem:[%s2025 + $0x10] sm:$0xff]
        %v2029 = vld [vmem:[%s2025 + $0x18] sm:$0xff]
        %v2030 = vld [vmem:[%s2025 + $0x20] sm:$0xff]
        %v2032 = vsel %vm697, %v2009, 0
        %v2035 = vsel %vm697, %v2010, 0
        %v2038 = vsel %vm697, %v2011, 0
        %v2041 = vsel %vm697, %v2012, 0
        %v2044 = vsel %vm697, %v2013, 0
        %v2047 = vsel %vm697, %v2014, 0
        %v2050 = vsel %vm697, %v2015, 0
        %v2053 = vsel %vm697, %v2016, 0
        %v2056 = vsel %vm697, %v2017, 0
        %v2059 = vsel %vm697, %v2018, 0
        %v2062 = vsel %vm697, %v2019, 0
        %v2065 = vsel %vm697, %v2020, 0
        %v2068 = vsel %vm697, %v2021, 0
        %v2071 = vsel %vm697, %v2022, 0
        %v2074 = vsel %vm697, %v2023, 0
        %v2077 = vsel %vm697, %v2024, 0
        %2079 = vmatprep.subr.mxu0 0.0
        %2080 = vmatpush1.msra.mxu0 %v2026
        %2081 = vmatprep.subr.mxu0 0.0
        %2082 = vmatpush1.msra.mxu0 %v2027
        %2083 = vmatprep.subr.mxu0 0.0
        %2084 = vmatpush1.msra.mxu0 %v2028
        %2085 = vmatprep.subr.mxu0 0.0
        %2086 = vmatpush1.msra.mxu0 %v2029
        %2087 = vmatprep.subr.mxu0 0.0
        %2088 = vmatpush1.msra.mxu0 %v2030
        %2089 = vmatprep.subr.mxu0 0.0
        %2090 = vmatpush1.msra.mxu0 0.0
        %2091 = vmatprep.subr.mxu0 0.0
        %2092 = vmatpush1.msra.mxu0 0.0
        %2093 = vmatprep.subr.mxu0 0.0
        %2094 = vmatpush1.msra.mxu0 0.0
        %2095 = vmatprep.subr.mxu0 0.0
        %2096 = vmatpush1.msra.mxu0 0.0
        %2097 = vmatprep.subr.mxu0 0.0
        %2098 = vmatpush1.msra.mxu0 0.0
        %2099 = vmatprep.subr.mxu0 0.0
        %2100 = vmatpush1.msra.mxu0 0.0
        %2101 = vmatprep.subr.mxu0 0.0
        %2102 = vmatpush1.msra.mxu0 0.0
        %2103 = vmatprep.subr.mxu0 0.0
        %2104 = vmatpush1.msra.mxu0 0.0
        %2105 = vmatprep.subr.mxu0 0.0
        %2106 = vmatpush1.msra.mxu0 0.0
        %2107 = vmatprep.subr.mxu0 0.0
        %2108 = vmatpush1.msra.mxu0 0.0
        %2109 = vmatprep.subr.mxu0 0.0
        %2110 = vmatpush1.msra.mxu0 0.0
        %2111 = vmatprep.subr.mxu0 0.0
        %2112 = vmatpush1.msra.mxu0 0.0
        %2113 = vmatprep.subr.mxu0 0.0
        %2114 = vmatpush1.msra.mxu0 0.0
        %2115 = vmatprep.subr.mxu0 0.0
        %2116 = vmatpush1.msra.mxu0 0.0
        %2117 = vmatprep.subr.mxu0 0.0
        %2118 = vmatpush1.msra.mxu0 0.0
        %2119 = vmatprep.subr.mxu0 0.0
        %2120 = vmatpush1.msra.mxu0 0.0
        %2121 = vmatprep.subr.mxu0 0.0
        %2122 = vmatpush1.msra.mxu0 0.0
        %2123 = vmatprep.subr.mxu0 0.0
        %2124 = vmatpush1.msra.mxu0 0.0
        %2125 = vmatprep.subr.mxu0 0.0
        %2126 = vmatpush1.msra.mxu0 0.0
        %2127 = vmatprep.subr.mxu0 0.0
        %2128 = vmatpush1.msra.mxu0 0.0
        %2129 = vmatprep.subr.mxu0 0.0
        %2130 = vmatpush1.msra.mxu0 0.0
        %2131 = vmatprep.subr.mxu0 0.0
        %2132 = vmatpush1.msra.mxu0 0.0
        %2133 = vmatprep.subr.mxu0 0.0
        %2134 = vmatpush1.msra.mxu0 0.0
        %2135 = vmatprep.subr.mxu0 0.0
        %2136 = vmatpush1.msra.mxu0 0.0
        %2137 = vmatprep.subr.mxu0 0.0
        %2138 = vmatpush1.msra.mxu0 0.0
        %2139 = vmatprep.subr.mxu0 0.0
        %2140 = vmatpush1.msra.mxu0 0.0
        %2141 = vmatprep.subr.mxu0 0.0
        %2142 = vmatpush1.msra.mxu0 0.0
        %2143 = vmatprep.mubr.f32.mxu0 0.0
        %2144 = vmatmul.mubr.f32.gmra.mrb[0].mxu0 %v2032
        %v2145 = vpop.f32.mrb[0].mxu0
        %v2146 = vadd.f32 0.0, %v2145
        %v2147 = vpop.f32.mrb[0].mxu0
        %2148 = vmatprep.mubr.f32.mxu0 0.0
        %2149 = vmatmul.mubr.f32.gmra.mrb[0].mxu0 %v2035
        %v2150 = vpop.f32.mrb[0].mxu0
        %v2151 = vadd.f32 0.0, %v2150
        %v2152 = vpop.f32.mrb[0].mxu0
        %2153 = vmatprep.mubr.f32.mxu0 0.0
        %2154 = vmatmul.mubr.f32.gmra.mrb[0].mxu0 %v2038
        %v2155 = vpop.f32.mrb[0].mxu0
        %v2156 = vadd.f32 0.0, %v2155
        %v2157 = vpop.f32.mrb[0].mxu0
        %2158 = vmatprep.mubr.f32.mxu0 0.0
        %2159 = vmatmul.mubr.f32.gmra.mrb[0].mxu0 %v2041
        %v2160 = vpop.f32.mrb[0].mxu0
        %v2161 = vadd.f32 0.0, %v2160
        %v2162 = vpop.f32.mrb[0].mxu0
        %2163 = vmatprep.mubr.f32.mxu0 0.0
        %2164 = vmatmul.mubr.f32.gmra.mrb[0].mxu0 %v2044
        %v2165 = vpop.f32.mrb[0].mxu0
        %v2166 = vadd.f32 0.0, %v2165
        %v2167 = vpop.f32.mrb[0].mxu0
        %2168 = vmatprep.mubr.f32.mxu0 0.0
        %2169 = vmatmul.mubr.f32.gmra.mrb[0].mxu0 %v2047
        %v2170 = vpop.f32.mrb[0].mxu0
        %v2171 = vadd.f32 0.0, %v2170
        %v2172 = vpop.f32.mrb[0].mxu0
        %2173 = vmatprep.mubr.f32.mxu0 0.0
        %2174 = vmatmul.mubr.f32.gmra.mrb[0].mxu0 %v2050
        %v2175 = vpop.f32.mrb[0].mxu0
        %v2176 = vadd.f32 0.0, %v2175
        %v2177 = vpop.f32.mrb[0].mxu0
        %2178 = vmatprep.mubr.f32.mxu0 0.0
        %2179 = vmatmul.mubr.f32.gmra.mrb[0].mxu0 %v2053
        %v2180 = vpop.f32.mrb[0].mxu0
        %v2181 = vadd.f32 0.0, %v2180
        %v2182 = vpop.f32.mrb[0].mxu0
        %2183 = vmatprep.mubr.f32.mxu0 0.0
        %2184 = vmatmul.mubr.f32.gmra.mrb[0].mxu0 %v2056
        %v2185 = vpop.f32.mrb[0].mxu0
        %v2186 = vadd.f32 0.0, %v2185
        %v2187 = vpop.f32.mrb[0].mxu0
        %2188 = vmatprep.mubr.f32.mxu0 0.0
        %2189 = vmatmul.mubr.f32.gmra.mrb[0].mxu0 %v2059
        %v2190 = vpop.f32.mrb[0].mxu0
        %v2191 = vadd.f32 0.0, %v2190
        %v2192 = vpop.f32.mrb[0].mxu0
        %2193 = vmatprep.mubr.f32.mxu0 0.0
        %2194 = vmatmul.mubr.f32.gmra.mrb[0].mxu0 %v2062
        %v2195 = vpop.f32.mrb[0].mxu0
        %v2196 = vadd.f32 0.0, %v2195
        %v2197 = vpop.f32.mrb[0].mxu0
        %2198 = vmatprep.mubr.f32.mxu0 0.0
        %2199 = vmatmul.mubr.f32.gmra.mrb[0].mxu0 %v2065
        %v2200 = vpop.f32.mrb[0].mxu0
        %v2201 = vadd.f32 0.0, %v2200
        %v2202 = vpop.f32.mrb[0].mxu0
        %2203 = vmatprep.mubr.f32.mxu0 0.0
        %2204 = vmatmul.mubr.f32.gmra.mrb[0].mxu0 %v2068
        %v2205 = vpop.f32.mrb[0].mxu0
        %v2206 = vadd.f32 0.0, %v2205
        %v2207 = vpop.f32.mrb[0].mxu0
        %2208 = vmatprep.mubr.f32.mxu0 0.0
        %2209 = vmatmul.mubr.f32.gmra.mrb[0].mxu0 %v2071
        %v2210 = vpop.f32.mrb[0].mxu0
        %v2211 = vadd.f32 0.0, %v2210
        %v2212 = vpop.f32.mrb[0].mxu0
        %2213 = vmatprep.mubr.f32.mxu0 0.0
        %2214 = vmatmul.mubr.f32.gmra.mrb[0].mxu0 %v2074
        %v2215 = vpop.f32.mrb[0].mxu0
        %v2216 = vadd.f32 0.0, %v2215
        %v2217 = vpop.f32.mrb[0].mxu0
        %2218 = vmatprep.mubr.f32.mxu0 0.0
        %2219 = vmatmul.mubr.f32.gmra.mrb[0].mxu0 %v2077
        %v2220 = vpop.f32.mrb[0].mxu0
        %v2221 = vadd.f32 0.0, %v2220
        %v2222 = vpop.f32.mrb[0].mxu0
        %2223 = vdwg.mxu0
        %v2224 = vadd.f32 %v1992, %v2146
        %v2225 = vadd.f32 %v1993, %v2151
        %v2226 = vadd.f32 %v1994, %v2156
        %v2227 = vadd.f32 %v1995, %v2161
        %v2228 = vadd.f32 %v1996, %v2166
        %v2229 = vadd.f32 %v1997, %v2171
        %v2230 = vadd.f32 %v1998, %v2176
        %v2231 = vadd.f32 %v1999, %v2181
        %v2232 = vadd.f32 %v2000, %v2186
        %v2233 = vadd.f32 %v2001, %v2191
        %v2234 = vadd.f32 %v2002, %v2196
        %v2235 = vadd.f32 %v2003, %v2201
        %v2236 = vadd.f32 %v2004, %v2206
        %v2237 = vadd.f32 %v2005, %v2211
        %v2238 = vadd.f32 %v2006, %v2216
        %v2239 = vadd.f32 %v2007, %v2221
        %v2240 = vld [vmem:[%s2008 + $0x1] sm:$0xff]
        %v2241 = vld [vmem:[%s2008 + $0x11] sm:$0xff]
        %v2242 = vld [vmem:[%s2008 + $0x21] sm:$0xff]
        %v2243 = vld [vmem:[%s2008 + $0x31] sm:$0xff]
        %v2244 = vld [vmem:[%s2008 + $0x41] sm:$0xff]
        %v2245 = vld [vmem:[%s2008 + $0x51] sm:$0xff]
        %v2246 = vld [vmem:[%s2008 + $0x61] sm:$0xff]
        %v2247 = vld [vmem:[%s2008 + $0x71] sm:$0xff]
        %v2248 = vld [vmem:[%s2008 + $0x81] sm:$0xff]
        %v2249 = vld [vmem:[%s2008 + $0x91] sm:$0xff]
        %v2250 = vld [vmem:[%s2008 + $0xa1] sm:$0xff]
        %v2251 = vld [vmem:[%s2008 + $0xb1] sm:$0xff]
        %v2252 = vld [vmem:[%s2008 + $0xc1] sm:$0xff]
        %v2253 = vld [vmem:[%s2008 + $0xd1] sm:$0xff]
        %v2254 = vld [vmem:[%s2008 + $0xe1] sm:$0xff]
        %v2255 = vld [vmem:[%s2008 + $0xf1] sm:$0xff]
        %s2256 = scalar_lea.vmem [#allocation9], 280
        %v2257 = vld [vmem:[%s2256] sm:$0xff]
        %v2258 = vld [vmem:[%s2256 + $0x8] sm:$0xff]
        %v2259 = vld [vmem:[%s2256 + $0x10] sm:$0xff]
        %v2260 = vld [vmem:[%s2256 + $0x18] sm:$0xff]
        %v2261 = vld [vmem:[%s2256 + $0x20] sm:$0xff]
        %v2263 = vsel %vm697, %v2240, 0
        %v2266 = vsel %vm697, %v2241, 0
        %v2269 = vsel %vm697, %v2242, 0
        %v2272 = vsel %vm697, %v2243, 0
        %v2275 = vsel %vm697, %v2244, 0
        %v2278 = vsel %vm697, %v2245, 0
        %v2281 = vsel %vm697, %v2246, 0
        %v2284 = vsel %vm697, %v2247, 0
        %v2287 = vsel %vm697, %v2248, 0
        %v2290 = vsel %vm697, %v2249, 0
        %v2293 = vsel %vm697, %v2250, 0
        %v2296 = vsel %vm697, %v2251, 0
        %v2299 = vsel %vm697, %v2252, 0
        %v2302 = vsel %vm697, %v2253, 0
        %v2305 = vsel %vm697, %v2254, 0
        %v2308 = vsel %vm697, %v2255, 0
        %2310 = vmatprep.subr.mxu0 0.0
        %2311 = vmatpush1.msra.mxu0 %v2257
        %2312 = vmatprep.subr.mxu0 0.0
        %2313 = vmatpush1.msra.mxu0 %v2258
        %2314 = vmatprep.subr.mxu0 0.0
        %2315 = vmatpush1.msra.mxu0 %v2259
        %2316 = vmatprep.subr.mxu0 0.0
        %2317 = vmatpush1.msra.mxu0 %v2260
        %2318 = vmatprep.subr.mxu0 0.0
        %2319 = vmatpush1.msra.mxu0 %v2261
        %2320 = vmatprep.subr.mxu0 0.0
        %2321 = vmatpush1.msra.mxu0 0.0
        %2322 = vmatprep.subr.mxu0 0.0
        %2323 = vmatpush1.msra.mxu0 0.0
        %2324 = vmatprep.subr.mxu0 0.0
        %2325 = vmatpush1.msra.mxu0 0.0
        %2326 = vmatprep.subr.mxu0 0.0
        %2327 = vmatpush1.msra.mxu0 0.0
        %2328 = vmatprep.subr.mxu0 0.0
        %2329 = vmatpush1.msra.mxu0 0.0
        %2330 = vmatprep.subr.mxu0 0.0
        %2331 = vmatpush1.msra.mxu0 0.0
        %2332 = vmatprep.subr.mxu0 0.0
        %2333 = vmatpush1.msra.mxu0 0.0
        %2334 = vmatprep.subr.mxu0 0.0
        %2335 = vmatpush1.msra.mxu0 0.0
        %2336 = vmatprep.subr.mxu0 0.0
        %2337 = vmatpush1.msra.mxu0 0.0
        %2338 = vmatprep.subr.mxu0 0.0
        %2339 = vmatpush1.msra.mxu0 0.0
        %2340 = vmatprep.subr.mxu0 0.0
        %2341 = vmatpush1.msra.mxu0 0.0
        %2342 = vmatprep.subr.mxu0 0.0
        %2343 = vmatpush1.msra.mxu0 0.0
        %2344 = vmatprep.subr.mxu0 0.0
        %2345 = vmatpush1.msra.mxu0 0.0
        %2346 = vmatprep.subr.mxu0 0.0
        %2347 = vmatpush1.msra.mxu0 0.0
        %2348 = vmatprep.subr.mxu0 0.0
        %2349 = vmatpush1.msra.mxu0 0.0
        %2350 = vmatprep.subr.mxu0 0.0
        %2351 = vmatpush1.msra.mxu0 0.0
        %2352 = vmatprep.subr.mxu0 0.0
        %2353 = vmatpush1.msra.mxu0 0.0
        %2354 = vmatprep.subr.mxu0 0.0
        %2355 = vmatpush1.msra.mxu0 0.0
        %2356 = vmatprep.subr.mxu0 0.0
        %2357 = vmatpush1.msra.mxu0 0.0
        %2358 = vmatprep.subr.mxu0 0.0
        %2359 = vmatpush1.msra.mxu0 0.0
        %2360 = vmatprep.subr.mxu0 0.0
        %2361 = vmatpush1.msra.mxu0 0.0
        %2362 = vmatprep.subr.mxu0 0.0
        %2363 = vmatpush1.msra.mxu0 0.0
        %2364 = vmatprep.subr.mxu0 0.0
        %2365 = vmatpush1.msra.mxu0 0.0
        %2366 = vmatprep.subr.mxu0 0.0
        %2367 = vmatpush1.msra.mxu0 0.0
        %2368 = vmatprep.subr.mxu0 0.0
        %2369 = vmatpush1.msra.mxu0 0.0
        %2370 = vmatprep.subr.mxu0 0.0
        %2371 = vmatpush1.msra.mxu0 0.0
        %2372 = vmatprep.subr.mxu0 0.0
        %2373 = vmatpush1.msra.mxu0 0.0
        %2374 = vmatprep.mubr.f32.mxu0 0.0
        %2375 = vmatmul.mubr.f32.gmra.mrb[0].mxu0 %v2263
        %v2376 = vpop.f32.mrb[0].mxu0
        %v2377 = vadd.f32 0.0, %v2376
        %v2378 = vpop.f32.mrb[0].mxu0
        %2379 = vmatprep.mubr.f32.mxu0 0.0
        %2380 = vmatmul.mubr.f32.gmra.mrb[0].mxu0 %v2266
        %v2381 = vpop.f32.mrb[0].mxu0
        %v2382 = vadd.f32 0.0, %v2381
        %v2383 = vpop.f32.mrb[0].mxu0
        %2384 = vmatprep.mubr.f32.mxu0 0.0
        %2385 = vmatmul.mubr.f32.gmra.mrb[0].mxu0 %v2269
        %v2386 = vpop.f32.mrb[0].mxu0
        %v2387 = vadd.f32 0.0, %v2386
        %v2388 = vpop.f32.mrb[0].mxu0
        %2389 = vmatprep.mubr.f32.mxu0 0.0
        %2390 = vmatmul.mubr.f32.gmra.mrb[0].mxu0 %v2272
        %v2391 = vpop.f32.mrb[0].mxu0
        %v2392 = vadd.f32 0.0, %v2391
        %v2393 = vpop.f32.mrb[0].mxu0
        %2394 = vmatprep.mubr.f32.mxu0 0.0
        %2395 = vmatmul.mubr.f32.gmra.mrb[0].mxu0 %v2275
        %v2396 = vpop.f32.mrb[0].mxu0
        %v2397 = vadd.f32 0.0, %v2396
        %v2398 = vpop.f32.mrb[0].mxu0
        %2399 = vmatprep.mubr.f32.mxu0 0.0
        %2400 = vmatmul.mubr.f32.gmra.mrb[0].mxu0 %v2278
        %v2401 = vpop.f32.mrb[0].mxu0
        %v2402 = vadd.f32 0.0, %v2401
        %v2403 = vpop.f32.mrb[0].mxu0
        %2404 = vmatprep.mubr.f32.mxu0 0.0
        %2405 = vmatmul.mubr.f32.gmra.mrb[0].mxu0 %v2281
        %v2406 = vpop.f32.mrb[0].mxu0
        %v2407 = vadd.f32 0.0, %v2406
        %v2408 = vpop.f32.mrb[0].mxu0
        %2409 = vmatprep.mubr.f32.mxu0 0.0
        %2410 = vmatmul.mubr.f32.gmra.mrb[0].mxu0 %v2284
        %v2411 = vpop.f32.mrb[0].mxu0
        %v2412 = vadd.f32 0.0, %v2411
        %v2413 = vpop.f32.mrb[0].mxu0
        %2414 = vmatprep.mubr.f32.mxu0 0.0
        %2415 = vmatmul.mubr.f32.gmra.mrb[0].mxu0 %v2287
        %v2416 = vpop.f32.mrb[0].mxu0
        %v2417 = vadd.f32 0.0, %v2416
        %v2418 = vpop.f32.mrb[0].mxu0
        %2419 = vmatprep.mubr.f32.mxu0 0.0
        %2420 = vmatmul.mubr.f32.gmra.mrb[0].mxu0 %v2290
        %v2421 = vpop.f32.mrb[0].mxu0
        %v2422 = vadd.f32 0.0, %v2421
        %v2423 = vpop.f32.mrb[0].mxu0
        %2424 = vmatprep.mubr.f32.mxu0 0.0
        %2425 = vmatmul.mubr.f32.gmra.mrb[0].mxu0 %v2293
        %v2426 = vpop.f32.mrb[0].mxu0
        %v2427 = vadd.f32 0.0, %v2426
        %v2428 = vpop.f32.mrb[0].mxu0
        %2429 = vmatprep.mubr.f32.mxu0 0.0
        %2430 = vmatmul.mubr.f32.gmra.mrb[0].mxu0 %v2296
        %v2431 = vpop.f32.mrb[0].mxu0
        %v2432 = vadd.f32 0.0, %v2431
        %v2433 = vpop.f32.mrb[0].mxu0
        %2434 = vmatprep.mubr.f32.mxu0 0.0
        %2435 = vmatmul.mubr.f32.gmra.mrb[0].mxu0 %v2299
        %v2436 = vpop.f32.mrb[0].mxu0
        %v2437 = vadd.f32 0.0, %v2436
        %v2438 = vpop.f32.mrb[0].mxu0
        %2439 = vmatprep.mubr.f32.mxu0 0.0
        %2440 = vmatmul.mubr.f32.gmra.mrb[0].mxu0 %v2302
        %v2441 = vpop.f32.mrb[0].mxu0
        %v2442 = vadd.f32 0.0, %v2441
        %v2443 = vpop.f32.mrb[0].mxu0
        %2444 = vmatprep.mubr.f32.mxu0 0.0
        %2445 = vmatmul.mubr.f32.gmra.mrb[0].mxu0 %v2305
        %v2446 = vpop.f32.mrb[0].mxu0
        %v2447 = vadd.f32 0.0, %v2446
        %v2448 = vpop.f32.mrb[0].mxu0
        %2449 = vmatprep.mubr.f32.mxu0 0.0
        %2450 = vmatmul.mubr.f32.gmra.mrb[0].mxu0 %v2308
        %v2451 = vpop.f32.mrb[0].mxu0
        %v2452 = vadd.f32 0.0, %v2451
        %v2453 = vpop.f32.mrb[0].mxu0
        %2454 = vdwg.mxu0
        %v2455 = vadd.f32 %v2224, %v2377
        %v2456 = vadd.f32 %v2225, %v2382
        %v2457 = vadd.f32 %v2226, %v2387
        %v2458 = vadd.f32 %v2227, %v2392
        %v2459 = vadd.f32 %v2228, %v2397
        %v2460 = vadd.f32 %v2229, %v2402
        %v2461 = vadd.f32 %v2230, %v2407
        %v2462 = vadd.f32 %v2231, %v2412
        %v2463 = vadd.f32 %v2232, %v2417
        %v2464 = vadd.f32 %v2233, %v2422
        %v2465 = vadd.f32 %v2234, %v2427
        %v2466 = vadd.f32 %v2235, %v2432
        %v2467 = vadd.f32 %v2236, %v2437
        %v2468 = vadd.f32 %v2237, %v2442
        %v2469 = vadd.f32 %v2238, %v2447
        %v2470 = vadd.f32 %v2239, %v2452
        %v2471 = vld [vmem:[%s2008 + $0x2] sm:$0xff]
        %v2472 = vld [vmem:[%s2008 + $0x12] sm:$0xff]
        %v2473 = vld [vmem:[%s2008 + $0x22] sm:$0xff]
        %v2474 = vld [vmem:[%s2008 + $0x32] sm:$0xff]
        %v2475 = vld [vmem:[%s2008 + $0x42] sm:$0xff]
        %v2476 = vld [vmem:[%s2008 + $0x52] sm:$0xff]
        %v2477 = vld [vmem:[%s2008 + $0x62] sm:$0xff]
        %v2478 = vld [vmem:[%s2008 + $0x72] sm:$0xff]
        %v2479 = vld [vmem:[%s2008 + $0x82] sm:$0xff]
        %v2480 = vld [vmem:[%s2008 + $0x92] sm:$0xff]
        %v2481 = vld [vmem:[%s2008 + $0xa2] sm:$0xff]
        %v2482 = vld [vmem:[%s2008 + $0xb2] sm:$0xff]
        %v2483 = vld [vmem:[%s2008 + $0xc2] sm:$0xff]
        %v2484 = vld [vmem:[%s2008 + $0xd2] sm:$0xff]
        %v2485 = vld [vmem:[%s2008 + $0xe2] sm:$0xff]
        %v2486 = vld [vmem:[%s2008 + $0xf2] sm:$0xff]
        %s2487 = scalar_lea.vmem [#allocation9], 320
        %v2488 = vld [vmem:[%s2487] sm:$0xff]
        %v2489 = vld [vmem:[%s2487 + $0x8] sm:$0xff]
        %v2490 = vld [vmem:[%s2487 + $0x10] sm:$0xff]
        %v2491 = vld [vmem:[%s2487 + $0x18] sm:$0xff]
        %v2492 = vld [vmem:[%s2487 + $0x20] sm:$0xff]
        %v2494 = vsel %vm697, %v2471, 0
        %v2497 = vsel %vm697, %v2472, 0
        %v2500 = vsel %vm697, %v2473, 0
        %v2503 = vsel %vm697, %v2474, 0
        %v2506 = vsel %vm697, %v2475, 0
        %v2509 = vsel %vm697, %v2476, 0
        %v2512 = vsel %vm697, %v2477, 0
        %v2515 = vsel %vm697, %v2478, 0
        %v2518 = vsel %vm697, %v2479, 0
        %v2521 = vsel %vm697, %v2480, 0
        %v2524 = vsel %vm697, %v2481, 0
        %v2527 = vsel %vm697, %v2482, 0
        %v2530 = vsel %vm697, %v2483, 0
        %v2533 = vsel %vm697, %v2484, 0
        %v2536 = vsel %vm697, %v2485, 0
        %v2539 = vsel %vm697, %v2486, 0
        %2541 = vmatprep.subr.mxu0 0.0
        %2542 = vmatpush1.msra.mxu0 %v2488
        %2543 = vmatprep.subr.mxu0 0.0
        %2544 = vmatpush1.msra.mxu0 %v2489
        %2545 = vmatprep.subr.mxu0 0.0
        %2546 = vmatpush1.msra.mxu0 %v2490
        %2547 = vmatprep.subr.mxu0 0.0
        %2548 = vmatpush1.msra.mxu0 %v2491
        %2549 = vmatprep.subr.mxu0 0.0
        %2550 = vmatpush1.msra.mxu0 %v2492
        %2551 = vmatprep.subr.mxu0 0.0
        %2552 = vmatpush1.msra.mxu0 0.0
        %2553 = vmatprep.subr.mxu0 0.0
        %2554 = vmatpush1.msra.mxu0 0.0
        %2555 = vmatprep.subr.mxu0 0.0
        %2556 = vmatpush1.msra.mxu0 0.0
        %2557 = vmatprep.subr.mxu0 0.0
        %2558 = vmatpush1.msra.mxu0 0.0
        %2559 = vmatprep.subr.mxu0 0.0
        %2560 = vmatpush1.msra.mxu0 0.0
        %2561 = vmatprep.subr.mxu0 0.0
        %2562 = vmatpush1.msra.mxu0 0.0
        %2563 = vmatprep.subr.mxu0 0.0
        %2564 = vmatpush1.msra.mxu0 0.0
        %2565 = vmatprep.subr.mxu0 0.0
        %2566 = vmatpush1.msra.mxu0 0.0
        %2567 = vmatprep.subr.mxu0 0.0
        %2568 = vmatpush1.msra.mxu0 0.0
        %2569 = vmatprep.subr.mxu0 0.0
        %2570 = vmatpush1.msra.mxu0 0.0
        %2571 = vmatprep.subr.mxu0 0.0
        %2572 = vmatpush1.msra.mxu0 0.0
        %2573 = vmatprep.subr.mxu0 0.0
        %2574 = vmatpush1.msra.mxu0 0.0
        %2575 = vmatprep.subr.mxu0 0.0
        %2576 = vmatpush1.msra.mxu0 0.0
        %2577 = vmatprep.subr.mxu0 0.0
        %2578 = vmatpush1.msra.mxu0 0.0
        %2579 = vmatprep.subr.mxu0 0.0
        %2580 = vmatpush1.msra.mxu0 0.0
        %2581 = vmatprep.subr.mxu0 0.0
        %2582 = vmatpush1.msra.mxu0 0.0
        %2583 = vmatprep.subr.mxu0 0.0
        %2584 = vmatpush1.msra.mxu0 0.0
        %2585 = vmatprep.subr.mxu0 0.0
        %2586 = vmatpush1.msra.mxu0 0.0
        %2587 = vmatprep.subr.mxu0 0.0
        %2588 = vmatpush1.msra.mxu0 0.0
        %2589 = vmatprep.subr.mxu0 0.0
        %2590 = vmatpush1.msra.mxu0 0.0
        %2591 = vmatprep.subr.mxu0 0.0
        %2592 = vmatpush1.msra.mxu0 0.0
        %2593 = vmatprep.subr.mxu0 0.0
        %2594 = vmatpush1.msra.mxu0 0.0
        %2595 = vmatprep.subr.mxu0 0.0
        %2596 = vmatpush1.msra.mxu0 0.0
        %2597 = vmatprep.subr.mxu0 0.0
        %2598 = vmatpush1.msra.mxu0 0.0
        %2599 = vmatprep.subr.mxu0 0.0
        %2600 = vmatpush1.msra.mxu0 0.0
        %2601 = vmatprep.subr.mxu0 0.0
        %2602 = vmatpush1.msra.mxu0 0.0
        %2603 = vmatprep.subr.mxu0 0.0
        %2604 = vmatpush1.msra.mxu0 0.0
        %2605 = vmatprep.mubr.f32.mxu0 0.0
        %2606 = vmatmul.mubr.f32.gmra.mrb[0].mxu0 %v2494
        %v2607 = vpop.f32.mrb[0].mxu0
        %v2608 = vadd.f32 0.0, %v2607
        %v2609 = vpop.f32.mrb[0].mxu0
        %2610 = vmatprep.mubr.f32.mxu0 0.0
        %2611 = vmatmul.mubr.f32.gmra.mrb[0].mxu0 %v2497
        %v2612 = vpop.f32.mrb[0].mxu0
        %v2613 = vadd.f32 0.0, %v2612
        %v2614 = vpop.f32.mrb[0].mxu0
        %2615 = vmatprep.mubr.f32.mxu0 0.0
        %2616 = vmatmul.mubr.f32.gmra.mrb[0].mxu0 %v2500
        %v2617 = vpop.f32.mrb[0].mxu0
        %v2618 = vadd.f32 0.0, %v2617
        %v2619 = vpop.f32.mrb[0].mxu0
        %2620 = vmatprep.mubr.f32.mxu0 0.0
        %2621 = vmatmul.mubr.f32.gmra.mrb[0].mxu0 %v2503
        %v2622 = vpop.f32.mrb[0].mxu0
        %v2623 = vadd.f32 0.0, %v2622
        %v2624 = vpop.f32.mrb[0].mxu0
        %2625 = vmatprep.mubr.f32.mxu0 0.0
        %2626 = vmatmul.mubr.f32.gmra.mrb[0].mxu0 %v2506
        %v2627 = vpop.f32.mrb[0].mxu0
        %v2628 = vadd.f32 0.0, %v2627
        %v2629 = vpop.f32.mrb[0].mxu0
        %2630 = vmatprep.mubr.f32.mxu0 0.0
        %2631 = vmatmul.mubr.f32.gmra.mrb[0].mxu0 %v2509
        %v2632 = vpop.f32.mrb[0].mxu0
        %v2633 = vadd.f32 0.0, %v2632
        %v2634 = vpop.f32.mrb[0].mxu0
        %2635 = vmatprep.mubr.f32.mxu0 0.0
        %2636 = vmatmul.mubr.f32.gmra.mrb[0].mxu0 %v2512
        %v2637 = vpop.f32.mrb[0].mxu0
        %v2638 = vadd.f32 0.0, %v2637
        %v2639 = vpop.f32.mrb[0].mxu0
        %2640 = vmatprep.mubr.f32.mxu0 0.0
        %2641 = vmatmul.mubr.f32.gmra.mrb[0].mxu0 %v2515
        %v2642 = vpop.f32.mrb[0].mxu0
        %v2643 = vadd.f32 0.0, %v2642
        %v2644 = vpop.f32.mrb[0].mxu0
        %2645 = vmatprep.mubr.f32.mxu0 0.0
        %2646 = vmatmul.mubr.f32.gmra.mrb[0].mxu0 %v2518
        %v2647 = vpop.f32.mrb[0].mxu0
        %v2648 = vadd.f32 0.0, %v2647
        %v2649 = vpop.f32.mrb[0].mxu0
        %2650 = vmatprep.mubr.f32.mxu0 0.0
        %2651 = vmatmul.mubr.f32.gmra.mrb[0].mxu0 %v2521
        %v2652 = vpop.f32.mrb[0].mxu0
        %v2653 = vadd.f32 0.0, %v2652
        %v2654 = vpop.f32.mrb[0].mxu0
        %2655 = vmatprep.mubr.f32.mxu0 0.0
        %2656 = vmatmul.mubr.f32.gmra.mrb[0].mxu0 %v2524
        %v2657 = vpop.f32.mrb[0].mxu0
        %v2658 = vadd.f32 0.0, %v2657
        %v2659 = vpop.f32.mrb[0].mxu0
        %2660 = vmatprep.mubr.f32.mxu0 0.0
        %2661 = vmatmul.mubr.f32.gmra.mrb[0].mxu0 %v2527
        %v2662 = vpop.f32.mrb[0].mxu0
        %v2663 = vadd.f32 0.0, %v2662
        %v2664 = vpop.f32.mrb[0].mxu0
        %2665 = vmatprep.mubr.f32.mxu0 0.0
        %2666 = vmatmul.mubr.f32.gmra.mrb[0].mxu0 %v2530
        %v2667 = vpop.f32.mrb[0].mxu0
        %v2668 = vadd.f32 0.0, %v2667
        %v2669 = vpop.f32.mrb[0].mxu0
        %2670 = vmatprep.mubr.f32.mxu0 0.0
        %2671 = vmatmul.mubr.f32.gmra.mrb[0].mxu0 %v2533
        %v2672 = vpop.f32.mrb[0].mxu0
        %v2673 = vadd.f32 0.0, %v2672
        %v2674 = vpop.f32.mrb[0].mxu0
        %2675 = vmatprep.mubr.f32.mxu0 0.0
        %2676 = vmatmul.mubr.f32.gmra.mrb[0].mxu0 %v2536
        %v2677 = vpop.f32.mrb[0].mxu0
        %v2678 = vadd.f32 0.0, %v2677
        %v2679 = vpop.f32.mrb[0].mxu0
        %2680 = vmatprep.mubr.f32.mxu0 0.0
        %2681 = vmatmul.mubr.f32.gmra.mrb[0].mxu0 %v2539
        %v2682 = vpop.f32.mrb[0].mxu0
        %v2683 = vadd.f32 0.0, %v2682
        %v2684 = vpop.f32.mrb[0].mxu0
        %2685 = vdwg.mxu0
        %v2686 = vadd.f32 %v2455, %v2608
        %v2687 = vadd.f32 %v2456, %v2613
        %v2688 = vadd.f32 %v2457, %v2618
        %v2689 = vadd.f32 %v2458, %v2623
        %v2690 = vadd.f32 %v2459, %v2628
        %v2691 = vadd.f32 %v2460, %v2633
        %v2692 = vadd.f32 %v2461, %v2638
        %v2693 = vadd.f32 %v2462, %v2643
        %v2694 = vadd.f32 %v2463, %v2648
        %v2695 = vadd.f32 %v2464, %v2653
        %v2696 = vadd.f32 %v2465, %v2658
        %v2697 = vadd.f32 %v2466, %v2663
        %v2698 = vadd.f32 %v2467, %v2668
        %v2699 = vadd.f32 %v2468, %v2673
        %v2700 = vadd.f32 %v2469, %v2678
        %v2701 = vadd.f32 %v2470, %v2683
        %vm2702 = vcmask 523264
        %2703 = vst.msk [vmem:[%s458] sm:$0xff] %vm2702, %v2686
        %2704 = vst.msk [vmem:[%s458 + $0x8] sm:$0xff] %vm2702, %v2687
        %2705 = vst.msk [vmem:[%s458 + $0x10] sm:$0xff] %vm2702, %v2688
        %2706 = vst.msk [vmem:[%s458 + $0x18] sm:$0xff] %vm2702, %v2689
        %2707 = vst.msk [vmem:[%s458 + $0x20] sm:$0xff] %vm2702, %v2690
        %2708 = vst.msk [vmem:[%s458 + $0x28] sm:$0xff] %vm2702, %v2691
        %2709 = vst.msk [vmem:[%s458 + $0x30] sm:$0xff] %vm2702, %v2692
        %2710 = vst.msk [vmem:[%s458 + $0x38] sm:$0xff] %vm2702, %v2693
        %2711 = vst.msk [vmem:[%s458 + $0x40] sm:$0xff] %vm2702, %v2694
        %2712 = vst.msk [vmem:[%s458 + $0x48] sm:$0xff] %vm2702, %v2695
        %2713 = vst.msk [vmem:[%s458 + $0x50] sm:$0xff] %vm2702, %v2696
        %2714 = vst.msk [vmem:[%s458 + $0x58] sm:$0xff] %vm2702, %v2697
        %2715 = vst.msk [vmem:[%s458 + $0x60] sm:$0xff] %vm2702, %v2698
        %2716 = vst.msk [vmem:[%s458 + $0x68] sm:$0xff] %vm2702, %v2699
        %2717 = vst.msk [vmem:[%s458 + $0x70] sm:$0xff] %vm2702, %v2700
        %2718 = vst.msk [vmem:[%s458 + $0x78] sm:$0xff] %vm2702, %v2701
        %v2719 = vld [vmem:[%s465] sm:$0x1]
        %v2720 = vsel %vm2702, %v2686, 0.0
        %v2721 = vsel %vm2702, %v2687, 0.0
        %v2722 = vadd.f32 %v2720, %v2721
        %v2723 = vsel %vm2702, %v2688, 0.0
        %v2724 = vadd.f32 %v2722, %v2723
        %v2725 = vsel %vm2702, %v2689, 0.0
        %v2726 = vadd.f32 %v2724, %v2725
        %v2727 = vsel %vm2702, %v2690, 0.0
        %v2728 = vadd.f32 %v2726, %v2727
        %v2729 = vsel %vm2702, %v2691, 0.0
        %v2730 = vadd.f32 %v2728, %v2729
        %v2731 = vsel %vm2702, %v2692, 0.0
        %v2732 = vadd.f32 %v2730, %v2731
        %v2733 = vsel %vm2702, %v2693, 0.0
        %v2734 = vadd.f32 %v2732, %v2733
        %v2735 = vsel %vm2702, %v2694, 0.0
        %v2736 = vadd.f32 %v2734, %v2735
        %v2737 = vsel %vm2702, %v2695, 0.0
        %v2738 = vadd.f32 %v2736, %v2737
        %v2739 = vsel %vm2702, %v2696, 0.0
        %v2740 = vadd.f32 %v2738, %v2739
        %v2741 = vsel %vm2702, %v2697, 0.0
        %v2742 = vadd.f32 %v2740, %v2741
        %v2743 = vsel %vm2702, %v2698, 0.0
        %v2744 = vadd.f32 %v2742, %v2743
        %v2745 = vsel %vm2702, %v2699, 0.0
        %v2746 = vadd.f32 %v2744, %v2745
        %v2747 = vsel %vm2702, %v2700, 0.0
        %v2748 = vadd.f32 %v2746, %v2747
        %v2749 = vsel %vm2702, %v2701, 0.0
        %v2750 = vadd.f32 %v2748, %v2749
        %v2751 = vrot.slane %v2750, 4
        %v2752 = vadd.f32 %v2750, %v2751
        %v2753 = vrot.slane %v2752, 2
        %v2754 = vadd.f32 %v2752, %v2753
        %v2755 = vrot.slane %v2754, 1
        %v2756 = vadd.f32 %v2754, %v2755
        %v2757 = vadd.f32 %v2719, %v2756
        %vm2758 = vcmask 516096
        %2759 = vst.msk [vmem:[%s465] sm:$0x1] %vm2758, %v2757
        %v2760 = vld [vmem:[%s465 + $0x1] sm:$0x1]
        %v2761 = vmul.f32 %v2686, %v2686
        %v2762 = vmul.f32 %v2687, %v2687
        %v2763 = vmul.f32 %v2688, %v2688
        %v2764 = vmul.f32 %v2689, %v2689
        %v2765 = vmul.f32 %v2690, %v2690
        %v2766 = vmul.f32 %v2691, %v2691
        %v2767 = vmul.f32 %v2692, %v2692
        %v2768 = vmul.f32 %v2693, %v2693
        %v2769 = vmul.f32 %v2694, %v2694
        %v2770 = vmul.f32 %v2695, %v2695
        %v2771 = vmul.f32 %v2696, %v2696
        %v2772 = vmul.f32 %v2697, %v2697
        %v2773 = vmul.f32 %v2698, %v2698
        %v2774 = vmul.f32 %v2699, %v2699
        %v2775 = vmul.f32 %v2700, %v2700
        %v2776 = vmul.f32 %v2701, %v2701
        %v2777 = vsel %vm2702, %v2761, 0.0
        %v2778 = vsel %vm2702, %v2762, 0.0
        %v2779 = vadd.f32 %v2777, %v2778
        %v2780 = vsel %vm2702, %v2763, 0.0
        %v2781 = vadd.f32 %v2779, %v2780
        %v2782 = vsel %vm2702, %v2764, 0.0
        %v2783 = vadd.f32 %v2781, %v2782
        %v2784 = vsel %vm2702, %v2765, 0.0
        %v2785 = vadd.f32 %v2783, %v2784
        %v2786 = vsel %vm2702, %v2766, 0.0
        %v2787 = vadd.f32 %v2785, %v2786
        %v2788 = vsel %vm2702, %v2767, 0.0
        %v2789 = vadd.f32 %v2787, %v2788
        %v2790 = vsel %vm2702, %v2768, 0.0
        %v2791 = vadd.f32 %v2789, %v2790
        %v2792 = vsel %vm2702, %v2769, 0.0
        %v2793 = vadd.f32 %v2791, %v2792
        %v2794 = vsel %vm2702, %v2770, 0.0
        %v2795 = vadd.f32 %v2793, %v2794
        %v2796 = vsel %vm2702, %v2771, 0.0
        %v2797 = vadd.f32 %v2795, %v2796
        %v2798 = vsel %vm2702, %v2772, 0.0
        %v2799 = vadd.f32 %v2797, %v2798
        %v2800 = vsel %vm2702, %v2773, 0.0
        %v2801 = vadd.f32 %v2799, %v2800
        %v2802 = vsel %vm2702, %v2774, 0.0
        %v2803 = vadd.f32 %v2801, %v2802
        %v2804 = vsel %vm2702, %v2775, 0.0
        %v2805 = vadd.f32 %v2803, %v2804
        %v2806 = vsel %vm2702, %v2776, 0.0
        %v2807 = vadd.f32 %v2805, %v2806
        %v2808 = vrot.slane %v2807, 4
        %v2809 = vadd.f32 %v2807, %v2808
        %v2810 = vrot.slane %v2809, 2
        %v2811 = vadd.f32 %v2809, %v2810
        %v2812 = vrot.slane %v2811, 1
        %v2813 = vadd.f32 %v2811, %v2812
        %v2814 = vadd.f32 %v2760, %v2813
        %2815 = vst.msk [vmem:[%s465 + $0x1] sm:$0x1] %vm2758, %v2814
        %s2816 = sand.u32 %s227, 1
        %s2817 = scalar_lea.sflag [#allocation5], %s2816
        %s2818 = sand.u32 %s227, 1
        %s2819 = smul.addr %s2818, 128
        %s2820 = scalar_lea.vmem [#allocation11], %s2819
        %s2821 = sand.u32 %s253, 1
        %s2822 = scalar_lea.sflag [#allocation13], %s2821
        %s2823 = sand.u32 %s253, 1
        %s2824 = smul.addr %s2823, 2
        %s2825 = scalar_lea.vmem [#allocation12], %s2824
        // Predicated region
        $region77: #{tpu_custom_call.1} parent=43 // pred_check
          %p2826 = pneg %p237
        $region78: #{tpu_custom_call.1} parent=43 // pred_check_branch
          %2828 = sbr.rel (%p2826) target = $region80
        $region79: #{tpu_custom_call.1} parent=43 // pred_region
          %s2829 = smul.u32 16, %s37
          %s2831 = ssub.s32 2048, 2048
          %2832 = vsyncadd %s2817, %s2831
          %s2833 = smul.addr %s36, 32
          %s2834 = sadd.s32 %s2829, %s2833
          %s2835 = smul.addr %s2834, 128
          %s2836 = scalar_lea.hbm %s6, %s2835
          %s2837 = sshll.u32 %s2820, 4
          %s2838 = int_to_ptr.vmem [resolvable:$true] %s2837
          %2843 = dma.vmem_to_hbm [thread:$0]  %s2838, 2048, %s2836, %s2817, 128, 128, 8
        $region80: #{tpu_custom_call.1} parent=43 // pred_fallthru
          _
        // Predicated region
        $region81: #{tpu_custom_call.1} parent=43 // pred_check
          %p2844 = pneg %p263
        $region82: #{tpu_custom_call.1} parent=43 // pred_check_branch
          %2846 = sbr.rel (%p2844) target = $region84
        $region83: #{tpu_custom_call.1} parent=43 // pred_region
          %s2848 = ssub.s32 32, 32
          %2849 = vsyncadd %s2822, %s2848
          %s2850 = smul.addr %s36, 32
          %s2851 = scalar_lea.hbm %s7, %s2850
          %s2853 = sshll.u32 %s2825, 4
          %s2854 = int_to_ptr.vmem [resolvable:$true] %s2853
          %2856 = dma.vmem_to_hbm [thread:$0]  %s2854, 32, %s2851, %s2822
        $region84: #{tpu_custom_call.1} parent=43 // pred_fallthru
          _
      $region44: #{tpu_custom_call.1} parent=5 // pred_fallthru
        _
      %p2857 = scmp.le.s32.totalorder 2, %s27
      // Predicated region
      $region85: #{tpu_custom_call.1} parent=5 // pred_check
        %p2858 = pneg %p2857
      $region86: #{tpu_custom_call.1} parent=5 // pred_check_branch
        %2860 = sbr.rel (%p2858) target = $region88
      $region87: #{tpu_custom_call.1} parent=5 // pred_region
        %s2861 = ssub.s32 %s27, 2
        // Predicated region
        $region89: #{tpu_custom_call.1} parent=87 // pred_check
          %p2862 = pneg %p243
        $region90: #{tpu_custom_call.1} parent=87 // pred_check_branch
          %2864 = sbr.rel (%p2862) target = $region92
        $region91: #{tpu_custom_call.1} parent=87 // pred_region
          %s2865 = sand.u32 %s228, 1
          %s2866 = scalar_lea.sflag [#allocation5], %s2865
          %s2867 = sand.u32 %s228, 1
          %s2868 = smul.addr %s2867, 128
          %s2869 = scalar_lea.vmem [#allocation11], %s2868
          %2870 = dma.done %s2866, 2048
        $region92: #{tpu_custom_call.1} parent=87 // pred_fallthru
          _
        // Predicated region
        $region93: #{tpu_custom_call.1} parent=87 // pred_check
          %p2871 = pneg %p269
        $region94: #{tpu_custom_call.1} parent=87 // pred_check_branch
          %2873 = sbr.rel (%p2871) target = $region96
        $region95: #{tpu_custom_call.1} parent=87 // pred_region
          %s2874 = sand.u32 %s254, 1
          %s2875 = scalar_lea.sflag [#allocation13], %s2874
          %s2876 = sand.u32 %s254, 1
          %s2877 = smul.addr %s2876, 2
          %s2878 = scalar_lea.vmem [#allocation12], %s2877
          %2879 = dma.done %s2875, 32
        $region96: #{tpu_custom_call.1} parent=87 // pred_fallthru
          _
      $region88: #{tpu_custom_call.1} parent=5 // pred_fallthru
        _
    $region6: #{tpu_custom_call.1} parent=1 // loop_footer
      %s31 = sadd.s32 1, %s27
    $region7: #{tpu_custom_call.1} parent=1 // loop_footer_branch
      %26 = sbr.rel target = $region3
    $region8: #{tpu_custom_call.1} parent=1 // loop_exit
      _
    %2880 = vsyncpa [#allocation4], 1
    %s2881 = scalar_lea.sflag [#allocation4], 1
    %2882 = vsyncpa %s2881, 1
    %2883 = vsyncpa [#allocation7], 1
    %s2884 = scalar_lea.sflag [#allocation7], 1
    %2885 = vsyncpa %s2884, 1
    %2886 = vsyncpa [#allocation10], 1
    %2887 = vsyncpa [#allocation5], 1
    %s2888 = scalar_lea.sflag [#allocation5], 1
    %2889 = vsyncpa %s2888, 1
    %2890 = vsyncpa [#allocation13], 1
    %s2891 = scalar_lea.sflag [#allocation13], 1
    %2892 = vsyncpa %s2891, 1

</llo_original>
